<compile_context>
chip_gen: v7x
topology: tpu7x:2x2x1
jax: 0.10.0
libtpu: 0.0.40
codegen_flags: <defaults>
</compile_context>

<pallas_src>
import functools

import jax
import jax.numpy as jnp
from jax.experimental import pallas as pl
from jax.experimental.pallas import tpu as pltpu


# ----------------------------- fused Pallas kernel --------------------------

def _moco_fused_kernel(xq_ref, xk_ref, pun_ref,
                       wq1_ref, bq1_ref, wqd_ref, bqd_ref,
                       wk1_ref, bk1_ref, wkd_ref, bkd_ref,
                       queue_ref,
                       lpos_ref, lneg_ref, kshuf_ref,
                       q_sc, *, inv_T):
    """Fused MoCo forward step.

    Grid axis j sweeps the queue's K dimension. At j == 0 both encoder branches
    (relu(x@W1+b1)@Wd+bd, L2-normalized) run once; q stays resident in VMEM
    scratch (bf16) for the K sweep, l_pos and the shuffled keys are written to
    their grid-constant output blocks. Every step computes one lane-dense
    l_neg tile = (q @ queue_tile.T) / T.
    """
    j = pl.program_id(0)

    @pl.when(j == 0)
    def _():
        def branch(x_ref, w1_ref, b1_ref, wd_ref, bd_ref):
            x = x_ref[...].astype(jnp.bfloat16)
            h = jnp.dot(x, w1_ref[...], preferred_element_type=jnp.float32)
            h = jnp.maximum(h + b1_ref[...], 0.0)
            f = jnp.dot(h.astype(jnp.bfloat16), wd_ref[...],
                        preferred_element_type=jnp.float32) + bd_ref[...]
            # torch.nn.functional.normalize(dim=1): x / max(||x||, 1e-12)
            ss = jnp.sum(f * f, axis=1, keepdims=True)
            return f * jax.lax.rsqrt(jnp.maximum(ss, 1e-24))

        q = branch(xq_ref, wq1_ref, bq1_ref, wqd_ref, bqd_ref)        # (N, dim) f32
        k_shuf = branch(xk_ref, wk1_ref, bk1_ref, wkd_ref, bkd_ref)   # (N, dim) f32

        # l_pos[i] = q[i] . k_unshuffled[i] = (q @ k_shuf.T)[i, idx_unshuffle[i]]
        s = jax.lax.dot_general(q, k_shuf,
                                dimension_numbers=(((1,), (1,)), ((), ())),
                                preferred_element_type=jnp.float32)   # (N, N)
        lpos = jnp.sum(s * pun_ref[...], axis=1, keepdims=True) * inv_T
        lpos_ref[...] = jnp.broadcast_to(lpos, lpos_ref.shape)        # lane-dense

        kshuf_ref[...] = k_shuf.astype(kshuf_ref.dtype)               # bf16 keys
        q_sc[...] = q.astype(jnp.bfloat16)                            # resident q

    # one K tile of l_neg = (q @ queue.T) / T ; queue tile is (TK, dim) bf16
    lneg_ref[...] = jax.lax.dot_general(
        q_sc[...], queue_ref[...],
        dimension_numbers=(((1,), (1,)), ((), ())),
        preferred_element_type=jnp.float32) * inv_T


# ------------------------------ kernel wrapper -------------------------------

def moco_fused_head(xq, xk, p_unshuffle, params_q_b, params_k_b, queue, T,
                    *, tk_max=8192):
    """Single pallas_call: encoders + normalize + l_pos + K-tiled l_neg sweep."""
    n, d_in = xq.shape
    K, dim = queue.shape
    tk = min(K, tk_max)
    assert K % tk == 0 and tk % 128 == 0

    const = lambda j: (0, 0)    # grid-constant block (resident, DMA'd once)
    kernel = functools.partial(_moco_fused_kernel, inv_T=float(1.0 / T))

    return pl.pallas_call(
        kernel,
        out_shape=(
            jax.ShapeDtypeStruct((n, 128), jnp.float32),    # l_pos (broadcast)
            jax.ShapeDtypeStruct((n, K), jnp.float32),      # l_neg
            jax.ShapeDtypeStruct((n, dim), queue.dtype),    # shuffled keys (bf16)
        ),
        grid_spec=pltpu.PrefetchScalarGridSpec(
            num_scalar_prefetch=0,
            grid=(K // tk,),
            in_specs=[
                pl.BlockSpec((n, d_in), const),                        # xq
                pl.BlockSpec((n, d_in), const),                        # xk (shuffled)
                pl.BlockSpec((n, n), const),                           # one-hot unshuffle
                pl.BlockSpec((d_in, params_q_b[0].shape[1]), const),   # Wq1 (bf16)
                pl.BlockSpec((1, params_q_b[1].shape[1]), const),      # bq1
                pl.BlockSpec((params_q_b[2].shape[0], dim), const),    # Wqd (bf16)
                pl.BlockSpec((1, dim), const),                         # bqd
                pl.BlockSpec((d_in, params_k_b[0].shape[1]), const),   # Wk1 (bf16)
                pl.BlockSpec((1, params_k_b[1].shape[1]), const),      # bk1
                pl.BlockSpec((params_k_b[2].shape[0], dim), const),    # Wkd (bf16)
                pl.BlockSpec((1, dim), const),                         # bkd
                pl.BlockSpec((tk, dim), lambda j: (j, 0)),             # queue tile
            ],
            out_specs=(
                pl.BlockSpec((n, 128), const),
                pl.BlockSpec((n, tk), lambda j: (0, j)),
                pl.BlockSpec((n, dim), const),
            ),
            scratch_shapes=[pltpu.VMEM((n, dim), jnp.bfloat16)],       # resident q
        ),
        # Later K tiles reuse the q scratch written at j == 0, so the K axis is a
        # sequential ("arbitrary") sweep. (On v7x the sweep could be split across
        # the two TensorCores with CORE_PARALLEL if the encoder step is replicated
        # per core; kept sequential here for portability across generations.)
        compiler_params=pltpu.CompilerParams(
            dimension_semantics=("arbitrary",)),
    )(xq, xk, p_unshuffle, *params_q_b, *params_k_b, queue)


# ------------------------------ MoCo forward -------------------------------

def moco_forward(data_q, data_k, params_q, params_k, queue, queue_ptr,
                 shuffle_key, *, m=0.999, T=0.07, d_pad=128, tk_max=8192):
    """Returns (logits, labels, new_params_k, new_queue, new_queue_ptr).

    queue is stored row-major (K, dim) in bf16 (torch keeps (dim, K) f32).
    """
    N = data_q.shape[0]
    K, dim = queue.shape
    assert K % N == 0              # mirrors PyTorch's assert in _dequeue_and_enqueue

    def pad_feat(x):               # zero-pad flattened input to lane-aligned width
        d = x.shape[1]
        return jnp.pad(x, ((0, 0), (0, d_pad - d))) if d < d_pad else x

    def pad_w(w):                  # matching zero rows on W1 (math is unchanged)
        d = w.shape[0]
        return jnp.pad(w, ((0, d_pad - d), (0, 0))) if d < d_pad else w

    # momentum update of the key encoder (f32 master copy, no-grad buffer update)
    new_params_k = tuple(pk * m + pq * (1.0 - m)
                         for pk, pq in zip(params_k, params_q))

    # bf16 working copies of the 4 matmul weights, made once per step here so the
    # kernel streams half the weight bytes and does no in-kernel weight casts.
    params_q_b = (pad_w(params_q[0]).astype(jnp.bfloat16), params_q[1],
                  params_q[2].astype(jnp.bfloat16), params_q[3])
    params_k_b = (pad_w(new_params_k[0]).astype(jnp.bfloat16), new_params_k[1],
                  new_params_k[2].astype(jnp.bfloat16), new_params_k[3])

    # batch shuffle (DDP-style). The synthetic encoder has no BatchNorm, so it is
    # a mathematical no-op, but the semantics are reproduced exactly: keys are
    # encoded in shuffled order; the unshuffle is folded into the kernel's l_pos
    # via a one-hot reduce, and applied to the emitted keys below for enqueue.
    idx_shuffle = jax.random.permutation(shuffle_key, N)
    idx_unshuffle = jnp.argsort(idx_shuffle)
    p_unshuffle = jax.nn.one_hot(idx_unshuffle, N, dtype=jnp.float32)

    xq = pad_feat(data_q.reshape(N, -1))
    xk = pad_feat(data_k.reshape(N, -1)[idx_shuffle])

    lpos, lneg, k_shuf = moco_fused_head(xq, xk, p_unshuffle,
                                         params_q_b, params_k_b, queue, T,
                                         tk_max=tk_max)
    k = k_shuf[idx_unshuffle]          # undo batch shuffle (bf16, queue dtype)

    # Reference layout: logits = cat([l_pos, l_neg], dim=1) / T (already scaled).
    # NOTE: at production K keep l_pos/l_neg separate (label is always 0) to
    # avoid this lane-unaligned (N, K+1) relayout; done here to match the module.
    logits = jnp.concatenate([lpos[:, :1], lneg], axis=1)
    labels = jnp.zeros((N,), dtype=jnp.int32)

    # dequeue & enqueue: N contiguous 128-wide bf16 rows; with buffer donation
    # the dynamic_update_slice happens in place (no full-queue copy).
    ptr = queue_ptr[0]
    new_queue = jax.lax.dynamic_update_slice(queue, k, (ptr, 0))
    new_queue_ptr = queue_ptr.at[0].set((ptr + N) % K)

    return logits, labels, new_params_k, new_queue, new_queue_ptr


# --------------------------------- main -------------------------------------

if __name__ == "__main__":
    # small, MoCo-consistent shapes
    N, L, F = 8, 8, 4          # batch, seq, feat  (time-series input)
    D_IN = L * F               # 32, zero-padded to 128 for the MXU
    DIM_MLP = 128              # backbone output / decoder input (lane-aligned)
    DIM = 128                  # MoCo feature dim (default 128)
    K = 4096                   # queue size (K % N == 0); single K tile here
    M, T = 0.999, 0.07

    root = jax.random.PRNGKey(0)
    k_x1, k_x2, k_w1, k_b1, k_wd, k_bd, k_queue, k_shuf = jax.random.split(root, 8)

    data_q = jax.random.normal(k_x1, (N, L, F), dtype=jnp.float32)
    data_k = jax.random.normal(k_x2, (N, L, F), dtype=jnp.float32)

    # deterministic encoder params (encoder_k initialized as copy of encoder_q)
    w1 = 0.1 * jax.random.normal(k_w1, (D_IN, DIM_MLP), dtype=jnp.float32)
    b1 = 0.1 * jax.random.normal(k_b1, (1, DIM_MLP), dtype=jnp.float32)
    wd = 0.1 * jax.random.normal(k_wd, (DIM_MLP, DIM), dtype=jnp.float32)
    bd = 0.1 * jax.random.normal(k_bd, (1, DIM), dtype=jnp.float32)
    params_q = (w1, b1, wd, bd)
    params_k = tuple(jnp.array(p) for p in params_q)   # param_k.data.copy_(param_q)

    # queue buffer: randn normalized along the feature dim; stored (K, dim) bf16
    queue = jax.random.normal(k_queue, (K, DIM), dtype=jnp.float32)
    queue = queue / jnp.maximum(jnp.linalg.norm(queue, axis=1, keepdims=True), 1e-12)
    queue = queue.astype(jnp.bfloat16)
    queue_ptr = jnp.zeros((1,), dtype=jnp.int32)

    fwd = jax.jit(functools.partial(moco_forward, m=M, T=T),
                  donate_argnums=(3, 4, 5))   # donate params_k, queue, queue_ptr
    logits, labels, params_k, queue, queue_ptr = fwd(
        data_q, data_k, params_q, params_k, queue, queue_ptr, k_shuf)

    jax.block_until_ready((logits, labels, params_k, queue, queue_ptr))

    assert logits.shape == (N, 1 + K), logits.shape
    assert labels.shape == (N,), labels.shape
    assert bool(jnp.all(jnp.isfinite(logits)))
    print("KERNEL_OK")
</pallas_src>

<mosaic_0001>
module attributes {stable_mosaic.version = 11 : i64} {
  func.func @_moco_fused_kernel(%arg0: i32, %arg1: memref<8x128xf32, #tpu.memory_space<vmem>>, %arg2: memref<8x128xf32, #tpu.memory_space<vmem>>, %arg3: memref<8x8xf32, #tpu.memory_space<vmem>>, %arg4: memref<128x128xbf16, #tpu.memory_space<vmem>>, %arg5: memref<1x128xf32, #tpu.memory_space<vmem>>, %arg6: memref<128x128xbf16, #tpu.memory_space<vmem>>, %arg7: memref<1x128xf32, #tpu.memory_space<vmem>>, %arg8: memref<128x128xbf16, #tpu.memory_space<vmem>>, %arg9: memref<1x128xf32, #tpu.memory_space<vmem>>, %arg10: memref<128x128xbf16, #tpu.memory_space<vmem>>, %arg11: memref<1x128xf32, #tpu.memory_space<vmem>>, %arg12: memref<4096x128xbf16, #tpu.memory_space<vmem>>, %arg13: memref<8x128xf32, #tpu.memory_space<vmem>>, %arg14: memref<8x4096xf32, #tpu.memory_space<vmem>>, %arg15: memref<8x128xbf16, #tpu.memory_space<vmem>>, %arg16: memref<8x128xbf16, #tpu.memory_space<vmem>>) attributes {dimension_semantics = [#tpu.dimension_semantics<arbitrary>], iteration_bounds = array<i64: 1>, scalar_prefetch = 0 : i64, scratch_operands = 1 : i64, tpu.core_type = #tpu.core_type<tc>, window_params = [{pipeline_mode = #tpu.pipeline_mode<synchronous>, transform_indices = @transform_0, window_bounds = array<i64: 8, 128>}, {pipeline_mode = #tpu.pipeline_mode<synchronous>, transform_indices = @transform_1, window_bounds = array<i64: 8, 128>}, {pipeline_mode = #tpu.pipeline_mode<synchronous>, transform_indices = @transform_2, window_bounds = array<i64: 8, 8>}, {pipeline_mode = #tpu.pipeline_mode<synchronous>, transform_indices = @transform_3, window_bounds = array<i64: 128, 128>}, {pipeline_mode = #tpu.pipeline_mode<synchronous>, transform_indices = @transform_4, window_bounds = array<i64: 1, 128>}, {pipeline_mode = #tpu.pipeline_mode<synchronous>, transform_indices = @transform_5, window_bounds = array<i64: 128, 128>}, {pipeline_mode = #tpu.pipeline_mode<synchronous>, transform_indices = @transform_6, window_bounds = array<i64: 1, 128>}, {pipeline_mode = #tpu.pipeline_mode<synchronous>, transform_indices = @transform_7, window_bounds = array<i64: 128, 128>}, {pipeline_mode = #tpu.pipeline_mode<synchronous>, transform_indices = @transform_8, window_bounds = array<i64: 1, 128>}, {pipeline_mode = #tpu.pipeline_mode<synchronous>, transform_indices = @transform_9, window_bounds = array<i64: 128, 128>}, {pipeline_mode = #tpu.pipeline_mode<synchronous>, transform_indices = @transform_10, window_bounds = array<i64: 1, 128>}, {transform_indices = @transform_11, window_bounds = array<i64: 4096, 128>}, {pipeline_mode = #tpu.pipeline_mode<synchronous>, transform_indices = @transform_12, window_bounds = array<i64: 8, 128>}, {transform_indices = @transform_13, window_bounds = array<i64: 8, 4096>}, {pipeline_mode = #tpu.pipeline_mode<synchronous>, transform_indices = @transform_14, window_bounds = array<i64: 8, 128>}]} {
    %c0_i32 = arith.constant 0 : i32
    %0 = arith.cmpi eq, %arg0, %c0_i32 : i32
    %1 = arith.extui %0 : i1 to i32
    %c0_i32_0 = arith.constant 0 : i32
    %2 = arith.cmpi ne, %1, %c0_i32_0 : i32
    scf.if %2 {
      %c0_7 = arith.constant 0 : index
      %c0_8 = arith.constant 0 : index
      %9 = vector.load %arg1[%c0_7, %c0_8] : memref<8x128xf32, #tpu.memory_space<vmem>>, vector<8x128xf32>
      %10 = arith.truncf %9 : vector<8x128xf32> to vector<8x128xbf16>
      %c0_9 = arith.constant 0 : index
      %c0_10 = arith.constant 0 : index
      %11 = vector.load %arg4[%c0_9, %c0_10] : memref<128x128xbf16, #tpu.memory_space<vmem>>, vector<128x128xbf16>
      %cst_11 = arith.constant dense<0.000000e+00> : vector<8x128xf32>
      %12 = tpu.matmul %10, %11, %cst_11 {dimension_numbers = #tpu.dot_dimension_numbers<[1], [0], [0], [1], [0, 0, 1, 1], [], []>} : vector<8x128xbf16>, vector<128x128xbf16>, vector<8x128xf32> -> vector<8x128xf32>
      %c0_12 = arith.constant 0 : index
      %c0_13 = arith.constant 0 : index
      %13 = vector.load %arg5[%c0_12, %c0_13] : memref<1x128xf32, #tpu.memory_space<vmem>>, vector<1x128xf32>
      %14 = vector.broadcast %13 : vector<1x128xf32> to vector<8x128xf32>
      %15 = arith.addf %12, %14 : vector<8x128xf32>
      %cst_14 = arith.constant 0.000000e+00 : f32
      %16 = vector.broadcast %cst_14 : f32 to vector<8x128xf32>
      %17 = arith.maximumf %15, %16 : vector<8x128xf32>
      %18 = arith.truncf %17 : vector<8x128xf32> to vector<8x128xbf16>
      %c0_15 = arith.constant 0 : index
      %c0_16 = arith.constant 0 : index
      %19 = vector.load %arg6[%c0_15, %c0_16] : memref<128x128xbf16, #tpu.memory_space<vmem>>, vector<128x128xbf16>
      %cst_17 = arith.constant dense<0.000000e+00> : vector<8x128xf32>
      %20 = tpu.matmul %18, %19, %cst_17 {dimension_numbers = #tpu.dot_dimension_numbers<[1], [0], [0], [1], [0, 0, 1, 1], [], []>} : vector<8x128xbf16>, vector<128x128xbf16>, vector<8x128xf32> -> vector<8x128xf32>
      %c0_18 = arith.constant 0 : index
      %c0_19 = arith.constant 0 : index
      %21 = vector.load %arg7[%c0_18, %c0_19] : memref<1x128xf32, #tpu.memory_space<vmem>>, vector<1x128xf32>
      %22 = vector.broadcast %21 : vector<1x128xf32> to vector<8x128xf32>
      %23 = arith.addf %20, %22 : vector<8x128xf32>
      %24 = arith.mulf %23, %23 : vector<8x128xf32>
      %cst_20 = arith.constant dense<0.000000e+00> : vector<8xf32>
      %25 = vector.multi_reduction <add>, %24, %cst_20 [1] : vector<8x128xf32> to vector<8xf32>
      %26 = vector.shape_cast %25 : vector<8xf32> to vector<8x1xf32>
      %cst_21 = arith.constant 1.000000e-24 : f32
      %27 = vector.broadcast %cst_21 : f32 to vector<8x1xf32>
      %28 = arith.maximumf %26, %27 : vector<8x1xf32>
      %29 = math.rsqrt %28 : vector<8x1xf32>
      %30 = vector.broadcast %29 : vector<8x1xf32> to vector<8x128xf32>
      %31 = arith.mulf %23, %30 : vector<8x128xf32>
      %c0_22 = arith.constant 0 : index
      %c0_23 = arith.constant 0 : index
      %32 = vector.load %arg2[%c0_22, %c0_23] : memref<8x128xf32, #tpu.memory_space<vmem>>, vector<8x128xf32>
      %33 = arith.truncf %32 : vector<8x128xf32> to vector<8x128xbf16>
      %c0_24 = arith.constant 0 : index
      %c0_25 = arith.constant 0 : index
      %34 = vector.load %arg8[%c0_24, %c0_25] : memref<128x128xbf16, #tpu.memory_space<vmem>>, vector<128x128xbf16>
      %cst_26 = arith.constant dense<0.000000e+00> : vector<8x128xf32>
      %35 = tpu.matmul %33, %34, %cst_26 {dimension_numbers = #tpu.dot_dimension_numbers<[1], [0], [0], [1], [0, 0, 1, 1], [], []>} : vector<8x128xbf16>, vector<128x128xbf16>, vector<8x128xf32> -> vector<8x128xf32>
      %c0_27 = arith.constant 0 : index
      %c0_28 = arith.constant 0 : index
      %36 = vector.load %arg9[%c0_27, %c0_28] : memref<1x128xf32, #tpu.memory_space<vmem>>, vector<1x128xf32>
      %37 = vector.broadcast %36 : vector<1x128xf32> to vector<8x128xf32>
      %38 = arith.addf %35, %37 : vector<8x128xf32>
      %cst_29 = arith.constant 0.000000e+00 : f32
      %39 = vector.broadcast %cst_29 : f32 to vector<8x128xf32>
      %40 = arith.maximumf %38, %39 : vector<8x128xf32>
      %41 = arith.truncf %40 : vector<8x128xf32> to vector<8x128xbf16>
      %c0_30 = arith.constant 0 : index
      %c0_31 = arith.constant 0 : index
      %42 = vector.load %arg10[%c0_30, %c0_31] : memref<128x128xbf16, #tpu.memory_space<vmem>>, vector<128x128xbf16>
      %cst_32 = arith.constant dense<0.000000e+00> : vector<8x128xf32>
      %43 = tpu.matmul %41, %42, %cst_32 {dimension_numbers = #tpu.dot_dimension_numbers<[1], [0], [0], [1], [0, 0, 1, 1], [], []>} : vector<8x128xbf16>, vector<128x128xbf16>, vector<8x128xf32> -> vector<8x128xf32>
      %c0_33 = arith.constant 0 : index
      %c0_34 = arith.constant 0 : index
      %44 = vector.load %arg11[%c0_33, %c0_34] : memref<1x128xf32, #tpu.memory_space<vmem>>, vector<1x128xf32>
      %45 = vector.broadcast %44 : vector<1x128xf32> to vector<8x128xf32>
      %46 = arith.addf %43, %45 : vector<8x128xf32>
      %47 = arith.mulf %46, %46 : vector<8x128xf32>
      %cst_35 = arith.constant dense<0.000000e+00> : vector<8xf32>
      %48 = vector.multi_reduction <add>, %47, %cst_35 [1] : vector<8x128xf32> to vector<8xf32>
      %49 = vector.shape_cast %48 : vector<8xf32> to vector<8x1xf32>
      %cst_36 = arith.constant 1.000000e-24 : f32
      %50 = vector.broadcast %cst_36 : f32 to vector<8x1xf32>
      %51 = arith.maximumf %49, %50 : vector<8x1xf32>
      %52 = math.rsqrt %51 : vector<8x1xf32>
      %53 = vector.broadcast %52 : vector<8x1xf32> to vector<8x128xf32>
      %54 = arith.mulf %46, %53 : vector<8x128xf32>
      %cst_37 = arith.constant dense<0.000000e+00> : vector<8x8xf32>
      %55 = tpu.matmul %31, %54, %cst_37 {dimension_numbers = #tpu.dot_dimension_numbers<[1], [1], [0], [0], [0, 0, 1, 0], [], []>} : vector<8x128xf32>, vector<8x128xf32>, vector<8x8xf32> -> vector<8x8xf32>
      %c0_38 = arith.constant 0 : index
      %c0_39 = arith.constant 0 : index
      %56 = vector.load %arg3[%c0_38, %c0_39] : memref<8x8xf32, #tpu.memory_space<vmem>>, vector<8x8xf32>
      %57 = arith.mulf %55, %56 : vector<8x8xf32>
      %cst_40 = arith.constant dense<0.000000e+00> : vector<8xf32>
      %58 = vector.multi_reduction <add>, %57, %cst_40 [1] : vector<8x8xf32> to vector<8xf32>
      %59 = vector.shape_cast %58 : vector<8xf32> to vector<8x1xf32>
      %cst_41 = arith.constant 14.2857141 : f32
      %60 = vector.broadcast %cst_41 : f32 to vector<8x1xf32>
      %61 = arith.mulf %59, %60 : vector<8x1xf32>
      %62 = vector.shape_cast %61 : vector<8x1xf32> to vector<8x1xf32>
      %63 = vector.broadcast %62 : vector<8x1xf32> to vector<8x128xf32>
      %c0_42 = arith.constant 0 : index
      %c0_43 = arith.constant 0 : index
      %64 = vector.load %arg13[%c0_42, %c0_43] : memref<8x128xf32, #tpu.memory_space<vmem>>, vector<8x128xf32>
      tpu.vector_store %arg13[%c0_42, %c0_43], %63 {strides = array<i32>} : memref<8x128xf32, #tpu.memory_space<vmem>>, vector<8x128xf32>,
      %65 = arith.truncf %54 : vector<8x128xf32> to vector<8x128xbf16>
      %c0_44 = arith.constant 0 : index
      %c0_45 = arith.constant 0 : index
      %66 = vector.load %arg15[%c0_44, %c0_45] : memref<8x128xbf16, #tpu.memory_space<vmem>>, vector<8x128xbf16>
      tpu.vector_store %arg15[%c0_44, %c0_45], %65 {strides = array<i32>} : memref<8x128xbf16, #tpu.memory_space<vmem>>, vector<8x128xbf16>,
      %67 = arith.truncf %31 : vector<8x128xf32> to vector<8x128xbf16>
      %c0_46 = arith.constant 0 : index
      %c0_47 = arith.constant 0 : index
      %68 = vector.load %arg16[%c0_46, %c0_47] : memref<8x128xbf16, #tpu.memory_space<vmem>>, vector<8x128xbf16>
      tpu.vector_store %arg16[%c0_46, %c0_47], %67 {strides = array<i32>} : memref<8x128xbf16, #tpu.memory_space<vmem>>, vector<8x128xbf16>,
    } else {
    }
    %c0 = arith.constant 0 : index
    %c0_1 = arith.constant 0 : index
    %3 = vector.load %arg16[%c0, %c0_1] : memref<8x128xbf16, #tpu.memory_space<vmem>>, vector<8x128xbf16>
    %c0_2 = arith.constant 0 : index
    %c0_3 = arith.constant 0 : index
    %4 = vector.load %arg12[%c0_2, %c0_3] : memref<4096x128xbf16, #tpu.memory_space<vmem>>, vector<4096x128xbf16>
    %cst = arith.constant dense<0.000000e+00> : vector<8x4096xf32>
    %5 = tpu.matmul %3, %4, %cst {dimension_numbers = #tpu.dot_dimension_numbers<[1], [1], [0], [0], [0, 0, 1, 0], [], []>} : vector<8x128xbf16>, vector<4096x128xbf16>, vector<8x4096xf32> -> vector<8x4096xf32>
    %cst_4 = arith.constant 14.2857141 : f32
    %6 = vector.broadcast %cst_4 : f32 to vector<8x4096xf32>
    %7 = arith.mulf %5, %6 : vector<8x4096xf32>
    %c0_5 = arith.constant 0 : index
    %c0_6 = arith.constant 0 : index
    %8 = vector.load %arg14[%c0_5, %c0_6] : memref<8x4096xf32, #tpu.memory_space<vmem>>, vector<8x4096xf32>
    tpu.vector_store %arg14[%c0_5, %c0_6], %7 {strides = array<i32>} : memref<8x4096xf32, #tpu.memory_space<vmem>>, vector<8x4096xf32>,
    return
  }
  func.func @transform_0(%arg0: i32) -> (i32, i32) {
    %c0_i32 = arith.constant 0 : i32
    %c0_i32_0 = arith.constant 0 : i32
    %c0_i32_1 = arith.constant 0 : i32
    return %c0_i32, %c0_i32_0 : i32, i32
  }
  func.func @transform_1(%arg0: i32) -> (i32, i32) {
    %c0_i32 = arith.constant 0 : i32
    %c0_i32_0 = arith.constant 0 : i32
    %c0_i32_1 = arith.constant 0 : i32
    return %c0_i32, %c0_i32_0 : i32, i32
  }
  func.func @transform_2(%arg0: i32) -> (i32, i32) {
    %c0_i32 = arith.constant 0 : i32
    %c0_i32_0 = arith.constant 0 : i32
    %c0_i32_1 = arith.constant 0 : i32
    return %c0_i32, %c0_i32_0 : i32, i32
  }
  func.func @transform_3(%arg0: i32) -> (i32, i32) {
    %c0_i32 = arith.constant 0 : i32
    %c0_i32_0 = arith.constant 0 : i32
    %c0_i32_1 = arith.constant 0 : i32
    return %c0_i32, %c0_i32_0 : i32, i32
  }
  func.func @transform_4(%arg0: i32) -> (i32, i32) {
    %c0_i32 = arith.constant 0 : i32
    %c0_i32_0 = arith.constant 0 : i32
    %c0_i32_1 = arith.constant 0 : i32
    return %c0_i32, %c0_i32_0 : i32, i32
  }
  func.func @transform_5(%arg0: i32) -> (i32, i32) {
    %c0_i32 = arith.constant 0 : i32
    %c0_i32_0 = arith.constant 0 : i32
    %c0_i32_1 = arith.constant 0 : i32
    return %c0_i32, %c0_i32_0 : i32, i32
  }
  func.func @transform_6(%arg0: i32) -> (i32, i32) {
    %c0_i32 = arith.constant 0 : i32
    %c0_i32_0 = arith.constant 0 : i32
    %c0_i32_1 = arith.constant 0 : i32
    return %c0_i32, %c0_i32_0 : i32, i32
  }
  func.func @transform_7(%arg0: i32) -> (i32, i32) {
    %c0_i32 = arith.constant 0 : i32
    %c0_i32_0 = arith.constant 0 : i32
    %c0_i32_1 = arith.constant 0 : i32
    return %c0_i32, %c0_i32_0 : i32, i32
  }
  func.func @transform_8(%arg0: i32) -> (i32, i32) {
    %c0_i32 = arith.constant 0 : i32
    %c0_i32_0 = arith.constant 0 : i32
    %c0_i32_1 = arith.constant 0 : i32
    return %c0_i32, %c0_i32_0 : i32, i32
  }
  func.func @transform_9(%arg0: i32) -> (i32, i32) {
    %c0_i32 = arith.constant 0 : i32
    %c0_i32_0 = arith.constant 0 : i32
    %c0_i32_1 = arith.constant 0 : i32
    return %c0_i32, %c0_i32_0 : i32, i32
  }
  func.func @transform_10(%arg0: i32) -> (i32, i32) {
    %c0_i32 = arith.constant 0 : i32
    %c0_i32_0 = arith.constant 0 : i32
    %c0_i32_1 = arith.constant 0 : i32
    return %c0_i32, %c0_i32_0 : i32, i32
  }
  func.func @transform_11(%arg0: i32) -> (i32, i32) {
    %c0_i32 = arith.constant 0 : i32
    %c0_i32_0 = arith.constant 0 : i32
    return %arg0, %c0_i32 : i32, i32
  }
  func.func @transform_12(%arg0: i32) -> (i32, i32) {
    %c0_i32 = arith.constant 0 : i32
    %c0_i32_0 = arith.constant 0 : i32
    %c0_i32_1 = arith.constant 0 : i32
    return %c0_i32, %c0_i32_0 : i32, i32
  }
  func.func @transform_13(%arg0: i32) -> (i32, i32) {
    %c0_i32 = arith.constant 0 : i32
    %c0_i32_0 = arith.constant 0 : i32
    return %c0_i32, %arg0 : i32, i32
  }
  func.func @transform_14(%arg0: i32) -> (i32, i32) {
    %c0_i32 = arith.constant 0 : i32
    %c0_i32_0 = arith.constant 0 : i32
    %c0_i32_1 = arith.constant 0 : i32
    return %c0_i32, %c0_i32_0 : i32, i32
  }
}

</mosaic_0001>

<llo_original>
// kernel: moco_forward.1
$region0: #{moco_forward.1}
  #allocation0 [shape = 'u32[]', space=smem, size = 0x4, offset = 0x4, fixed_abs, tag = 'smem constant byte address 0x4 - core index']
  #allocation1 [shape = 'u32[144,128]{1,0:T(1,128)}', space=vmem, size = 0x12000, scoped, tag = 'internal scratch']
  #allocation2 [shape = 'bf16[8,128]{1,0:T(8,128)(2,1)}', space=vmem, size = 0x800, scoped, tag = 'scratch operand']
  %s0 = inlined_call_operand.vmem [shape: f32[8,128], index: 0, kind: input, shape index: {}]
  %s1 = inlined_call_operand.vmem [shape: f32[8,128], index: 1, kind: input, shape index: {}]
  %s2 = inlined_call_operand.vmem [shape: f32[8,8], index: 2, kind: input, shape index: {}]
  %s3 = inlined_call_operand.vmem [shape: bf16[128,128], index: 3, kind: input, shape index: {}]
  %s4 = inlined_call_operand.vmem [shape: f32[1,128], index: 4, kind: input, shape index: {}]
  %s5 = inlined_call_operand.vmem [shape: bf16[128,128], index: 5, kind: input, shape index: {}]
  %s6 = inlined_call_operand.vmem [shape: f32[1,128], index: 6, kind: input, shape index: {}]
  %s7 = inlined_call_operand.vmem [shape: bf16[128,128], index: 7, kind: input, shape index: {}]
  %s8 = inlined_call_operand.vmem [shape: f32[1,128], index: 8, kind: input, shape index: {}]
  %s9 = inlined_call_operand.vmem [shape: bf16[128,128], index: 9, kind: input, shape index: {}]
  %s10 = inlined_call_operand.vmem [shape: f32[1,128], index: 10, kind: input, shape index: {}]
  %s11 = inlined_call_operand.hbm [shape: bf16[4096,128], index: 11, kind: input, shape index: {}]
  %s12 = inlined_call_operand.vmem [shape: f32[8,128], index: 12, kind: output, shape index: {0}]
  %s13 = inlined_call_operand.vmem [shape: f32[8,4096], index: 13, kind: output, shape index: {1}]
  %s14 = inlined_call_operand.vmem [shape: bf16[8,128], index: 14, kind: output, shape index: {2}]
  %15 = xla_tuple %s12, %s13, %s14
  %s16 = sld [smem:[#allocation0]]
  $region82: #{moco_forward.1} parent=0
    _
  %s18 = ssub.s32 1, %s16
  %s19 = scalar_select 0, %s18, %s16
  $region1: #{moco_forward.1} parent=0
    #allocation3 [shape = 'u8[1048576]{0}', space=vmem, size = 0x100000, scoped, tag = 'input window, operand 11, single buffered']
    #allocation4 [shape = 's32[1]{0}', space=sflag, size = 0x4, scoped, tag = 'scoped memory for moco_forward.1']
    %20 = vsyncpa [#allocation4], 0
    // Predicated region
    $region2: #{moco_forward.1} parent=1 // pred_check
      _
    $region3: #{moco_forward.1} parent=1 // pred_check_branch
      %22 = sbr.rel (0) target = $region5
    $region4: #{moco_forward.1} parent=1 // pred_region
      _
    $region5: #{moco_forward.1} parent=1 // pred_fallthru
      _
    // Predicated region
    $region6: #{moco_forward.1} parent=1 // pred_check
      _
    $region7: #{moco_forward.1} parent=1 // pred_check_branch
      %24 = sbr.rel (0) target = $region9
    $region8: #{moco_forward.1} parent=1 // pred_region
      _
    $region9: #{moco_forward.1} parent=1 // pred_fallthru
      _
    // Predicated region
    $region10: #{moco_forward.1} parent=1 // pred_check
      _
    $region11: #{moco_forward.1} parent=1 // pred_check_branch
      %26 = sbr.rel (0) target = $region13
    $region12: #{moco_forward.1} parent=1 // pred_region
      _
    $region13: #{moco_forward.1} parent=1 // pred_fallthru
      _
    // Predicated region
    $region14: #{moco_forward.1} parent=1 // pred_check
      _
    $region15: #{moco_forward.1} parent=1 // pred_check_branch
      %28 = sbr.rel (0) target = $region17
    $region16: #{moco_forward.1} parent=1 // pred_region
      _
    $region17: #{moco_forward.1} parent=1 // pred_fallthru
      _
    // Predicated region
    $region18: #{moco_forward.1} parent=1 // pred_check
      _
    $region19: #{moco_forward.1} parent=1 // pred_check_branch
      %30 = sbr.rel (0) target = $region21
    $region20: #{moco_forward.1} parent=1 // pred_region
      _
    $region21: #{moco_forward.1} parent=1 // pred_fallthru
      _
    // Predicated region
    $region22: #{moco_forward.1} parent=1 // pred_check
      _
    $region23: #{moco_forward.1} parent=1 // pred_check_branch
      %32 = sbr.rel (0) target = $region25
    $region24: #{moco_forward.1} parent=1 // pred_region
      _
    $region25: #{moco_forward.1} parent=1 // pred_fallthru
      _
    // Predicated region
    $region26: #{moco_forward.1} parent=1 // pred_check
      _
    $region27: #{moco_forward.1} parent=1 // pred_check_branch
      %34 = sbr.rel (0) target = $region29
    $region28: #{moco_forward.1} parent=1 // pred_region
      _
    $region29: #{moco_forward.1} parent=1 // pred_fallthru
      _
    // Predicated region
    $region30: #{moco_forward.1} parent=1 // pred_check
      _
    $region31: #{moco_forward.1} parent=1 // pred_check_branch
      %36 = sbr.rel (0) target = $region33
    $region32: #{moco_forward.1} parent=1 // pred_region
      _
    $region33: #{moco_forward.1} parent=1 // pred_fallthru
      _
    // Predicated region
    $region34: #{moco_forward.1} parent=1 // pred_check
      _
    $region35: #{moco_forward.1} parent=1 // pred_check_branch
      %38 = sbr.rel (0) target = $region37
    $region36: #{moco_forward.1} parent=1 // pred_region
      _
    $region37: #{moco_forward.1} parent=1 // pred_fallthru
      _
    // Predicated region
    $region38: #{moco_forward.1} parent=1 // pred_check
      _
    $region39: #{moco_forward.1} parent=1 // pred_check_branch
      %40 = sbr.rel (0) target = $region41
    $region40: #{moco_forward.1} parent=1 // pred_region
      _
    $region41: #{moco_forward.1} parent=1 // pred_fallthru
      _
    // Predicated region
    $region42: #{moco_forward.1} parent=1 // pred_check
      _
    $region43: #{moco_forward.1} parent=1 // pred_check_branch
      %42 = sbr.rel (0) target = $region45
    $region44: #{moco_forward.1} parent=1 // pred_region
      _
    $region45: #{moco_forward.1} parent=1 // pred_fallthru
      _
    // Predicated region
    $region46: #{moco_forward.1} parent=1 // pred_check
      _
    $region47: #{moco_forward.1} parent=1 // pred_check_branch
      %44 = sbr.rel (0) target = $region49
    $region48: #{moco_forward.1} parent=1 // pred_region
      %s46 = ssub.s32 32768, 32768
      %47 = vsyncadd [#allocation4], %s46
      %s48 = sshll.u32 [#allocation3], 4
      %s49 = int_to_ptr.vmem [resolvable:$true] %s48
      %54 = dma.hbm_to_vmem [thread:$0]  %s11, 32768, %s49, [#allocation4], 64, 64, 4
    $region49: #{moco_forward.1} parent=1 // pred_fallthru
      _
    // Predicated region
    $region50: #{moco_forward.1} parent=1 // pred_check
      _
    $region51: #{moco_forward.1} parent=1 // pred_check_branch
      %56 = sbr.rel (0) target = $region53
    $region52: #{moco_forward.1} parent=1 // pred_region
      %57 = dma.done [#allocation4], 32768
    $region53: #{moco_forward.1} parent=1 // pred_fallthru
      _
    %p59 = scmp.eq.s32.totalorder 0, 0
    // Predicated region
    $region54: #{moco_forward.1} parent=1 // pred_check
      %p60 = pneg %p59
    $region55: #{moco_forward.1} parent=1 // pred_check_branch
      %62 = sbr.rel (%p60) target = $region57
    $region56: #{moco_forward.1} parent=1 // pred_region
      %v63 = vld [vmem:[%s0] sm:$0xff]
      %v64 = vpack.c.bf16 %v63, %v63
      %v65 = vld [vmem:[%s3] sm:$0xf]
      %v66 = vld [vmem:[%s3 + $0x4] sm:$0xf]
      %v67 = vld [vmem:[%s3 + $0x8] sm:$0xf]
      %v68 = vld [vmem:[%s3 + $0xc] sm:$0xf]
      %v69 = vld [vmem:[%s3 + $0x10] sm:$0xf]
      %v70 = vld [vmem:[%s3 + $0x14] sm:$0xf]
      %v71 = vld [vmem:[%s3 + $0x18] sm:$0xf]
      %v72 = vld [vmem:[%s3 + $0x1c] sm:$0xf]
      %v73 = vld [vmem:[%s3 + $0x20] sm:$0xf]
      %v74 = vld [vmem:[%s3 + $0x24] sm:$0xf]
      %v75 = vld [vmem:[%s3 + $0x28] sm:$0xf]
      %v76 = vld [vmem:[%s3 + $0x2c] sm:$0xf]
      %v77 = vld [vmem:[%s3 + $0x30] sm:$0xf]
      %v78 = vld [vmem:[%s3 + $0x34] sm:$0xf]
      %v79 = vld [vmem:[%s3 + $0x38] sm:$0xf]
      %v80 = vld [vmem:[%s3 + $0x3c] sm:$0xf]
      %v81 = vld [vmem:[%s4] sm:$0x1]
      %v83 = vlaneseq
      %v84 = vshrl.u32 %v83, 7
      %v85 = vsub.s32 0, %v84
      %v86 = vrot.slane %v81, %v85
      %v104 = vunpack.c.l.b16 %v65
      %v105 = vunpack.c.l.b16 %v66
      %v106 = vunpack.c.l.b16 %v67
      %v107 = vunpack.c.l.b16 %v68
      %v108 = vunpack.c.l.b16 %v69
      %v109 = vunpack.c.l.b16 %v70
      %v110 = vunpack.c.l.b16 %v71
      %v111 = vunpack.c.l.b16 %v72
      %v112 = vunpack.c.l.b16 %v73
      %v113 = vunpack.c.l.b16 %v74
      %v114 = vunpack.c.l.b16 %v75
      %v115 = vunpack.c.l.b16 %v76
      %v116 = vunpack.c.l.b16 %v77
      %v117 = vunpack.c.l.b16 %v78
      %v118 = vunpack.c.l.b16 %v79
      %v119 = vunpack.c.l.b16 %v80
      %v120 = vpack.c.b16 %v105, %v104
      %v121 = vpack.c.b16 %v107, %v106
      %v122 = vpack.c.b16 %v109, %v108
      %v123 = vpack.c.b16 %v111, %v110
      %v124 = vpack.c.b16 %v113, %v112
      %v125 = vpack.c.b16 %v115, %v114
      %v126 = vpack.c.b16 %v117, %v116
      %v127 = vpack.c.b16 %v119, %v118
      %136 = vmatprep.subr.bf16.mxu0 0
      %137 = vmatpush1.bf16.msra.mxu0 %v120
      %138 = vmatprep.subr.bf16.mxu0 0
      %139 = vmatpush1.bf16.msra.mxu0 %v121
      %140 = vmatprep.subr.bf16.mxu0 0
      %141 = vmatpush1.bf16.msra.mxu0 %v122
      %142 = vmatprep.subr.bf16.mxu0 0
      %143 = vmatpush1.bf16.msra.mxu0 %v123
      %144 = vmatprep.subr.bf16.mxu0 0
      %145 = vmatpush1.bf16.msra.mxu0 %v124
      %146 = vmatprep.subr.bf16.mxu0 0
      %147 = vmatpush1.bf16.msra.mxu0 %v125
      %148 = vmatprep.subr.bf16.mxu0 0
      %149 = vmatpush1.bf16.msra.mxu0 %v126
      %150 = vmatprep.subr.bf16.mxu0 0
      %151 = vmatpush1.bf16.msra.mxu0 %v127
      %152 = vmatprep.subr.bf16.mxu0 0
      %153 = vmatpush1.bf16.msra.mxu0 0
      %154 = vmatprep.subr.bf16.mxu0 0
      %155 = vmatpush1.bf16.msra.mxu0 0
      %156 = vmatprep.subr.bf16.mxu0 0
      %157 = vmatpush1.bf16.msra.mxu0 0
      %158 = vmatprep.subr.bf16.mxu0 0
      %159 = vmatpush1.bf16.msra.mxu0 0
      %160 = vmatprep.subr.bf16.mxu0 0
      %161 = vmatpush1.bf16.msra.mxu0 0
      %162 = vmatprep.subr.bf16.mxu0 0
      %163 = vmatpush1.bf16.msra.mxu0 0
      %164 = vmatprep.subr.bf16.mxu0 0
      %165 = vmatpush1.bf16.msra.mxu0 0
      %166 = vmatprep.subr.bf16.mxu0 0
      %167 = vmatpush1.bf16.msra.mxu0 0
      %168 = vmatprep.mubr.bf16.mxu0 0
      %169 = vmatmul.mubr.bf16.gmra.mrb[0].mxu0 %v64
      %v170 = vpop.f32.mrb[0].mxu0
      %v171 = vadd.f32 %v86, %v170
      %v172 = vpop.f32.mrb[0].mxu0
      %v173 = vpop.f32.mrb[0].mxu0
      %v174 = vpop.f32.mrb[0].mxu0
      %175 = vdwg.mxu0
      %v176 = vmax.f32 %v171, 0.0
      %v177 = vpack.c.bf16 %v176, %v176
      %v178 = vld [vmem:[%s5] sm:$0xf]
      %v179 = vld [vmem:[%s5 + $0x4] sm:$0xf]
      %v180 = vld [vmem:[%s5 + $0x8] sm:$0xf]
      %v181 = vld [vmem:[%s5 + $0xc] sm:$0xf]
      %v182 = vld [vmem:[%s5 + $0x10] sm:$0xf]
      %v183 = vld [vmem:[%s5 + $0x14] sm:$0xf]
      %v184 = vld [vmem:[%s5 + $0x18] sm:$0xf]
      %v185 = vld [vmem:[%s5 + $0x1c] sm:$0xf]
      %v186 = vld [vmem:[%s5 + $0x20] sm:$0xf]
      %v187 = vld [vmem:[%s5 + $0x24] sm:$0xf]
      %v188 = vld [vmem:[%s5 + $0x28] sm:$0xf]
      %v189 = vld [vmem:[%s5 + $0x2c] sm:$0xf]
      %v190 = vld [vmem:[%s5 + $0x30] sm:$0xf]
      %v191 = vld [vmem:[%s5 + $0x34] sm:$0xf]
      %v192 = vld [vmem:[%s5 + $0x38] sm:$0xf]
      %v193 = vld [vmem:[%s5 + $0x3c] sm:$0xf]
      %v194 = vld [vmem:[%s6] sm:$0x1]
      %v196 = vlaneseq
      %v197 = vshrl.u32 %v196, 7
      %v198 = vsub.s32 0, %v197
      %v199 = vrot.slane %v194, %v198
      %v217 = vunpack.c.l.b16 %v178
      %v218 = vunpack.c.l.b16 %v179
      %v219 = vunpack.c.l.b16 %v180
      %v220 = vunpack.c.l.b16 %v181
      %v221 = vunpack.c.l.b16 %v182
      %v222 = vunpack.c.l.b16 %v183
      %v223 = vunpack.c.l.b16 %v184
      %v224 = vunpack.c.l.b16 %v185
      %v225 = vunpack.c.l.b16 %v186
      %v226 = vunpack.c.l.b16 %v187
      %v227 = vunpack.c.l.b16 %v188
      %v228 = vunpack.c.l.b16 %v189
      %v229 = vunpack.c.l.b16 %v190
      %v230 = vunpack.c.l.b16 %v191
      %v231 = vunpack.c.l.b16 %v192
      %v232 = vunpack.c.l.b16 %v193
      %v233 = vpack.c.b16 %v218, %v217
      %v234 = vpack.c.b16 %v220, %v219
      %v235 = vpack.c.b16 %v222, %v221
      %v236 = vpack.c.b16 %v224, %v223
      %v237 = vpack.c.b16 %v226, %v225
      %v238 = vpack.c.b16 %v228, %v227
      %v239 = vpack.c.b16 %v230, %v229
      %v240 = vpack.c.b16 %v232, %v231
      %249 = vmatprep.subr.bf16.mxu0 0
      %250 = vmatpush1.bf16.msra.mxu0 %v233
      %251 = vmatprep.subr.bf16.mxu0 0
      %252 = vmatpush1.bf16.msra.mxu0 %v234
      %253 = vmatprep.subr.bf16.mxu0 0
      %254 = vmatpush1.bf16.msra.mxu0 %v235
      %255 = vmatprep.subr.bf16.mxu0 0
      %256 = vmatpush1.bf16.msra.mxu0 %v236
      %257 = vmatprep.subr.bf16.mxu0 0
      %258 = vmatpush1.bf16.msra.mxu0 %v237
      %259 = vmatprep.subr.bf16.mxu0 0
      %260 = vmatpush1.bf16.msra.mxu0 %v238
      %261 = vmatprep.subr.bf16.mxu0 0
      %262 = vmatpush1.bf16.msra.mxu0 %v239
      %263 = vmatprep.subr.bf16.mxu0 0
      %264 = vmatpush1.bf16.msra.mxu0 %v240
      %265 = vmatprep.subr.bf16.mxu0 0
      %266 = vmatpush1.bf16.msra.mxu0 0
      %267 = vmatprep.subr.bf16.mxu0 0
      %268 = vmatpush1.bf16.msra.mxu0 0
      %269 = vmatprep.subr.bf16.mxu0 0
      %270 = vmatpush1.bf16.msra.mxu0 0
      %271 = vmatprep.subr.bf16.mxu0 0
      %272 = vmatpush1.bf16.msra.mxu0 0
      %273 = vmatprep.subr.bf16.mxu0 0
      %274 = vmatpush1.bf16.msra.mxu0 0
      %275 = vmatprep.subr.bf16.mxu0 0
      %276 = vmatpush1.bf16.msra.mxu0 0
      %277 = vmatprep.subr.bf16.mxu0 0
      %278 = vmatpush1.bf16.msra.mxu0 0
      %279 = vmatprep.subr.bf16.mxu0 0
      %280 = vmatpush1.bf16.msra.mxu0 0
      %281 = vmatprep.mubr.bf16.mxu0 0
      %282 = vmatmul.mubr.bf16.gmra.mrb[0].mxu0 %v177
      %v283 = vpop.f32.mrb[0].mxu0
      %v284 = vadd.f32 %v199, %v283
      %v285 = vpop.f32.mrb[0].mxu0
      %v286 = vpop.f32.mrb[0].mxu0
      %v287 = vpop.f32.mrb[0].mxu0
      %288 = vdwg.mxu0
      %v289 = vmul.f32 %v284, %v284
      %290 = vadd.xlane.f32.xlu0 %v289
      %v291 = vpop.xlane.xlu0 %290
      %v292 = vmax.f32 %v291, 1e-24
      %v293 = vrsqrt.pop %v292
      %v294 = vmul.f32 %v284, %v293
      %v295 = vld [vmem:[%s1] sm:$0xff]
      %v296 = vpack.c.bf16 %v295, %v295
      %v297 = vld [vmem:[%s7] sm:$0xf]
      %v298 = vld [vmem:[%s7 + $0x4] sm:$0xf]
      %v299 = vld [vmem:[%s7 + $0x8] sm:$0xf]
      %v300 = vld [vmem:[%s7 + $0xc] sm:$0xf]
      %v301 = vld [vmem:[%s7 + $0x10] sm:$0xf]
      %v302 = vld [vmem:[%s7 + $0x14] sm:$0xf]
      %v303 = vld [vmem:[%s7 + $0x18] sm:$0xf]
      %v304 = vld [vmem:[%s7 + $0x1c] sm:$0xf]
      %v305 = vld [vmem:[%s7 + $0x20] sm:$0xf]
      %v306 = vld [vmem:[%s7 + $0x24] sm:$0xf]
      %v307 = vld [vmem:[%s7 + $0x28] sm:$0xf]
      %v308 = vld [vmem:[%s7 + $0x2c] sm:$0xf]
      %v309 = vld [vmem:[%s7 + $0x30] sm:$0xf]
      %v310 = vld [vmem:[%s7 + $0x34] sm:$0xf]
      %v311 = vld [vmem:[%s7 + $0x38] sm:$0xf]
      %v312 = vld [vmem:[%s7 + $0x3c] sm:$0xf]
      %v313 = vld [vmem:[%s8] sm:$0x1]
      %v315 = vlaneseq
      %v316 = vshrl.u32 %v315, 7
      %v317 = vsub.s32 0, %v316
      %v318 = vrot.slane %v313, %v317
      %v336 = vunpack.c.l.b16 %v297
      %v337 = vunpack.c.l.b16 %v298
      %v338 = vunpack.c.l.b16 %v299
      %v339 = vunpack.c.l.b16 %v300
      %v340 = vunpack.c.l.b16 %v301
      %v341 = vunpack.c.l.b16 %v302
      %v342 = vunpack.c.l.b16 %v303
      %v343 = vunpack.c.l.b16 %v304
      %v344 = vunpack.c.l.b16 %v305
      %v345 = vunpack.c.l.b16 %v306
      %v346 = vunpack.c.l.b16 %v307
      %v347 = vunpack.c.l.b16 %v308
      %v348 = vunpack.c.l.b16 %v309
      %v349 = vunpack.c.l.b16 %v310
      %v350 = vunpack.c.l.b16 %v311
      %v351 = vunpack.c.l.b16 %v312
      %v352 = vpack.c.b16 %v337, %v336
      %v353 = vpack.c.b16 %v339, %v338
      %v354 = vpack.c.b16 %v341, %v340
      %v355 = vpack.c.b16 %v343, %v342
      %v356 = vpack.c.b16 %v345, %v344
      %v357 = vpack.c.b16 %v347, %v346
      %v358 = vpack.c.b16 %v349, %v348
      %v359 = vpack.c.b16 %v351, %v350
      %368 = vmatprep.subr.bf16.mxu0 0
      %369 = vmatpush1.bf16.msra.mxu0 %v352
      %370 = vmatprep.subr.bf16.mxu0 0
      %371 = vmatpush1.bf16.msra.mxu0 %v353
      %372 = vmatprep.subr.bf16.mxu0 0
      %373 = vmatpush1.bf16.msra.mxu0 %v354
      %374 = vmatprep.subr.bf16.mxu0 0
      %375 = vmatpush1.bf16.msra.mxu0 %v355
      %376 = vmatprep.subr.bf16.mxu0 0
      %377 = vmatpush1.bf16.msra.mxu0 %v356
      %378 = vmatprep.subr.bf16.mxu0 0
      %379 = vmatpush1.bf16.msra.mxu0 %v357
      %380 = vmatprep.subr.bf16.mxu0 0
      %381 = vmatpush1.bf16.msra.mxu0 %v358
      %382 = vmatprep.subr.bf16.mxu0 0
      %383 = vmatpush1.bf16.msra.mxu0 %v359
      %384 = vmatprep.subr.bf16.mxu0 0
      %385 = vmatpush1.bf16.msra.mxu0 0
      %386 = vmatprep.subr.bf16.mxu0 0
      %387 = vmatpush1.bf16.msra.mxu0 0
      %388 = vmatprep.subr.bf16.mxu0 0
      %389 = vmatpush1.bf16.msra.mxu0 0
      %390 = vmatprep.subr.bf16.mxu0 0
      %391 = vmatpush1.bf16.msra.mxu0 0
      %392 = vmatprep.subr.bf16.mxu0 0
      %393 = vmatpush1.bf16.msra.mxu0 0
      %394 = vmatprep.subr.bf16.mxu0 0
      %395 = vmatpush1.bf16.msra.mxu0 0
      %396 = vmatprep.subr.bf16.mxu0 0
      %397 = vmatpush1.bf16.msra.mxu0 0
      %398 = vmatprep.subr.bf16.mxu0 0
      %399 = vmatpush1.bf16.msra.mxu0 0
      %400 = vmatprep.mubr.bf16.mxu0 0
      %401 = vmatmul.mubr.bf16.gmra.mrb[0].mxu0 %v296
      %v402 = vpop.f32.mrb[0].mxu0
      %v403 = vadd.f32 %v318, %v402
      %v404 = vpop.f32.mrb[0].mxu0
      %v405 = vpop.f32.mrb[0].mxu0
      %v406 = vpop.f32.mrb[0].mxu0
      %407 = vdwg.mxu0
      %v408 = vmax.f32 %v403, 0.0
      %v409 = vpack.c.bf16 %v408, %v408
      %v410 = vld [vmem:[%s9] sm:$0xf]
      %v411 = vld [vmem:[%s9 + $0x4] sm:$0xf]
      %v412 = vld [vmem:[%s9 + $0x8] sm:$0xf]
      %v413 = vld [vmem:[%s9 + $0xc] sm:$0xf]
      %v414 = vld [vmem:[%s9 + $0x10] sm:$0xf]
      %v415 = vld [vmem:[%s9 + $0x14] sm:$0xf]
      %v416 = vld [vmem:[%s9 + $0x18] sm:$0xf]
      %v417 = vld [vmem:[%s9 + $0x1c] sm:$0xf]
      %v418 = vld [vmem:[%s9 + $0x20] sm:$0xf]
      %v419 = vld [vmem:[%s9 + $0x24] sm:$0xf]
      %v420 = vld [vmem:[%s9 + $0x28] sm:$0xf]
      %v421 = vld [vmem:[%s9 + $0x2c] sm:$0xf]
      %v422 = vld [vmem:[%s9 + $0x30] sm:$0xf]
      %v423 = vld [vmem:[%s9 + $0x34] sm:$0xf]
      %v424 = vld [vmem:[%s9 + $0x38] sm:$0xf]
      %v425 = vld [vmem:[%s9 + $0x3c] sm:$0xf]
      %v426 = vld [vmem:[%s10] sm:$0x1]
      %v428 = vlaneseq
      %v429 = vshrl.u32 %v428, 7
      %v430 = vsub.s32 0, %v429
      %v431 = vrot.slane %v426, %v430
      %v449 = vunpack.c.l.b16 %v410
      %v450 = vunpack.c.l.b16 %v411
      %v451 = vunpack.c.l.b16 %v412
      %v452 = vunpack.c.l.b16 %v413
      %v453 = vunpack.c.l.b16 %v414
      %v454 = vunpack.c.l.b16 %v415
      %v455 = vunpack.c.l.b16 %v416
      %v456 = vunpack.c.l.b16 %v417
      %v457 = vunpack.c.l.b16 %v418
      %v458 = vunpack.c.l.b16 %v419
      %v459 = vunpack.c.l.b16 %v420
      %v460 = vunpack.c.l.b16 %v421
      %v461 = vunpack.c.l.b16 %v422
      %v462 = vunpack.c.l.b16 %v423
      %v463 = vunpack.c.l.b16 %v424
      %v464 = vunpack.c.l.b16 %v425
      %v465 = vpack.c.b16 %v450, %v449
      %v466 = vpack.c.b16 %v452, %v451
      %v467 = vpack.c.b16 %v454, %v453
      %v468 = vpack.c.b16 %v456, %v455
      %v469 = vpack.c.b16 %v458, %v457
      %v470 = vpack.c.b16 %v460, %v459
      %v471 = vpack.c.b16 %v462, %v461
      %v472 = vpack.c.b16 %v464, %v463
      %481 = vmatprep.subr.bf16.mxu0 0
      %482 = vmatpush1.bf16.msra.mxu0 %v465
      %483 = vmatprep.subr.bf16.mxu0 0
      %484 = vmatpush1.bf16.msra.mxu0 %v466
      %485 = vmatprep.subr.bf16.mxu0 0
      %486 = vmatpush1.bf16.msra.mxu0 %v467
      %487 = vmatprep.subr.bf16.mxu0 0
      %488 = vmatpush1.bf16.msra.mxu0 %v468
      %489 = vmatprep.subr.bf16.mxu0 0
      %490 = vmatpush1.bf16.msra.mxu0 %v469
      %491 = vmatprep.subr.bf16.mxu0 0
      %492 = vmatpush1.bf16.msra.mxu0 %v470
      %493 = vmatprep.subr.bf16.mxu0 0
      %494 = vmatpush1.bf16.msra.mxu0 %v471
      %495 = vmatprep.subr.bf16.mxu0 0
      %496 = vmatpush1.bf16.msra.mxu0 %v472
      %497 = vmatprep.subr.bf16.mxu0 0
      %498 = vmatpush1.bf16.msra.mxu0 0
      %499 = vmatprep.subr.bf16.mxu0 0
      %500 = vmatpush1.bf16.msra.mxu0 0
      %501 = vmatprep.subr.bf16.mxu0 0
      %502 = vmatpush1.bf16.msra.mxu0 0
      %503 = vmatprep.subr.bf16.mxu0 0
      %504 = vmatpush1.bf16.msra.mxu0 0
      %505 = vmatprep.subr.bf16.mxu0 0
      %506 = vmatpush1.bf16.msra.mxu0 0
      %507 = vmatprep.subr.bf16.mxu0 0
      %508 = vmatpush1.bf16.msra.mxu0 0
      %509 = vmatprep.subr.bf16.mxu0 0
      %510 = vmatpush1.bf16.msra.mxu0 0
      %511 = vmatprep.subr.bf16.mxu0 0
      %512 = vmatpush1.bf16.msra.mxu0 0
      %513 = vmatprep.mubr.bf16.mxu0 0
      %514 = vmatmul.mubr.bf16.gmra.mrb[0].mxu0 %v409
      %v515 = vpop.f32.mrb[0].mxu0
      %v516 = vadd.f32 %v431, %v515
      %v517 = vpop.f32.mrb[0].mxu0
      %v518 = vpop.f32.mrb[0].mxu0
      %v519 = vpop.f32.mrb[0].mxu0
      %520 = vdwg.mxu0
      %v521 = vmul.f32 %v516, %v516
      %522 = vadd.xlane.f32.xlu0 %v521
      %v523 = vpop.xlane.xlu0 %522
      %v524 = vmax.f32 %v523, 1e-24
      %v525 = vrsqrt.pop %v524
      %v526 = vmul.f32 %v516, %v525
      %527 = vmatprep.subr.mxu0 0.0
      %528 = vmatpush1.xpose.msra.mxu0 %v526
      %529 = vmatprep.subr.mxu0 0.0
      %530 = vmatpush1.xpose.msra.mxu0 0.0
      %531 = vmatprep.subr.mxu0 0.0
      %532 = vmatpush1.xpose.msra.mxu0 0.0
      %533 = vmatprep.subr.mxu0 0.0
      %534 = vmatpush1.xpose.msra.mxu0 0.0
      %535 = vmatprep.subr.mxu0 0.0
      %536 = vmatpush1.xpose.msra.mxu0 0.0
      %537 = vmatprep.subr.mxu0 0.0
      %538 = vmatpush1.xpose.msra.mxu0 0.0
      %539 = vmatprep.subr.mxu0 0.0
      %540 = vmatpush1.xpose.msra.mxu0 0.0
      %541 = vmatprep.subr.mxu0 0.0
      %542 = vmatpush1.xpose.msra.mxu0 0.0
      %543 = vmatprep.subr.mxu0 0.0
      %544 = vmatpush1.xpose.msra.mxu0 0.0
      %545 = vmatprep.subr.mxu0 0.0
      %546 = vmatpush1.xpose.msra.mxu0 0.0
      %547 = vmatprep.subr.mxu0 0.0
      %548 = vmatpush1.xpose.msra.mxu0 0.0
      %549 = vmatprep.subr.mxu0 0.0
      %550 = vmatpush1.xpose.msra.mxu0 0.0
      %551 = vmatprep.subr.mxu0 0.0
      %552 = vmatpush1.xpose.msra.mxu0 0.0
      %553 = vmatprep.subr.mxu0 0.0
      %554 = vmatpush1.xpose.msra.mxu0 0.0
      %555 = vmatprep.subr.mxu0 0.0
      %556 = vmatpush1.xpose.msra.mxu0 0.0
      %557 = vmatprep.subr.mxu0 0.0
      %558 = vmatpush1.xpose.msra.mxu0 0.0
      %559 = vmatprep.subr.mxu0 0.0
      %560 = vmatpush1.xpose.msra.mxu0 0.0
      %561 = vmatprep.subr.mxu0 0.0
      %562 = vmatpush1.xpose.msra.mxu0 0.0
      %563 = vmatprep.subr.mxu0 0.0
      %564 = vmatpush1.xpose.msra.mxu0 0.0
      %565 = vmatprep.subr.mxu0 0.0
      %566 = vmatpush1.xpose.msra.mxu0 0.0
      %567 = vmatprep.subr.mxu0 0.0
      %568 = vmatpush1.xpose.msra.mxu0 0.0
      %569 = vmatprep.subr.mxu0 0.0
      %570 = vmatpush1.xpose.msra.mxu0 0.0
      %571 = vmatprep.subr.mxu0 0.0
      %572 = vmatpush1.xpose.msra.mxu0 0.0
      %573 = vmatprep.subr.mxu0 0.0
      %574 = vmatpush1.xpose.msra.mxu0 0.0
      %575 = vmatprep.subr.mxu0 0.0
      %576 = vmatpush1.xpose.msra.mxu0 0.0
      %577 = vmatprep.subr.mxu0 0.0
      %578 = vmatpush1.xpose.msra.mxu0 0.0
      %579 = vmatprep.subr.mxu0 0.0
      %580 = vmatpush1.xpose.msra.mxu0 0.0
      %581 = vmatprep.subr.mxu0 0.0
      %582 = vmatpush1.xpose.msra.mxu0 0.0
      %583 = vmatprep.subr.mxu0 0.0
      %584 = vmatpush1.xpose.msra.mxu0 0.0
      %585 = vmatprep.subr.mxu0 0.0
      %586 = vmatpush1.xpose.msra.mxu0 0.0
      %587 = vmatprep.subr.mxu0 0.0
      %588 = vmatpush1.xpose.msra.mxu0 0.0
      %589 = vmatprep.subr.mxu0 0.0
      %590 = vmatpush1.xpose.msra.mxu0 0.0
      %591 = vmatprep.mubr.f32.mxu0 0.0
      %592 = vmatmul.mubr.f32.gmra.mrb[0].mxu0 %v294
      %v593 = vpop.f32.mrb[0].mxu0
      %v594 = vadd.f32 0.0, %v593
      %v595 = vpop.f32.mrb[0].mxu0
      %596 = vdwg.mxu0
      %v597 = vld [vmem:[%s2] sm:$0xff]
      %v598 = vmul.f32 %v594, %v597
      %vm599 = vcmask 64512
      %v600 = vsel %vm599, %v598, 0.0
      %601 = vadd.xlane.f32.xlu0 %v600
      %v602 = vpop.xlane.xlu0 %601
      %v603 = vmul.f32 %v602, 14.285714
      %604 = vst [vmem:[%s12] sm:$0xff] %v603
      %v605 = vpack.c.bf16 %v526, %v526
      %606 = vst [vmem:[%s14] sm:$0xf] %v605
      %v607 = vpack.c.bf16 %v294, %v294
      %608 = vst [vmem:[#allocation2] sm:$0xf] %v607
    $region57: #{moco_forward.1} parent=1 // pred_fallthru
      _
    %v609 = vld [vmem:[#allocation2] sm:$0xf]
    %v610 = vld [vmem:[#allocation3] sm:$0xf]
    %v611 = vld [vmem:[#allocation3 + $0x4] sm:$0xf]
    %v612 = vld [vmem:[#allocation3 + $0x8] sm:$0xf]
    %v613 = vld [vmem:[#allocation3 + $0xc] sm:$0xf]
    %v614 = vld [vmem:[#allocation3 + $0x10] sm:$0xf]
    %v615 = vld [vmem:[#allocation3 + $0x14] sm:$0xf]
    %v616 = vld [vmem:[#allocation3 + $0x18] sm:$0xf]
    %v617 = vld [vmem:[#allocation3 + $0x1c] sm:$0xf]
    %v618 = vld [vmem:[#allocation3 + $0x20] sm:$0xf]
    %v619 = vld [vmem:[#allocation3 + $0x24] sm:$0xf]
    %v620 = vld [vmem:[#allocation3 + $0x28] sm:$0xf]
    %v621 = vld [vmem:[#allocation3 + $0x2c] sm:$0xf]
    %v622 = vld [vmem:[#allocation3 + $0x30] sm:$0xf]
    %v623 = vld [vmem:[#allocation3 + $0x34] sm:$0xf]
    %v624 = vld [vmem:[#allocation3 + $0x38] sm:$0xf]
    %v625 = vld [vmem:[#allocation3 + $0x3c] sm:$0xf]
    %v626 = vld [vmem:[#allocation3 + $0x40] sm:$0xf]
    %v627 = vld [vmem:[#allocation3 + $0x44] sm:$0xf]
    %v628 = vld [vmem:[#allocation3 + $0x48] sm:$0xf]
    %v629 = vld [vmem:[#allocation3 + $0x4c] sm:$0xf]
    %v630 = vld [vmem:[#allocation3 + $0x50] sm:$0xf]
    %v631 = vld [vmem:[#allocation3 + $0x54] sm:$0xf]
    %v632 = vld [vmem:[#allocation3 + $0x58] sm:$0xf]
    %v633 = vld [vmem:[#allocation3 + $0x5c] sm:$0xf]
    %v634 = vld [vmem:[#allocation3 + $0x60] sm:$0xf]
    %v635 = vld [vmem:[#allocation3 + $0x64] sm:$0xf]
    %v636 = vld [vmem:[#allocation3 + $0x68] sm:$0xf]
    %v637 = vld [vmem:[#allocation3 + $0x6c] sm:$0xf]
    %v638 = vld [vmem:[#allocation3 + $0x70] sm:$0xf]
    %v639 = vld [vmem:[#allocation3 + $0x74] sm:$0xf]
    %v640 = vld [vmem:[#allocation3 + $0x78] sm:$0xf]
    %v641 = vld [vmem:[#allocation3 + $0x7c] sm:$0xf]
    %v642 = vld [vmem:[#allocation3 + $0x80] sm:$0xf]
    %v643 = vld [vmem:[#allocation3 + $0x84] sm:$0xf]
    %v644 = vld [vmem:[#allocation3 + $0x88] sm:$0xf]
    %v645 = vld [vmem:[#allocation3 + $0x8c] sm:$0xf]
    %v646 = vld [vmem:[#allocation3 + $0x90] sm:$0xf]
    %v647 = vld [vmem:[#allocation3 + $0x94] sm:$0xf]
    %v648 = vld [vmem:[#allocation3 + $0x98] sm:$0xf]
    %v649 = vld [vmem:[#allocation3 + $0x9c] sm:$0xf]
    %v650 = vld [vmem:[#allocation3 + $0xa0] sm:$0xf]
    %v651 = vld [vmem:[#allocation3 + $0xa4] sm:$0xf]
    %v652 = vld [vmem:[#allocation3 + $0xa8] sm:$0xf]
    %v653 = vld [vmem:[#allocation3 + $0xac] sm:$0xf]
    %v654 = vld [vmem:[#allocation3 + $0xb0] sm:$0xf]
    %v655 = vld [vmem:[#allocation3 + $0xb4] sm:$0xf]
    %v656 = vld [vmem:[#allocation3 + $0xb8] sm:$0xf]
    %v657 = vld [vmem:[#allocation3 + $0xbc] sm:$0xf]
    %v658 = vld [vmem:[#allocation3 + $0xc0] sm:$0xf]
    %v659 = vld [vmem:[#allocation3 + $0xc4] sm:$0xf]
    %v660 = vld [vmem:[#allocation3 + $0xc8] sm:$0xf]
    %v661 = vld [vmem:[#allocation3 + $0xcc] sm:$0xf]
    %v662 = vld [vmem:[#allocation3 + $0xd0] sm:$0xf]
    %v663 = vld [vmem:[#allocation3 + $0xd4] sm:$0xf]
    %v664 = vld [vmem:[#allocation3 + $0xd8] sm:$0xf]
    %v665 = vld [vmem:[#allocation3 + $0xdc] sm:$0xf]
    %v666 = vld [vmem:[#allocation3 + $0xe0] sm:$0xf]
    %v667 = vld [vmem:[#allocation3 + $0xe4] sm:$0xf]
    %v668 = vld [vmem:[#allocation3 + $0xe8] sm:$0xf]
    %v669 = vld [vmem:[#allocation3 + $0xec] sm:$0xf]
    %v670 = vld [vmem:[#allocation3 + $0xf0] sm:$0xf]
    %v671 = vld [vmem:[#allocation3 + $0xf4] sm:$0xf]
    %v672 = vld [vmem:[#allocation3 + $0xf8] sm:$0xf]
    %v673 = vld [vmem:[#allocation3 + $0xfc] sm:$0xf]
    %v674 = vld [vmem:[#allocation3 + $0x100] sm:$0xf]
    %v675 = vld [vmem:[#allocation3 + $0x104] sm:$0xf]
    %v676 = vld [vmem:[#allocation3 + $0x108] sm:$0xf]
    %v677 = vld [vmem:[#allocation3 + $0x10c] sm:$0xf]
    %v678 = vld [vmem:[#allocation3 + $0x110] sm:$0xf]
    %v679 = vld [vmem:[#allocation3 + $0x114] sm:$0xf]
    %v680 = vld [vmem:[#allocation3 + $0x118] sm:$0xf]
    %v681 = vld [vmem:[#allocation3 + $0x11c] sm:$0xf]
    %v682 = vld [vmem:[#allocation3 + $0x120] sm:$0xf]
    %v683 = vld [vmem:[#allocation3 + $0x124] sm:$0xf]
    %v684 = vld [vmem:[#allocation3 + $0x128] sm:$0xf]
    %v685 = vld [vmem:[#allocation3 + $0x12c] sm:$0xf]
    %v686 = vld [vmem:[#allocation3 + $0x130] sm:$0xf]
    %v687 = vld [vmem:[#allocation3 + $0x134] sm:$0xf]
    %v688 = vld [vmem:[#allocation3 + $0x138] sm:$0xf]
    %v689 = vld [vmem:[#allocation3 + $0x13c] sm:$0xf]
    %v690 = vld [vmem:[#allocation3 + $0x140] sm:$0xf]
    %v691 = vld [vmem:[#allocation3 + $0x144] sm:$0xf]
    %v692 = vld [vmem:[#allocation3 + $0x148] sm:$0xf]
    %v693 = vld [vmem:[#allocation3 + $0x14c] sm:$0xf]
    %v694 = vld [vmem:[#allocation3 + $0x150] sm:$0xf]
    %v695 = vld [vmem:[#allocation3 + $0x154] sm:$0xf]
    %v696 = vld [vmem:[#allocation3 + $0x158] sm:$0xf]
    %v697 = vld [vmem:[#allocation3 + $0x15c] sm:$0xf]
    %v698 = vld [vmem:[#allocation3 + $0x160] sm:$0xf]
    %v699 = vld [vmem:[#allocation3 + $0x164] sm:$0xf]
    %v700 = vld [vmem:[#allocation3 + $0x168] sm:$0xf]
    %v701 = vld [vmem:[#allocation3 + $0x16c] sm:$0xf]
    %v702 = vld [vmem:[#allocation3 + $0x170] sm:$0xf]
    %v703 = vld [vmem:[#allocation3 + $0x174] sm:$0xf]
    %v704 = vld [vmem:[#allocation3 + $0x178] sm:$0xf]
    %v705 = vld [vmem:[#allocation3 + $0x17c] sm:$0xf]
    %v706 = vld [vmem:[#allocation3 + $0x180] sm:$0xf]
    %v707 = vld [vmem:[#allocation3 + $0x184] sm:$0xf]
    %v708 = vld [vmem:[#allocation3 + $0x188] sm:$0xf]
    %v709 = vld [vmem:[#allocation3 + $0x18c] sm:$0xf]
    %v710 = vld [vmem:[#allocation3 + $0x190] sm:$0xf]
    %v711 = vld [vmem:[#allocation3 + $0x194] sm:$0xf]
    %v712 = vld [vmem:[#allocation3 + $0x198] sm:$0xf]
    %v713 = vld [vmem:[#allocation3 + $0x19c] sm:$0xf]
    %v714 = vld [vmem:[#allocation3 + $0x1a0] sm:$0xf]
    %v715 = vld [vmem:[#allocation3 + $0x1a4] sm:$0xf]
    %v716 = vld [vmem:[#allocation3 + $0x1a8] sm:$0xf]
    %v717 = vld [vmem:[#allocation3 + $0x1ac] sm:$0xf]
    %v718 = vld [vmem:[#allocation3 + $0x1b0] sm:$0xf]
    %v719 = vld [vmem:[#allocation3 + $0x1b4] sm:$0xf]
    %v720 = vld [vmem:[#allocation3 + $0x1b8] sm:$0xf]
    %v721 = vld [vmem:[#allocation3 + $0x1bc] sm:$0xf]
    %v722 = vld [vmem:[#allocation3 + $0x1c0] sm:$0xf]
    %v723 = vld [vmem:[#allocation3 + $0x1c4] sm:$0xf]
    %v724 = vld [vmem:[#allocation3 + $0x1c8] sm:$0xf]
    %v725 = vld [vmem:[#allocation3 + $0x1cc] sm:$0xf]
    %v726 = vld [vmem:[#allocation3 + $0x1d0] sm:$0xf]
    %v727 = vld [vmem:[#allocation3 + $0x1d4] sm:$0xf]
    %v728 = vld [vmem:[#allocation3 + $0x1d8] sm:$0xf]
    %v729 = vld [vmem:[#allocation3 + $0x1dc] sm:$0xf]
    %v730 = vld [vmem:[#allocation3 + $0x1e0] sm:$0xf]
    %v731 = vld [vmem:[#allocation3 + $0x1e4] sm:$0xf]
    %v732 = vld [vmem:[#allocation3 + $0x1e8] sm:$0xf]
    %v733 = vld [vmem:[#allocation3 + $0x1ec] sm:$0xf]
    %v734 = vld [vmem:[#allocation3 + $0x1f0] sm:$0xf]
    %v735 = vld [vmem:[#allocation3 + $0x1f4] sm:$0xf]
    %v736 = vld [vmem:[#allocation3 + $0x1f8] sm:$0xf]
    %v737 = vld [vmem:[#allocation3 + $0x1fc] sm:$0xf]
    %v738 = vld [vmem:[#allocation3 + $0x200] sm:$0xf]
    %v739 = vld [vmem:[#allocation3 + $0x204] sm:$0xf]
    %v740 = vld [vmem:[#allocation3 + $0x208] sm:$0xf]
    %v741 = vld [vmem:[#allocation3 + $0x20c] sm:$0xf]
    %v742 = vld [vmem:[#allocation3 + $0x210] sm:$0xf]
    %v743 = vld [vmem:[#allocation3 + $0x214] sm:$0xf]
    %v744 = vld [vmem:[#allocation3 + $0x218] sm:$0xf]
    %v745 = vld [vmem:[#allocation3 + $0x21c] sm:$0xf]
    %v746 = vld [vmem:[#allocation3 + $0x220] sm:$0xf]
    %v747 = vld [vmem:[#allocation3 + $0x224] sm:$0xf]
    %v748 = vld [vmem:[#allocation3 + $0x228] sm:$0xf]
    %v749 = vld [vmem:[#allocation3 + $0x22c] sm:$0xf]
    %v750 = vld [vmem:[#allocation3 + $0x230] sm:$0xf]
    %v751 = vld [vmem:[#allocation3 + $0x234] sm:$0xf]
    %v752 = vld [vmem:[#allocation3 + $0x238] sm:$0xf]
    %v753 = vld [vmem:[#allocation3 + $0x23c] sm:$0xf]
    %v754 = vld [vmem:[#allocation3 + $0x240] sm:$0xf]
    %v755 = vld [vmem:[#allocation3 + $0x244] sm:$0xf]
    %v756 = vld [vmem:[#allocation3 + $0x248] sm:$0xf]
    %v757 = vld [vmem:[#allocation3 + $0x24c] sm:$0xf]
    %v758 = vld [vmem:[#allocation3 + $0x250] sm:$0xf]
    %v759 = vld [vmem:[#allocation3 + $0x254] sm:$0xf]
    %v760 = vld [vmem:[#allocation3 + $0x258] sm:$0xf]
    %v761 = vld [vmem:[#allocation3 + $0x25c] sm:$0xf]
    %v762 = vld [vmem:[#allocation3 + $0x260] sm:$0xf]
    %v763 = vld [vmem:[#allocation3 + $0x264] sm:$0xf]
    %v764 = vld [vmem:[#allocation3 + $0x268] sm:$0xf]
    %v765 = vld [vmem:[#allocation3 + $0x26c] sm:$0xf]
    %v766 = vld [vmem:[#allocation3 + $0x270] sm:$0xf]
    %v767 = vld [vmem:[#allocation3 + $0x274] sm:$0xf]
    %v768 = vld [vmem:[#allocation3 + $0x278] sm:$0xf]
    %v769 = vld [vmem:[#allocation3 + $0x27c] sm:$0xf]
    %v770 = vld [vmem:[#allocation3 + $0x280] sm:$0xf]
    %v771 = vld [vmem:[#allocation3 + $0x284] sm:$0xf]
    %v772 = vld [vmem:[#allocation3 + $0x288] sm:$0xf]
    %v773 = vld [vmem:[#allocation3 + $0x28c] sm:$0xf]
    %v774 = vld [vmem:[#allocation3 + $0x290] sm:$0xf]
    %v775 = vld [vmem:[#allocation3 + $0x294] sm:$0xf]
    %v776 = vld [vmem:[#allocation3 + $0x298] sm:$0xf]
    %v777 = vld [vmem:[#allocation3 + $0x29c] sm:$0xf]
    %v778 = vld [vmem:[#allocation3 + $0x2a0] sm:$0xf]
    %v779 = vld [vmem:[#allocation3 + $0x2a4] sm:$0xf]
    %v780 = vld [vmem:[#allocation3 + $0x2a8] sm:$0xf]
    %v781 = vld [vmem:[#allocation3 + $0x2ac] sm:$0xf]
    %v782 = vld [vmem:[#allocation3 + $0x2b0] sm:$0xf]
    %v783 = vld [vmem:[#allocation3 + $0x2b4] sm:$0xf]
    %v784 = vld [vmem:[#allocation3 + $0x2b8] sm:$0xf]
    %v785 = vld [vmem:[#allocation3 + $0x2bc] sm:$0xf]
    %v786 = vld [vmem:[#allocation3 + $0x2c0] sm:$0xf]
    %v787 = vld [vmem:[#allocation3 + $0x2c4] sm:$0xf]
    %v788 = vld [vmem:[#allocation3 + $0x2c8] sm:$0xf]
    %v789 = vld [vmem:[#allocation3 + $0x2cc] sm:$0xf]
    %v790 = vld [vmem:[#allocation3 + $0x2d0] sm:$0xf]
    %v791 = vld [vmem:[#allocation3 + $0x2d4] sm:$0xf]
    %v792 = vld [vmem:[#allocation3 + $0x2d8] sm:$0xf]
    %v793 = vld [vmem:[#allocation3 + $0x2dc] sm:$0xf]
    %v794 = vld [vmem:[#allocation3 + $0x2e0] sm:$0xf]
    %v795 = vld [vmem:[#allocation3 + $0x2e4] sm:$0xf]
    %v796 = vld [vmem:[#allocation3 + $0x2e8] sm:$0xf]
    %v797 = vld [vmem:[#allocation3 + $0x2ec] sm:$0xf]
    %v798 = vld [vmem:[#allocation3 + $0x2f0] sm:$0xf]
    %v799 = vld [vmem:[#allocation3 + $0x2f4] sm:$0xf]
    %v800 = vld [vmem:[#allocation3 + $0x2f8] sm:$0xf]
    %v801 = vld [vmem:[#allocation3 + $0x2fc] sm:$0xf]
    %v802 = vld [vmem:[#allocation3 + $0x300] sm:$0xf]
    %v803 = vld [vmem:[#allocation3 + $0x304] sm:$0xf]
    %v804 = vld [vmem:[#allocation3 + $0x308] sm:$0xf]
    %v805 = vld [vmem:[#allocation3 + $0x30c] sm:$0xf]
    %v806 = vld [vmem:[#allocation3 + $0x310] sm:$0xf]
    %v807 = vld [vmem:[#allocation3 + $0x314] sm:$0xf]
    %v808 = vld [vmem:[#allocation3 + $0x318] sm:$0xf]
    %v809 = vld [vmem:[#allocation3 + $0x31c] sm:$0xf]
    %v810 = vld [vmem:[#allocation3 + $0x320] sm:$0xf]
    %v811 = vld [vmem:[#allocation3 + $0x324] sm:$0xf]
    %v812 = vld [vmem:[#allocation3 + $0x328] sm:$0xf]
    %v813 = vld [vmem:[#allocation3 + $0x32c] sm:$0xf]
    %v814 = vld [vmem:[#allocation3 + $0x330] sm:$0xf]
    %v815 = vld [vmem:[#allocation3 + $0x334] sm:$0xf]
    %v816 = vld [vmem:[#allocation3 + $0x338] sm:$0xf]
    %v817 = vld [vmem:[#allocation3 + $0x33c] sm:$0xf]
    %v818 = vld [vmem:[#allocation3 + $0x340] sm:$0xf]
    %v819 = vld [vmem:[#allocation3 + $0x344] sm:$0xf]
    %v820 = vld [vmem:[#allocation3 + $0x348] sm:$0xf]
    %v821 = vld [vmem:[#allocation3 + $0x34c] sm:$0xf]
    %v822 = vld [vmem:[#allocation3 + $0x350] sm:$0xf]
    %v823 = vld [vmem:[#allocation3 + $0x354] sm:$0xf]
    %v824 = vld [vmem:[#allocation3 + $0x358] sm:$0xf]
    %v825 = vld [vmem:[#allocation3 + $0x35c] sm:$0xf]
    %v826 = vld [vmem:[#allocation3 + $0x360] sm:$0xf]
    %v827 = vld [vmem:[#allocation3 + $0x364] sm:$0xf]
    %v828 = vld [vmem:[#allocation3 + $0x368] sm:$0xf]
    %v829 = vld [vmem:[#allocation3 + $0x36c] sm:$0xf]
    %v830 = vld [vmem:[#allocation3 + $0x370] sm:$0xf]
    %v831 = vld [vmem:[#allocation3 + $0x374] sm:$0xf]
    %v832 = vld [vmem:[#allocation3 + $0x378] sm:$0xf]
    %v833 = vld [vmem:[#allocation3 + $0x37c] sm:$0xf]
    %v834 = vld [vmem:[#allocation3 + $0x380] sm:$0xf]
    %v835 = vld [vmem:[#allocation3 + $0x384] sm:$0xf]
    %v836 = vld [vmem:[#allocation3 + $0x388] sm:$0xf]
    %v837 = vld [vmem:[#allocation3 + $0x38c] sm:$0xf]
    %v838 = vld [vmem:[#allocation3 + $0x390] sm:$0xf]
    %v839 = vld [vmem:[#allocation3 + $0x394] sm:$0xf]
    %v840 = vld [vmem:[#allocation3 + $0x398] sm:$0xf]
    %v841 = vld [vmem:[#allocation3 + $0x39c] sm:$0xf]
    %v842 = vld [vmem:[#allocation3 + $0x3a0] sm:$0xf]
    %v843 = vld [vmem:[#allocation3 + $0x3a4] sm:$0xf]
    %v844 = vld [vmem:[#allocation3 + $0x3a8] sm:$0xf]
    %v845 = vld [vmem:[#allocation3 + $0x3ac] sm:$0xf]
    %v846 = vld [vmem:[#allocation3 + $0x3b0] sm:$0xf]
    %v847 = vld [vmem:[#allocation3 + $0x3b4] sm:$0xf]
    %v848 = vld [vmem:[#allocation3 + $0x3b8] sm:$0xf]
    %v849 = vld [vmem:[#allocation3 + $0x3bc] sm:$0xf]
    %v850 = vld [vmem:[#allocation3 + $0x3c0] sm:$0xf]
    %v851 = vld [vmem:[#allocation3 + $0x3c4] sm:$0xf]
    %v852 = vld [vmem:[#allocation3 + $0x3c8] sm:$0xf]
    %v853 = vld [vmem:[#allocation3 + $0x3cc] sm:$0xf]
    %v854 = vld [vmem:[#allocation3 + $0x3d0] sm:$0xf]
    %v855 = vld [vmem:[#allocation3 + $0x3d4] sm:$0xf]
    %v856 = vld [vmem:[#allocation3 + $0x3d8] sm:$0xf]
    %v857 = vld [vmem:[#allocation3 + $0x3dc] sm:$0xf]
    %v858 = vld [vmem:[#allocation3 + $0x3e0] sm:$0xf]
    %v859 = vld [vmem:[#allocation3 + $0x3e4] sm:$0xf]
    %v860 = vld [vmem:[#allocation3 + $0x3e8] sm:$0xf]
    %v861 = vld [vmem:[#allocation3 + $0x3ec] sm:$0xf]
    %v862 = vld [vmem:[#allocation3 + $0x3f0] sm:$0xf]
    %v863 = vld [vmem:[#allocation3 + $0x3f4] sm:$0xf]
    %v864 = vld [vmem:[#allocation3 + $0x3f8] sm:$0xf]
    %v865 = vld [vmem:[#allocation3 + $0x3fc] sm:$0xf]
    %v866 = vld [vmem:[#allocation3 + $0x400] sm:$0xf]
    %v867 = vld [vmem:[#allocation3 + $0x404] sm:$0xf]
    %v868 = vld [vmem:[#allocation3 + $0x408] sm:$0xf]
    %v869 = vld [vmem:[#allocation3 + $0x40c] sm:$0xf]
    %v870 = vld [vmem:[#allocation3 + $0x410] sm:$0xf]
    %v871 = vld [vmem:[#allocation3 + $0x414] sm:$0xf]
    %v872 = vld [vmem:[#allocation3 + $0x418] sm:$0xf]
    %v873 = vld [vmem:[#allocation3 + $0x41c] sm:$0xf]
    %v874 = vld [vmem:[#allocation3 + $0x420] sm:$0xf]
    %v875 = vld [vmem:[#allocation3 + $0x424] sm:$0xf]
    %v876 = vld [vmem:[#allocation3 + $0x428] sm:$0xf]
    %v877 = vld [vmem:[#allocation3 + $0x42c] sm:$0xf]
    %v878 = vld [vmem:[#allocation3 + $0x430] sm:$0xf]
    %v879 = vld [vmem:[#allocation3 + $0x434] sm:$0xf]
    %v880 = vld [vmem:[#allocation3 + $0x438] sm:$0xf]
    %v881 = vld [vmem:[#allocation3 + $0x43c] sm:$0xf]
    %v882 = vld [vmem:[#allocation3 + $0x440] sm:$0xf]
    %v883 = vld [vmem:[#allocation3 + $0x444] sm:$0xf]
    %v884 = vld [vmem:[#allocation3 + $0x448] sm:$0xf]
    %v885 = vld [vmem:[#allocation3 + $0x44c] sm:$0xf]
    %v886 = vld [vmem:[#allocation3 + $0x450] sm:$0xf]
    %v887 = vld [vmem:[#allocation3 + $0x454] sm:$0xf]
    %v888 = vld [vmem:[#allocation3 + $0x458] sm:$0xf]
    %v889 = vld [vmem:[#allocation3 + $0x45c] sm:$0xf]
    %v890 = vld [vmem:[#allocation3 + $0x460] sm:$0xf]
    %v891 = vld [vmem:[#allocation3 + $0x464] sm:$0xf]
    %v892 = vld [vmem:[#allocation3 + $0x468] sm:$0xf]
    %v893 = vld [vmem:[#allocation3 + $0x46c] sm:$0xf]
    %v894 = vld [vmem:[#allocation3 + $0x470] sm:$0xf]
    %v895 = vld [vmem:[#allocation3 + $0x474] sm:$0xf]
    %v896 = vld [vmem:[#allocation3 + $0x478] sm:$0xf]
    %v897 = vld [vmem:[#allocation3 + $0x47c] sm:$0xf]
    %v898 = vld [vmem:[#allocation3 + $0x480] sm:$0xf]
    %v899 = vld [vmem:[#allocation3 + $0x484] sm:$0xf]
    %v900 = vld [vmem:[#allocation3 + $0x488] sm:$0xf]
    %v901 = vld [vmem:[#allocation3 + $0x48c] sm:$0xf]
    %v902 = vld [vmem:[#allocation3 + $0x490] sm:$0xf]
    %v903 = vld [vmem:[#allocation3 + $0x494] sm:$0xf]
    %v904 = vld [vmem:[#allocation3 + $0x498] sm:$0xf]
    %v905 = vld [vmem:[#allocation3 + $0x49c] sm:$0xf]
    %v906 = vld [vmem:[#allocation3 + $0x4a0] sm:$0xf]
    %v907 = vld [vmem:[#allocation3 + $0x4a4] sm:$0xf]
    %v908 = vld [vmem:[#allocation3 + $0x4a8] sm:$0xf]
    %v909 = vld [vmem:[#allocation3 + $0x4ac] sm:$0xf]
    %v910 = vld [vmem:[#allocation3 + $0x4b0] sm:$0xf]
    %v911 = vld [vmem:[#allocation3 + $0x4b4] sm:$0xf]
    %v912 = vld [vmem:[#allocation3 + $0x4b8] sm:$0xf]
    %v913 = vld [vmem:[#allocation3 + $0x4bc] sm:$0xf]
    %v914 = vld [vmem:[#allocation3 + $0x4c0] sm:$0xf]
    %v915 = vld [vmem:[#allocation3 + $0x4c4] sm:$0xf]
    %v916 = vld [vmem:[#allocation3 + $0x4c8] sm:$0xf]
    %v917 = vld [vmem:[#allocation3 + $0x4cc] sm:$0xf]
    %v918 = vld [vmem:[#allocation3 + $0x4d0] sm:$0xf]
    %v919 = vld [vmem:[#allocation3 + $0x4d4] sm:$0xf]
    %v920 = vld [vmem:[#allocation3 + $0x4d8] sm:$0xf]
    %v921 = vld [vmem:[#allocation3 + $0x4dc] sm:$0xf]
    %v922 = vld [vmem:[#allocation3 + $0x4e0] sm:$0xf]
    %v923 = vld [vmem:[#allocation3 + $0x4e4] sm:$0xf]
    %v924 = vld [vmem:[#allocation3 + $0x4e8] sm:$0xf]
    %v925 = vld [vmem:[#allocation3 + $0x4ec] sm:$0xf]
    %v926 = vld [vmem:[#allocation3 + $0x4f0] sm:$0xf]
    %v927 = vld [vmem:[#allocation3 + $0x4f4] sm:$0xf]
    %v928 = vld [vmem:[#allocation3 + $0x4f8] sm:$0xf]
    %v929 = vld [vmem:[#allocation3 + $0x4fc] sm:$0xf]
    %v930 = vld [vmem:[#allocation3 + $0x500] sm:$0xf]
    %v931 = vld [vmem:[#allocation3 + $0x504] sm:$0xf]
    %v932 = vld [vmem:[#allocation3 + $0x508] sm:$0xf]
    %v933 = vld [vmem:[#allocation3 + $0x50c] sm:$0xf]
    %v934 = vld [vmem:[#allocation3 + $0x510] sm:$0xf]
    %v935 = vld [vmem:[#allocation3 + $0x514] sm:$0xf]
    %v936 = vld [vmem:[#allocation3 + $0x518] sm:$0xf]
    %v937 = vld [vmem:[#allocation3 + $0x51c] sm:$0xf]
    %v938 = vld [vmem:[#allocation3 + $0x520] sm:$0xf]
    %v939 = vld [vmem:[#allocation3 + $0x524] sm:$0xf]
    %v940 = vld [vmem:[#allocation3 + $0x528] sm:$0xf]
    %v941 = vld [vmem:[#allocation3 + $0x52c] sm:$0xf]
    %v942 = vld [vmem:[#allocation3 + $0x530] sm:$0xf]
    %v943 = vld [vmem:[#allocation3 + $0x534] sm:$0xf]
    %v944 = vld [vmem:[#allocation3 + $0x538] sm:$0xf]
    %v945 = vld [vmem:[#allocation3 + $0x53c] sm:$0xf]
    %v946 = vld [vmem:[#allocation3 + $0x540] sm:$0xf]
    %v947 = vld [vmem:[#allocation3 + $0x544] sm:$0xf]
    %v948 = vld [vmem:[#allocation3 + $0x548] sm:$0xf]
    %v949 = vld [vmem:[#allocation3 + $0x54c] sm:$0xf]
    %v950 = vld [vmem:[#allocation3 + $0x550] sm:$0xf]
    %v951 = vld [vmem:[#allocation3 + $0x554] sm:$0xf]
    %v952 = vld [vmem:[#allocation3 + $0x558] sm:$0xf]
    %v953 = vld [vmem:[#allocation3 + $0x55c] sm:$0xf]
    %v954 = vld [vmem:[#allocation3 + $0x560] sm:$0xf]
    %v955 = vld [vmem:[#allocation3 + $0x564] sm:$0xf]
    %v956 = vld [vmem:[#allocation3 + $0x568] sm:$0xf]
    %v957 = vld [vmem:[#allocation3 + $0x56c] sm:$0xf]
    %v958 = vld [vmem:[#allocation3 + $0x570] sm:$0xf]
    %v959 = vld [vmem:[#allocation3 + $0x574] sm:$0xf]
    %v960 = vld [vmem:[#allocation3 + $0x578] sm:$0xf]
    %v961 = vld [vmem:[#allocation3 + $0x57c] sm:$0xf]
    %v962 = vld [vmem:[#allocation3 + $0x580] sm:$0xf]
    %v963 = vld [vmem:[#allocation3 + $0x584] sm:$0xf]
    %v964 = vld [vmem:[#allocation3 + $0x588] sm:$0xf]
    %v965 = vld [vmem:[#allocation3 + $0x58c] sm:$0xf]
    %v966 = vld [vmem:[#allocation3 + $0x590] sm:$0xf]
    %v967 = vld [vmem:[#allocation3 + $0x594] sm:$0xf]
    %v968 = vld [vmem:[#allocation3 + $0x598] sm:$0xf]
    %v969 = vld [vmem:[#allocation3 + $0x59c] sm:$0xf]
    %v970 = vld [vmem:[#allocation3 + $0x5a0] sm:$0xf]
    %v971 = vld [vmem:[#allocation3 + $0x5a4] sm:$0xf]
    %v972 = vld [vmem:[#allocation3 + $0x5a8] sm:$0xf]
    %v973 = vld [vmem:[#allocation3 + $0x5ac] sm:$0xf]
    %v974 = vld [vmem:[#allocation3 + $0x5b0] sm:$0xf]
    %v975 = vld [vmem:[#allocation3 + $0x5b4] sm:$0xf]
    %v976 = vld [vmem:[#allocation3 + $0x5b8] sm:$0xf]
    %v977 = vld [vmem:[#allocation3 + $0x5bc] sm:$0xf]
    %v978 = vld [vmem:[#allocation3 + $0x5c0] sm:$0xf]
    %v979 = vld [vmem:[#allocation3 + $0x5c4] sm:$0xf]
    %v980 = vld [vmem:[#allocation3 + $0x5c8] sm:$0xf]
    %v981 = vld [vmem:[#allocation3 + $0x5cc] sm:$0xf]
    %v982 = vld [vmem:[#allocation3 + $0x5d0] sm:$0xf]
    %v983 = vld [vmem:[#allocation3 + $0x5d4] sm:$0xf]
    %v984 = vld [vmem:[#allocation3 + $0x5d8] sm:$0xf]
    %v985 = vld [vmem:[#allocation3 + $0x5dc] sm:$0xf]
    %v986 = vld [vmem:[#allocation3 + $0x5e0] sm:$0xf]
    %v987 = vld [vmem:[#allocation3 + $0x5e4] sm:$0xf]
    %v988 = vld [vmem:[#allocation3 + $0x5e8] sm:$0xf]
    %v989 = vld [vmem:[#allocation3 + $0x5ec] sm:$0xf]
    %v990 = vld [vmem:[#allocation3 + $0x5f0] sm:$0xf]
    %v991 = vld [vmem:[#allocation3 + $0x5f4] sm:$0xf]
    %v992 = vld [vmem:[#allocation3 + $0x5f8] sm:$0xf]
    %v993 = vld [vmem:[#allocation3 + $0x5fc] sm:$0xf]
    %v994 = vld [vmem:[#allocation3 + $0x600] sm:$0xf]
    %v995 = vld [vmem:[#allocation3 + $0x604] sm:$0xf]
    %v996 = vld [vmem:[#allocation3 + $0x608] sm:$0xf]
    %v997 = vld [vmem:[#allocation3 + $0x60c] sm:$0xf]
    %v998 = vld [vmem:[#allocation3 + $0x610] sm:$0xf]
    %v999 = vld [vmem:[#allocation3 + $0x614] sm:$0xf]
    %v1000 = vld [vmem:[#allocation3 + $0x618] sm:$0xf]
    %v1001 = vld [vmem:[#allocation3 + $0x61c] sm:$0xf]
    %v1002 = vld [vmem:[#allocation3 + $0x620] sm:$0xf]
    %v1003 = vld [vmem:[#allocation3 + $0x624] sm:$0xf]
    %v1004 = vld [vmem:[#allocation3 + $0x628] sm:$0xf]
    %v1005 = vld [vmem:[#allocation3 + $0x62c] sm:$0xf]
    %v1006 = vld [vmem:[#allocation3 + $0x630] sm:$0xf]
    %v1007 = vld [vmem:[#allocation3 + $0x634] sm:$0xf]
    %v1008 = vld [vmem:[#allocation3 + $0x638] sm:$0xf]
    %v1009 = vld [vmem:[#allocation3 + $0x63c] sm:$0xf]
    %v1010 = vld [vmem:[#allocation3 + $0x640] sm:$0xf]
    %v1011 = vld [vmem:[#allocation3 + $0x644] sm:$0xf]
    %v1012 = vld [vmem:[#allocation3 + $0x648] sm:$0xf]
    %v1013 = vld [vmem:[#allocation3 + $0x64c] sm:$0xf]
    %v1014 = vld [vmem:[#allocation3 + $0x650] sm:$0xf]
    %v1015 = vld [vmem:[#allocation3 + $0x654] sm:$0xf]
    %v1016 = vld [vmem:[#allocation3 + $0x658] sm:$0xf]
    %v1017 = vld [vmem:[#allocation3 + $0x65c] sm:$0xf]
    %v1018 = vld [vmem:[#allocation3 + $0x660] sm:$0xf]
    %v1019 = vld [vmem:[#allocation3 + $0x664] sm:$0xf]
    %v1020 = vld [vmem:[#allocation3 + $0x668] sm:$0xf]
    %v1021 = vld [vmem:[#allocation3 + $0x66c] sm:$0xf]
    %v1022 = vld [vmem:[#allocation3 + $0x670] sm:$0xf]
    %v1023 = vld [vmem:[#allocation3 + $0x674] sm:$0xf]
    %v1024 = vld [vmem:[#allocation3 + $0x678] sm:$0xf]
    %v1025 = vld [vmem:[#allocation3 + $0x67c] sm:$0xf]
    %v1026 = vld [vmem:[#allocation3 + $0x680] sm:$0xf]
    %v1027 = vld [vmem:[#allocation3 + $0x684] sm:$0xf]
    %v1028 = vld [vmem:[#allocation3 + $0x688] sm:$0xf]
    %v1029 = vld [vmem:[#allocation3 + $0x68c] sm:$0xf]
    %v1030 = vld [vmem:[#allocation3 + $0x690] sm:$0xf]
    %v1031 = vld [vmem:[#allocation3 + $0x694] sm:$0xf]
    %v1032 = vld [vmem:[#allocation3 + $0x698] sm:$0xf]
    %v1033 = vld [vmem:[#allocation3 + $0x69c] sm:$0xf]
    %v1034 = vld [vmem:[#allocation3 + $0x6a0] sm:$0xf]
    %v1035 = vld [vmem:[#allocation3 + $0x6a4] sm:$0xf]
    %v1036 = vld [vmem:[#allocation3 + $0x6a8] sm:$0xf]
    %v1037 = vld [vmem:[#allocation3 + $0x6ac] sm:$0xf]
    %v1038 = vld [vmem:[#allocation3 + $0x6b0] sm:$0xf]
    %v1039 = vld [vmem:[#allocation3 + $0x6b4] sm:$0xf]
    %v1040 = vld [vmem:[#allocation3 + $0x6b8] sm:$0xf]
    %v1041 = vld [vmem:[#allocation3 + $0x6bc] sm:$0xf]
    %v1042 = vld [vmem:[#allocation3 + $0x6c0] sm:$0xf]
    %v1043 = vld [vmem:[#allocation3 + $0x6c4] sm:$0xf]
    %v1044 = vld [vmem:[#allocation3 + $0x6c8] sm:$0xf]
    %v1045 = vld [vmem:[#allocation3 + $0x6cc] sm:$0xf]
    %v1046 = vld [vmem:[#allocation3 + $0x6d0] sm:$0xf]
    %v1047 = vld [vmem:[#allocation3 + $0x6d4] sm:$0xf]
    %v1048 = vld [vmem:[#allocation3 + $0x6d8] sm:$0xf]
    %v1049 = vld [vmem:[#allocation3 + $0x6dc] sm:$0xf]
    %v1050 = vld [vmem:[#allocation3 + $0x6e0] sm:$0xf]
    %v1051 = vld [vmem:[#allocation3 + $0x6e4] sm:$0xf]
    %v1052 = vld [vmem:[#allocation3 + $0x6e8] sm:$0xf]
    %v1053 = vld [vmem:[#allocation3 + $0x6ec] sm:$0xf]
    %v1054 = vld [vmem:[#allocation3 + $0x6f0] sm:$0xf]
    %v1055 = vld [vmem:[#allocation3 + $0x6f4] sm:$0xf]
    %v1056 = vld [vmem:[#allocation3 + $0x6f8] sm:$0xf]
    %v1057 = vld [vmem:[#allocation3 + $0x6fc] sm:$0xf]
    %v1058 = vld [vmem:[#allocation3 + $0x700] sm:$0xf]
    %v1059 = vld [vmem:[#allocation3 + $0x704] sm:$0xf]
    %v1060 = vld [vmem:[#allocation3 + $0x708] sm:$0xf]
    %v1061 = vld [vmem:[#allocation3 + $0x70c] sm:$0xf]
    %v1062 = vld [vmem:[#allocation3 + $0x710] sm:$0xf]
    %v1063 = vld [vmem:[#allocation3 + $0x714] sm:$0xf]
    %v1064 = vld [vmem:[#allocation3 + $0x718] sm:$0xf]
    %v1065 = vld [vmem:[#allocation3 + $0x71c] sm:$0xf]
    %v1066 = vld [vmem:[#allocation3 + $0x720] sm:$0xf]
    %v1067 = vld [vmem:[#allocation3 + $0x724] sm:$0xf]
    %v1068 = vld [vmem:[#allocation3 + $0x728] sm:$0xf]
    %v1069 = vld [vmem:[#allocation3 + $0x72c] sm:$0xf]
    %v1070 = vld [vmem:[#allocation3 + $0x730] sm:$0xf]
    %v1071 = vld [vmem:[#allocation3 + $0x734] sm:$0xf]
    %v1072 = vld [vmem:[#allocation3 + $0x738] sm:$0xf]
    %v1073 = vld [vmem:[#allocation3 + $0x73c] sm:$0xf]
    %v1074 = vld [vmem:[#allocation3 + $0x740] sm:$0xf]
    %v1075 = vld [vmem:[#allocation3 + $0x744] sm:$0xf]
    %v1076 = vld [vmem:[#allocation3 + $0x748] sm:$0xf]
    %v1077 = vld [vmem:[#allocation3 + $0x74c] sm:$0xf]
    %v1078 = vld [vmem:[#allocation3 + $0x750] sm:$0xf]
    %v1079 = vld [vmem:[#allocation3 + $0x754] sm:$0xf]
    %v1080 = vld [vmem:[#allocation3 + $0x758] sm:$0xf]
    %v1081 = vld [vmem:[#allocation3 + $0x75c] sm:$0xf]
    %v1082 = vld [vmem:[#allocation3 + $0x760] sm:$0xf]
    %v1083 = vld [vmem:[#allocation3 + $0x764] sm:$0xf]
    %v1084 = vld [vmem:[#allocation3 + $0x768] sm:$0xf]
    %v1085 = vld [vmem:[#allocation3 + $0x76c] sm:$0xf]
    %v1086 = vld [vmem:[#allocation3 + $0x770] sm:$0xf]
    %v1087 = vld [vmem:[#allocation3 + $0x774] sm:$0xf]
    %v1088 = vld [vmem:[#allocation3 + $0x778] sm:$0xf]
    %v1089 = vld [vmem:[#allocation3 + $0x77c] sm:$0xf]
    %v1090 = vld [vmem:[#allocation3 + $0x780] sm:$0xf]
    %v1091 = vld [vmem:[#allocation3 + $0x784] sm:$0xf]
    %v1092 = vld [vmem:[#allocation3 + $0x788] sm:$0xf]
    %v1093 = vld [vmem:[#allocation3 + $0x78c] sm:$0xf]
    %v1094 = vld [vmem:[#allocation3 + $0x790] sm:$0xf]
    %v1095 = vld [vmem:[#allocation3 + $0x794] sm:$0xf]
    %v1096 = vld [vmem:[#allocation3 + $0x798] sm:$0xf]
    %v1097 = vld [vmem:[#allocation3 + $0x79c] sm:$0xf]
    %v1098 = vld [vmem:[#allocation3 + $0x7a0] sm:$0xf]
    %v1099 = vld [vmem:[#allocation3 + $0x7a4] sm:$0xf]
    %v1100 = vld [vmem:[#allocation3 + $0x7a8] sm:$0xf]
    %v1101 = vld [vmem:[#allocation3 + $0x7ac] sm:$0xf]
    %v1102 = vld [vmem:[#allocation3 + $0x7b0] sm:$0xf]
    %v1103 = vld [vmem:[#allocation3 + $0x7b4] sm:$0xf]
    %v1104 = vld [vmem:[#allocation3 + $0x7b8] sm:$0xf]
    %v1105 = vld [vmem:[#allocation3 + $0x7bc] sm:$0xf]
    %v1106 = vld [vmem:[#allocation3 + $0x7c0] sm:$0xf]
    %v1107 = vld [vmem:[#allocation3 + $0x7c4] sm:$0xf]
    %v1108 = vld [vmem:[#allocation3 + $0x7c8] sm:$0xf]
    %v1109 = vld [vmem:[#allocation3 + $0x7cc] sm:$0xf]
    %v1110 = vld [vmem:[#allocation3 + $0x7d0] sm:$0xf]
    %v1111 = vld [vmem:[#allocation3 + $0x7d4] sm:$0xf]
    %v1112 = vld [vmem:[#allocation3 + $0x7d8] sm:$0xf]
    %v1113 = vld [vmem:[#allocation3 + $0x7dc] sm:$0xf]
    %v1114 = vld [vmem:[#allocation3 + $0x7e0] sm:$0xf]
    %v1115 = vld [vmem:[#allocation3 + $0x7e4] sm:$0xf]
    %v1116 = vld [vmem:[#allocation3 + $0x7e8] sm:$0xf]
    %v1117 = vld [vmem:[#allocation3 + $0x7ec] sm:$0xf]
    %v1118 = vld [vmem:[#allocation3 + $0x7f0] sm:$0xf]
    %v1119 = vld [vmem:[#allocation3 + $0x7f4] sm:$0xf]
    %v1120 = vld [vmem:[#allocation3 + $0x7f8] sm:$0xf]
    %v1121 = vld [vmem:[#allocation3 + $0x7fc] sm:$0xf]
    %v1634 = vunpack.c.l.b16 %v610
    %v1635 = vunpack.c.l.b16 %v611
    %v1636 = vunpack.c.l.b16 %v612
    %v1637 = vunpack.c.l.b16 %v613
    %v1638 = vunpack.c.l.b16 %v614
    %v1639 = vunpack.c.l.b16 %v615
    %v1640 = vunpack.c.l.b16 %v616
    %v1641 = vunpack.c.l.b16 %v617
    %v1642 = vunpack.c.l.b16 %v618
    %v1643 = vunpack.c.l.b16 %v619
    %v1644 = vunpack.c.l.b16 %v620
    %v1645 = vunpack.c.l.b16 %v621
    %v1646 = vunpack.c.l.b16 %v622
    %v1647 = vunpack.c.l.b16 %v623
    %v1648 = vunpack.c.l.b16 %v624
    %v1649 = vunpack.c.l.b16 %v625
    %v1650 = vunpack.c.l.b16 %v626
    %v1651 = vunpack.c.l.b16 %v627
    %v1652 = vunpack.c.l.b16 %v628
    %v1653 = vunpack.c.l.b16 %v629
    %v1654 = vunpack.c.l.b16 %v630
    %v1655 = vunpack.c.l.b16 %v631
    %v1656 = vunpack.c.l.b16 %v632
    %v1657 = vunpack.c.l.b16 %v633
    %v1658 = vunpack.c.l.b16 %v634
    %v1659 = vunpack.c.l.b16 %v635
    %v1660 = vunpack.c.l.b16 %v636
    %v1661 = vunpack.c.l.b16 %v637
    %v1662 = vunpack.c.l.b16 %v638
    %v1663 = vunpack.c.l.b16 %v639
    %v1664 = vunpack.c.l.b16 %v640
    %v1665 = vunpack.c.l.b16 %v641
    %v1666 = vunpack.c.l.b16 %v642
    %v1667 = vunpack.c.l.b16 %v643
    %v1668 = vunpack.c.l.b16 %v644
    %v1669 = vunpack.c.l.b16 %v645
    %v1670 = vunpack.c.l.b16 %v646
    %v1671 = vunpack.c.l.b16 %v647
    %v1672 = vunpack.c.l.b16 %v648
    %v1673 = vunpack.c.l.b16 %v649
    %v1674 = vunpack.c.l.b16 %v650
    %v1675 = vunpack.c.l.b16 %v651
    %v1676 = vunpack.c.l.b16 %v652
    %v1677 = vunpack.c.l.b16 %v653
    %v1678 = vunpack.c.l.b16 %v654
    %v1679 = vunpack.c.l.b16 %v655
    %v1680 = vunpack.c.l.b16 %v656
    %v1681 = vunpack.c.l.b16 %v657
    %v1682 = vunpack.c.l.b16 %v658
    %v1683 = vunpack.c.l.b16 %v659
    %v1684 = vunpack.c.l.b16 %v660
    %v1685 = vunpack.c.l.b16 %v661
    %v1686 = vunpack.c.l.b16 %v662
    %v1687 = vunpack.c.l.b16 %v663
    %v1688 = vunpack.c.l.b16 %v664
    %v1689 = vunpack.c.l.b16 %v665
    %v1690 = vunpack.c.l.b16 %v666
    %v1691 = vunpack.c.l.b16 %v667
    %v1692 = vunpack.c.l.b16 %v668
    %v1693 = vunpack.c.l.b16 %v669
    %v1694 = vunpack.c.l.b16 %v670
    %v1695 = vunpack.c.l.b16 %v671
    %v1696 = vunpack.c.l.b16 %v672
    %v1697 = vunpack.c.l.b16 %v673
    %v1698 = vunpack.c.l.b16 %v674
    %v1699 = vunpack.c.l.b16 %v675
    %v1700 = vunpack.c.l.b16 %v676
    %v1701 = vunpack.c.l.b16 %v677
    %v1702 = vunpack.c.l.b16 %v678
    %v1703 = vunpack.c.l.b16 %v679
    %v1704 = vunpack.c.l.b16 %v680
    %v1705 = vunpack.c.l.b16 %v681
    %v1706 = vunpack.c.l.b16 %v682
    %v1707 = vunpack.c.l.b16 %v683
    %v1708 = vunpack.c.l.b16 %v684
    %v1709 = vunpack.c.l.b16 %v685
    %v1710 = vunpack.c.l.b16 %v686
    %v1711 = vunpack.c.l.b16 %v687
    %v1712 = vunpack.c.l.b16 %v688
    %v1713 = vunpack.c.l.b16 %v689
    %v1714 = vunpack.c.l.b16 %v690
    %v1715 = vunpack.c.l.b16 %v691
    %v1716 = vunpack.c.l.b16 %v692
    %v1717 = vunpack.c.l.b16 %v693
    %v1718 = vunpack.c.l.b16 %v694
    %v1719 = vunpack.c.l.b16 %v695
    %v1720 = vunpack.c.l.b16 %v696
    %v1721 = vunpack.c.l.b16 %v697
    %v1722 = vunpack.c.l.b16 %v698
    %v1723 = vunpack.c.l.b16 %v699
    %v1724 = vunpack.c.l.b16 %v700
    %v1725 = vunpack.c.l.b16 %v701
    %v1726 = vunpack.c.l.b16 %v702
    %v1727 = vunpack.c.l.b16 %v703
    %v1728 = vunpack.c.l.b16 %v704
    %v1729 = vunpack.c.l.b16 %v705
    %v1730 = vunpack.c.l.b16 %v706
    %v1731 = vunpack.c.l.b16 %v707
    %v1732 = vunpack.c.l.b16 %v708
    %v1733 = vunpack.c.l.b16 %v709
    %v1734 = vunpack.c.l.b16 %v710
    %v1735 = vunpack.c.l.b16 %v711
    %v1736 = vunpack.c.l.b16 %v712
    %v1737 = vunpack.c.l.b16 %v713
    %v1738 = vunpack.c.l.b16 %v714
    %v1739 = vunpack.c.l.b16 %v715
    %v1740 = vunpack.c.l.b16 %v716
    %v1741 = vunpack.c.l.b16 %v717
    %v1742 = vunpack.c.l.b16 %v718
    %v1743 = vunpack.c.l.b16 %v719
    %v1744 = vunpack.c.l.b16 %v720
    %v1745 = vunpack.c.l.b16 %v721
    %v1746 = vunpack.c.l.b16 %v722
    %v1747 = vunpack.c.l.b16 %v723
    %v1748 = vunpack.c.l.b16 %v724
    %v1749 = vunpack.c.l.b16 %v725
    %v1750 = vunpack.c.l.b16 %v726
    %v1751 = vunpack.c.l.b16 %v727
    %v1752 = vunpack.c.l.b16 %v728
    %v1753 = vunpack.c.l.b16 %v729
    %v1754 = vunpack.c.l.b16 %v730
    %v1755 = vunpack.c.l.b16 %v731
    %v1756 = vunpack.c.l.b16 %v732
    %v1757 = vunpack.c.l.b16 %v733
    %v1758 = vunpack.c.l.b16 %v734
    %v1759 = vunpack.c.l.b16 %v735
    %v1760 = vunpack.c.l.b16 %v736
    %v1761 = vunpack.c.l.b16 %v737
    %v1762 = vunpack.c.l.b16 %v738
    %v1763 = vunpack.c.l.b16 %v739
    %v1764 = vunpack.c.l.b16 %v740
    %v1765 = vunpack.c.l.b16 %v741
    %v1766 = vunpack.c.l.b16 %v742
    %v1767 = vunpack.c.l.b16 %v743
    %v1768 = vunpack.c.l.b16 %v744
    %v1769 = vunpack.c.l.b16 %v745
    %v1770 = vunpack.c.l.b16 %v746
    %v1771 = vunpack.c.l.b16 %v747
    %v1772 = vunpack.c.l.b16 %v748
    %v1773 = vunpack.c.l.b16 %v749
    %v1774 = vunpack.c.l.b16 %v750
    %v1775 = vunpack.c.l.b16 %v751
    %v1776 = vunpack.c.l.b16 %v752
    %v1777 = vunpack.c.l.b16 %v753
    %v1778 = vunpack.c.l.b16 %v754
    %v1779 = vunpack.c.l.b16 %v755
    %v1780 = vunpack.c.l.b16 %v756
    %v1781 = vunpack.c.l.b16 %v757
    %v1782 = vunpack.c.l.b16 %v758
    %v1783 = vunpack.c.l.b16 %v759
    %v1784 = vunpack.c.l.b16 %v760
    %v1785 = vunpack.c.l.b16 %v761
    %v1786 = vunpack.c.l.b16 %v762
    %v1787 = vunpack.c.l.b16 %v763
    %v1788 = vunpack.c.l.b16 %v764
    %v1789 = vunpack.c.l.b16 %v765
    %v1790 = vunpack.c.l.b16 %v766
    %v1791 = vunpack.c.l.b16 %v767
    %v1792 = vunpack.c.l.b16 %v768
    %v1793 = vunpack.c.l.b16 %v769
    %v1794 = vunpack.c.l.b16 %v770
    %v1795 = vunpack.c.l.b16 %v771
    %v1796 = vunpack.c.l.b16 %v772
    %v1797 = vunpack.c.l.b16 %v773
    %v1798 = vunpack.c.l.b16 %v774
    %v1799 = vunpack.c.l.b16 %v775
    %v1800 = vunpack.c.l.b16 %v776
    %v1801 = vunpack.c.l.b16 %v777
    %v1802 = vunpack.c.l.b16 %v778
    %v1803 = vunpack.c.l.b16 %v779
    %v1804 = vunpack.c.l.b16 %v780
    %v1805 = vunpack.c.l.b16 %v781
    %v1806 = vunpack.c.l.b16 %v782
    %v1807 = vunpack.c.l.b16 %v783
    %v1808 = vunpack.c.l.b16 %v784
    %v1809 = vunpack.c.l.b16 %v785
    %v1810 = vunpack.c.l.b16 %v786
    %v1811 = vunpack.c.l.b16 %v787
    %v1812 = vunpack.c.l.b16 %v788
    %v1813 = vunpack.c.l.b16 %v789
    %v1814 = vunpack.c.l.b16 %v790
    %v1815 = vunpack.c.l.b16 %v791
    %v1816 = vunpack.c.l.b16 %v792
    %v1817 = vunpack.c.l.b16 %v793
    %v1818 = vunpack.c.l.b16 %v794
    %v1819 = vunpack.c.l.b16 %v795
    %v1820 = vunpack.c.l.b16 %v796
    %v1821 = vunpack.c.l.b16 %v797
    %v1822 = vunpack.c.l.b16 %v798
    %v1823 = vunpack.c.l.b16 %v799
    %v1824 = vunpack.c.l.b16 %v800
    %v1825 = vunpack.c.l.b16 %v801
    %v1826 = vunpack.c.l.b16 %v802
    %v1827 = vunpack.c.l.b16 %v803
    %v1828 = vunpack.c.l.b16 %v804
    %v1829 = vunpack.c.l.b16 %v805
    %v1830 = vunpack.c.l.b16 %v806
    %v1831 = vunpack.c.l.b16 %v807
    %v1832 = vunpack.c.l.b16 %v808
    %v1833 = vunpack.c.l.b16 %v809
    %v1834 = vunpack.c.l.b16 %v810
    %v1835 = vunpack.c.l.b16 %v811
    %v1836 = vunpack.c.l.b16 %v812
    %v1837 = vunpack.c.l.b16 %v813
    %v1838 = vunpack.c.l.b16 %v814
    %v1839 = vunpack.c.l.b16 %v815
    %v1840 = vunpack.c.l.b16 %v816
    %v1841 = vunpack.c.l.b16 %v817
    %v1842 = vunpack.c.l.b16 %v818
    %v1843 = vunpack.c.l.b16 %v819
    %v1844 = vunpack.c.l.b16 %v820
    %v1845 = vunpack.c.l.b16 %v821
    %v1846 = vunpack.c.l.b16 %v822
    %v1847 = vunpack.c.l.b16 %v823
    %v1848 = vunpack.c.l.b16 %v824
    %v1849 = vunpack.c.l.b16 %v825
    %v1850 = vunpack.c.l.b16 %v826
    %v1851 = vunpack.c.l.b16 %v827
    %v1852 = vunpack.c.l.b16 %v828
    %v1853 = vunpack.c.l.b16 %v829
    %v1854 = vunpack.c.l.b16 %v830
    %v1855 = vunpack.c.l.b16 %v831
    %v1856 = vunpack.c.l.b16 %v832
    %v1857 = vunpack.c.l.b16 %v833
    %v1858 = vunpack.c.l.b16 %v834
    %v1859 = vunpack.c.l.b16 %v835
    %v1860 = vunpack.c.l.b16 %v836
    %v1861 = vunpack.c.l.b16 %v837
    %v1862 = vunpack.c.l.b16 %v838
    %v1863 = vunpack.c.l.b16 %v839
    %v1864 = vunpack.c.l.b16 %v840
    %v1865 = vunpack.c.l.b16 %v841
    %v1866 = vunpack.c.l.b16 %v842
    %v1867 = vunpack.c.l.b16 %v843
    %v1868 = vunpack.c.l.b16 %v844
    %v1869 = vunpack.c.l.b16 %v845
    %v1870 = vunpack.c.l.b16 %v846
    %v1871 = vunpack.c.l.b16 %v847
    %v1872 = vunpack.c.l.b16 %v848
    %v1873 = vunpack.c.l.b16 %v849
    %v1874 = vunpack.c.l.b16 %v850
    %v1875 = vunpack.c.l.b16 %v851
    %v1876 = vunpack.c.l.b16 %v852
    %v1877 = vunpack.c.l.b16 %v853
    %v1878 = vunpack.c.l.b16 %v854
    %v1879 = vunpack.c.l.b16 %v855
    %v1880 = vunpack.c.l.b16 %v856
    %v1881 = vunpack.c.l.b16 %v857
    %v1882 = vunpack.c.l.b16 %v858
    %v1883 = vunpack.c.l.b16 %v859
    %v1884 = vunpack.c.l.b16 %v860
    %v1885 = vunpack.c.l.b16 %v861
    %v1886 = vunpack.c.l.b16 %v862
    %v1887 = vunpack.c.l.b16 %v863
    %v1888 = vunpack.c.l.b16 %v864
    %v1889 = vunpack.c.l.b16 %v865
    %v1890 = vunpack.c.l.b16 %v866
    %v1891 = vunpack.c.l.b16 %v867
    %v1892 = vunpack.c.l.b16 %v868
    %v1893 = vunpack.c.l.b16 %v869
    %v1894 = vunpack.c.l.b16 %v870
    %v1895 = vunpack.c.l.b16 %v871
    %v1896 = vunpack.c.l.b16 %v872
    %v1897 = vunpack.c.l.b16 %v873
    %v1898 = vunpack.c.l.b16 %v874
    %v1899 = vunpack.c.l.b16 %v875
    %v1900 = vunpack.c.l.b16 %v876
    %v1901 = vunpack.c.l.b16 %v877
    %v1902 = vunpack.c.l.b16 %v878
    %v1903 = vunpack.c.l.b16 %v879
    %v1904 = vunpack.c.l.b16 %v880
    %v1905 = vunpack.c.l.b16 %v881
    %v1906 = vunpack.c.l.b16 %v882
    %v1907 = vunpack.c.l.b16 %v883
    %v1908 = vunpack.c.l.b16 %v884
    %v1909 = vunpack.c.l.b16 %v885
    %v1910 = vunpack.c.l.b16 %v886
    %v1911 = vunpack.c.l.b16 %v887
    %v1912 = vunpack.c.l.b16 %v888
    %v1913 = vunpack.c.l.b16 %v889
    %v1914 = vunpack.c.l.b16 %v890
    %v1915 = vunpack.c.l.b16 %v891
    %v1916 = vunpack.c.l.b16 %v892
    %v1917 = vunpack.c.l.b16 %v893
    %v1918 = vunpack.c.l.b16 %v894
    %v1919 = vunpack.c.l.b16 %v895
    %v1920 = vunpack.c.l.b16 %v896
    %v1921 = vunpack.c.l.b16 %v897
    %v1922 = vunpack.c.l.b16 %v898
    %v1923 = vunpack.c.l.b16 %v899
    %v1924 = vunpack.c.l.b16 %v900
    %v1925 = vunpack.c.l.b16 %v901
    %v1926 = vunpack.c.l.b16 %v902
    %v1927 = vunpack.c.l.b16 %v903
    %v1928 = vunpack.c.l.b16 %v904
    %v1929 = vunpack.c.l.b16 %v905
    %v1930 = vunpack.c.l.b16 %v906
    %v1931 = vunpack.c.l.b16 %v907
    %v1932 = vunpack.c.l.b16 %v908
    %v1933 = vunpack.c.l.b16 %v909
    %v1934 = vunpack.c.l.b16 %v910
    %v1935 = vunpack.c.l.b16 %v911
    %v1936 = vunpack.c.l.b16 %v912
    %v1937 = vunpack.c.l.b16 %v913
    %v1938 = vunpack.c.l.b16 %v914
    %v1939 = vunpack.c.l.b16 %v915
    %v1940 = vunpack.c.l.b16 %v916
    %v1941 = vunpack.c.l.b16 %v917
    %v1942 = vunpack.c.l.b16 %v918
    %v1943 = vunpack.c.l.b16 %v919
    %v1944 = vunpack.c.l.b16 %v920
    %v1945 = vunpack.c.l.b16 %v921
    %v1946 = vunpack.c.l.b16 %v922
    %v1947 = vunpack.c.l.b16 %v923
    %v1948 = vunpack.c.l.b16 %v924
    %v1949 = vunpack.c.l.b16 %v925
    %v1950 = vunpack.c.l.b16 %v926
    %v1951 = vunpack.c.l.b16 %v927
    %v1952 = vunpack.c.l.b16 %v928
    %v1953 = vunpack.c.l.b16 %v929
    %v1954 = vunpack.c.l.b16 %v930
    %v1955 = vunpack.c.l.b16 %v931
    %v1956 = vunpack.c.l.b16 %v932
    %v1957 = vunpack.c.l.b16 %v933
    %v1958 = vunpack.c.l.b16 %v934
    %v1959 = vunpack.c.l.b16 %v935
    %v1960 = vunpack.c.l.b16 %v936
    %v1961 = vunpack.c.l.b16 %v937
    %v1962 = vunpack.c.l.b16 %v938
    %v1963 = vunpack.c.l.b16 %v939
    %v1964 = vunpack.c.l.b16 %v940
    %v1965 = vunpack.c.l.b16 %v941
    %v1966 = vunpack.c.l.b16 %v942
    %v1967 = vunpack.c.l.b16 %v943
    %v1968 = vunpack.c.l.b16 %v944
    %v1969 = vunpack.c.l.b16 %v945
    %v1970 = vunpack.c.l.b16 %v946
    %v1971 = vunpack.c.l.b16 %v947
    %v1972 = vunpack.c.l.b16 %v948
    %v1973 = vunpack.c.l.b16 %v949
    %v1974 = vunpack.c.l.b16 %v950
    %v1975 = vunpack.c.l.b16 %v951
    %v1976 = vunpack.c.l.b16 %v952
    %v1977 = vunpack.c.l.b16 %v953
    %v1978 = vunpack.c.l.b16 %v954
    %v1979 = vunpack.c.l.b16 %v955
    %v1980 = vunpack.c.l.b16 %v956
    %v1981 = vunpack.c.l.b16 %v957
    %v1982 = vunpack.c.l.b16 %v958
    %v1983 = vunpack.c.l.b16 %v959
    %v1984 = vunpack.c.l.b16 %v960
    %v1985 = vunpack.c.l.b16 %v961
    %v1986 = vunpack.c.l.b16 %v962
    %v1987 = vunpack.c.l.b16 %v963
    %v1988 = vunpack.c.l.b16 %v964
    %v1989 = vunpack.c.l.b16 %v965
    %v1990 = vunpack.c.l.b16 %v966
    %v1991 = vunpack.c.l.b16 %v967
    %v1992 = vunpack.c.l.b16 %v968
    %v1993 = vunpack.c.l.b16 %v969
    %v1994 = vunpack.c.l.b16 %v970
    %v1995 = vunpack.c.l.b16 %v971
    %v1996 = vunpack.c.l.b16 %v972
    %v1997 = vunpack.c.l.b16 %v973
    %v1998 = vunpack.c.l.b16 %v974
    %v1999 = vunpack.c.l.b16 %v975
    %v2000 = vunpack.c.l.b16 %v976
    %v2001 = vunpack.c.l.b16 %v977
    %v2002 = vunpack.c.l.b16 %v978
    %v2003 = vunpack.c.l.b16 %v979
    %v2004 = vunpack.c.l.b16 %v980
    %v2005 = vunpack.c.l.b16 %v981
    %v2006 = vunpack.c.l.b16 %v982
    %v2007 = vunpack.c.l.b16 %v983
    %v2008 = vunpack.c.l.b16 %v984
    %v2009 = vunpack.c.l.b16 %v985
    %v2010 = vunpack.c.l.b16 %v986
    %v2011 = vunpack.c.l.b16 %v987
    %v2012 = vunpack.c.l.b16 %v988
    %v2013 = vunpack.c.l.b16 %v989
    %v2014 = vunpack.c.l.b16 %v990
    %v2015 = vunpack.c.l.b16 %v991
    %v2016 = vunpack.c.l.b16 %v992
    %v2017 = vunpack.c.l.b16 %v993
    %v2018 = vunpack.c.l.b16 %v994
    %v2019 = vunpack.c.l.b16 %v995
    %v2020 = vunpack.c.l.b16 %v996
    %v2021 = vunpack.c.l.b16 %v997
    %v2022 = vunpack.c.l.b16 %v998
    %v2023 = vunpack.c.l.b16 %v999
    %v2024 = vunpack.c.l.b16 %v1000
    %v2025 = vunpack.c.l.b16 %v1001
    %v2026 = vunpack.c.l.b16 %v1002
    %v2027 = vunpack.c.l.b16 %v1003
    %v2028 = vunpack.c.l.b16 %v1004
    %v2029 = vunpack.c.l.b16 %v1005
    %v2030 = vunpack.c.l.b16 %v1006
    %v2031 = vunpack.c.l.b16 %v1007
    %v2032 = vunpack.c.l.b16 %v1008
    %v2033 = vunpack.c.l.b16 %v1009
    %v2034 = vunpack.c.l.b16 %v1010
    %v2035 = vunpack.c.l.b16 %v1011
    %v2036 = vunpack.c.l.b16 %v1012
    %v2037 = vunpack.c.l.b16 %v1013
    %v2038 = vunpack.c.l.b16 %v1014
    %v2039 = vunpack.c.l.b16 %v1015
    %v2040 = vunpack.c.l.b16 %v1016
    %v2041 = vunpack.c.l.b16 %v1017
    %v2042 = vunpack.c.l.b16 %v1018
    %v2043 = vunpack.c.l.b16 %v1019
    %v2044 = vunpack.c.l.b16 %v1020
    %v2045 = vunpack.c.l.b16 %v1021
    %v2046 = vunpack.c.l.b16 %v1022
    %v2047 = vunpack.c.l.b16 %v1023
    %v2048 = vunpack.c.l.b16 %v1024
    %v2049 = vunpack.c.l.b16 %v1025
    %v2050 = vunpack.c.l.b16 %v1026
    %v2051 = vunpack.c.l.b16 %v1027
    %v2052 = vunpack.c.l.b16 %v1028
    %v2053 = vunpack.c.l.b16 %v1029
    %v2054 = vunpack.c.l.b16 %v1030
    %v2055 = vunpack.c.l.b16 %v1031
    %v2056 = vunpack.c.l.b16 %v1032
    %v2057 = vunpack.c.l.b16 %v1033
    %v2058 = vunpack.c.l.b16 %v1034
    %v2059 = vunpack.c.l.b16 %v1035
    %v2060 = vunpack.c.l.b16 %v1036
    %v2061 = vunpack.c.l.b16 %v1037
    %v2062 = vunpack.c.l.b16 %v1038
    %v2063 = vunpack.c.l.b16 %v1039
    %v2064 = vunpack.c.l.b16 %v1040
    %v2065 = vunpack.c.l.b16 %v1041
    %v2066 = vunpack.c.l.b16 %v1042
    %v2067 = vunpack.c.l.b16 %v1043
    %v2068 = vunpack.c.l.b16 %v1044
    %v2069 = vunpack.c.l.b16 %v1045
    %v2070 = vunpack.c.l.b16 %v1046
    %v2071 = vunpack.c.l.b16 %v1047
    %v2072 = vunpack.c.l.b16 %v1048
    %v2073 = vunpack.c.l.b16 %v1049
    %v2074 = vunpack.c.l.b16 %v1050
    %v2075 = vunpack.c.l.b16 %v1051
    %v2076 = vunpack.c.l.b16 %v1052
    %v2077 = vunpack.c.l.b16 %v1053
    %v2078 = vunpack.c.l.b16 %v1054
    %v2079 = vunpack.c.l.b16 %v1055
    %v2080 = vunpack.c.l.b16 %v1056
    %v2081 = vunpack.c.l.b16 %v1057
    %v2082 = vunpack.c.l.b16 %v1058
    %v2083 = vunpack.c.l.b16 %v1059
    %v2084 = vunpack.c.l.b16 %v1060
    %v2085 = vunpack.c.l.b16 %v1061
    %v2086 = vunpack.c.l.b16 %v1062
    %v2087 = vunpack.c.l.b16 %v1063
    %v2088 = vunpack.c.l.b16 %v1064
    %v2089 = vunpack.c.l.b16 %v1065
    %v2090 = vunpack.c.l.b16 %v1066
    %v2091 = vunpack.c.l.b16 %v1067
    %v2092 = vunpack.c.l.b16 %v1068
    %v2093 = vunpack.c.l.b16 %v1069
    %v2094 = vunpack.c.l.b16 %v1070
    %v2095 = vunpack.c.l.b16 %v1071
    %v2096 = vunpack.c.l.b16 %v1072
    %v2097 = vunpack.c.l.b16 %v1073
    %v2098 = vunpack.c.l.b16 %v1074
    %v2099 = vunpack.c.l.b16 %v1075
    %v2100 = vunpack.c.l.b16 %v1076
    %v2101 = vunpack.c.l.b16 %v1077
    %v2102 = vunpack.c.l.b16 %v1078
    %v2103 = vunpack.c.l.b16 %v1079
    %v2104 = vunpack.c.l.b16 %v1080
    %v2105 = vunpack.c.l.b16 %v1081
    %v2106 = vunpack.c.l.b16 %v1082
    %v2107 = vunpack.c.l.b16 %v1083
    %v2108 = vunpack.c.l.b16 %v1084
    %v2109 = vunpack.c.l.b16 %v1085
    %v2110 = vunpack.c.l.b16 %v1086
    %v2111 = vunpack.c.l.b16 %v1087
    %v2112 = vunpack.c.l.b16 %v1088
    %v2113 = vunpack.c.l.b16 %v1089
    %v2114 = vunpack.c.l.b16 %v1090
    %v2115 = vunpack.c.l.b16 %v1091
    %v2116 = vunpack.c.l.b16 %v1092
    %v2117 = vunpack.c.l.b16 %v1093
    %v2118 = vunpack.c.l.b16 %v1094
    %v2119 = vunpack.c.l.b16 %v1095
    %v2120 = vunpack.c.l.b16 %v1096
    %v2121 = vunpack.c.l.b16 %v1097
    %v2122 = vunpack.c.l.b16 %v1098
    %v2123 = vunpack.c.l.b16 %v1099
    %v2124 = vunpack.c.l.b16 %v1100
    %v2125 = vunpack.c.l.b16 %v1101
    %v2126 = vunpack.c.l.b16 %v1102
    %v2127 = vunpack.c.l.b16 %v1103
    %v2128 = vunpack.c.l.b16 %v1104
    %v2129 = vunpack.c.l.b16 %v1105
    %v2130 = vunpack.c.l.b16 %v1106
    %v2131 = vunpack.c.l.b16 %v1107
    %v2132 = vunpack.c.l.b16 %v1108
    %v2133 = vunpack.c.l.b16 %v1109
    %v2134 = vunpack.c.l.b16 %v1110
    %v2135 = vunpack.c.l.b16 %v1111
    %v2136 = vunpack.c.l.b16 %v1112
    %v2137 = vunpack.c.l.b16 %v1113
    %v2138 = vunpack.c.l.b16 %v1114
    %v2139 = vunpack.c.l.b16 %v1115
    %v2140 = vunpack.c.l.b16 %v1116
    %v2141 = vunpack.c.l.b16 %v1117
    %v2142 = vunpack.c.l.b16 %v1118
    %v2143 = vunpack.c.l.b16 %v1119
    %v2144 = vunpack.c.l.b16 %v1120
    %v2145 = vunpack.c.l.b16 %v1121
    %v2146 = vpack.c.b16 %v1635, %v1634
    %v2147 = vpack.c.b16 %v1637, %v1636
    %v2148 = vpack.c.b16 %v1639, %v1638
    %v2149 = vpack.c.b16 %v1641, %v1640
    %v2150 = vpack.c.b16 %v1643, %v1642
    %v2151 = vpack.c.b16 %v1645, %v1644
    %v2152 = vpack.c.b16 %v1647, %v1646
    %v2153 = vpack.c.b16 %v1649, %v1648
    %v2154 = vpack.c.b16 %v1651, %v1650
    %v2155 = vpack.c.b16 %v1653, %v1652
    %v2156 = vpack.c.b16 %v1655, %v1654
    %v2157 = vpack.c.b16 %v1657, %v1656
    %v2158 = vpack.c.b16 %v1659, %v1658
    %v2159 = vpack.c.b16 %v1661, %v1660
    %v2160 = vpack.c.b16 %v1663, %v1662
    %v2161 = vpack.c.b16 %v1665, %v1664
    %v2162 = vpack.c.b16 %v1667, %v1666
    %v2163 = vpack.c.b16 %v1669, %v1668
    %v2164 = vpack.c.b16 %v1671, %v1670
    %v2165 = vpack.c.b16 %v1673, %v1672
    %v2166 = vpack.c.b16 %v1675, %v1674
    %v2167 = vpack.c.b16 %v1677, %v1676
    %v2168 = vpack.c.b16 %v1679, %v1678
    %v2169 = vpack.c.b16 %v1681, %v1680
    %v2170 = vpack.c.b16 %v1683, %v1682
    %v2171 = vpack.c.b16 %v1685, %v1684
    %v2172 = vpack.c.b16 %v1687, %v1686
    %v2173 = vpack.c.b16 %v1689, %v1688
    %v2174 = vpack.c.b16 %v1691, %v1690
    %v2175 = vpack.c.b16 %v1693, %v1692
    %v2176 = vpack.c.b16 %v1695, %v1694
    %v2177 = vpack.c.b16 %v1697, %v1696
    %v2178 = vpack.c.b16 %v1699, %v1698
    %v2179 = vpack.c.b16 %v1701, %v1700
    %v2180 = vpack.c.b16 %v1703, %v1702
    %v2181 = vpack.c.b16 %v1705, %v1704
    %v2182 = vpack.c.b16 %v1707, %v1706
    %v2183 = vpack.c.b16 %v1709, %v1708
    %v2184 = vpack.c.b16 %v1711, %v1710
    %v2185 = vpack.c.b16 %v1713, %v1712
    %v2186 = vpack.c.b16 %v1715, %v1714
    %v2187 = vpack.c.b16 %v1717, %v1716
    %v2188 = vpack.c.b16 %v1719, %v1718
    %v2189 = vpack.c.b16 %v1721, %v1720
    %v2190 = vpack.c.b16 %v1723, %v1722
    %v2191 = vpack.c.b16 %v1725, %v1724
    %v2192 = vpack.c.b16 %v1727, %v1726
    %v2193 = vpack.c.b16 %v1729, %v1728
    %v2194 = vpack.c.b16 %v1731, %v1730
    %v2195 = vpack.c.b16 %v1733, %v1732
    %v2196 = vpack.c.b16 %v1735, %v1734
    %v2197 = vpack.c.b16 %v1737, %v1736
    %v2198 = vpack.c.b16 %v1739, %v1738
    %v2199 = vpack.c.b16 %v1741, %v1740
    %v2200 = vpack.c.b16 %v1743, %v1742
    %v2201 = vpack.c.b16 %v1745, %v1744
    %v2202 = vpack.c.b16 %v1747, %v1746
    %v2203 = vpack.c.b16 %v1749, %v1748
    %v2204 = vpack.c.b16 %v1751, %v1750
    %v2205 = vpack.c.b16 %v1753, %v1752
    %v2206 = vpack.c.b16 %v1755, %v1754
    %v2207 = vpack.c.b16 %v1757, %v1756
    %v2208 = vpack.c.b16 %v1759, %v1758
    %v2209 = vpack.c.b16 %v1761, %v1760
    %v2210 = vpack.c.b16 %v1763, %v1762
    %v2211 = vpack.c.b16 %v1765, %v1764
    %v2212 = vpack.c.b16 %v1767, %v1766
    %v2213 = vpack.c.b16 %v1769, %v1768
    %v2214 = vpack.c.b16 %v1771, %v1770
    %v2215 = vpack.c.b16 %v1773, %v1772
    %v2216 = vpack.c.b16 %v1775, %v1774
    %v2217 = vpack.c.b16 %v1777, %v1776
    %v2218 = vpack.c.b16 %v1779, %v1778
    %v2219 = vpack.c.b16 %v1781, %v1780
    %v2220 = vpack.c.b16 %v1783, %v1782
    %v2221 = vpack.c.b16 %v1785, %v1784
    %v2222 = vpack.c.b16 %v1787, %v1786
    %v2223 = vpack.c.b16 %v1789, %v1788
    %v2224 = vpack.c.b16 %v1791, %v1790
    %v2225 = vpack.c.b16 %v1793, %v1792
    %v2226 = vpack.c.b16 %v1795, %v1794
    %v2227 = vpack.c.b16 %v1797, %v1796
    %v2228 = vpack.c.b16 %v1799, %v1798
    %v2229 = vpack.c.b16 %v1801, %v1800
    %v2230 = vpack.c.b16 %v1803, %v1802
    %v2231 = vpack.c.b16 %v1805, %v1804
    %v2232 = vpack.c.b16 %v1807, %v1806
    %v2233 = vpack.c.b16 %v1809, %v1808
    %v2234 = vpack.c.b16 %v1811, %v1810
    %v2235 = vpack.c.b16 %v1813, %v1812
    %v2236 = vpack.c.b16 %v1815, %v1814
    %v2237 = vpack.c.b16 %v1817, %v1816
    %v2238 = vpack.c.b16 %v1819, %v1818
    %v2239 = vpack.c.b16 %v1821, %v1820
    %v2240 = vpack.c.b16 %v1823, %v1822
    %v2241 = vpack.c.b16 %v1825, %v1824
    %v2242 = vpack.c.b16 %v1827, %v1826
    %v2243 = vpack.c.b16 %v1829, %v1828
    %v2244 = vpack.c.b16 %v1831, %v1830
    %v2245 = vpack.c.b16 %v1833, %v1832
    %v2246 = vpack.c.b16 %v1835, %v1834
    %v2247 = vpack.c.b16 %v1837, %v1836
    %v2248 = vpack.c.b16 %v1839, %v1838
    %v2249 = vpack.c.b16 %v1841, %v1840
    %v2250 = vpack.c.b16 %v1843, %v1842
    %v2251 = vpack.c.b16 %v1845, %v1844
    %v2252 = vpack.c.b16 %v1847, %v1846
    %v2253 = vpack.c.b16 %v1849, %v1848
    %v2254 = vpack.c.b16 %v1851, %v1850
    %v2255 = vpack.c.b16 %v1853, %v1852
    %v2256 = vpack.c.b16 %v1855, %v1854
    %v2257 = vpack.c.b16 %v1857, %v1856
    %v2258 = vpack.c.b16 %v1859, %v1858
    %v2259 = vpack.c.b16 %v1861, %v1860
    %v2260 = vpack.c.b16 %v1863, %v1862
    %v2261 = vpack.c.b16 %v1865, %v1864
    %v2262 = vpack.c.b16 %v1867, %v1866
    %v2263 = vpack.c.b16 %v1869, %v1868
    %v2264 = vpack.c.b16 %v1871, %v1870
    %v2265 = vpack.c.b16 %v1873, %v1872
    %v2266 = vpack.c.b16 %v1875, %v1874
    %v2267 = vpack.c.b16 %v1877, %v1876
    %v2268 = vpack.c.b16 %v1879, %v1878
    %v2269 = vpack.c.b16 %v1881, %v1880
    %v2270 = vpack.c.b16 %v1883, %v1882
    %v2271 = vpack.c.b16 %v1885, %v1884
    %v2272 = vpack.c.b16 %v1887, %v1886
    %v2273 = vpack.c.b16 %v1889, %v1888
    %v2274 = vpack.c.b16 %v1891, %v1890
    %v2275 = vpack.c.b16 %v1893, %v1892
    %v2276 = vpack.c.b16 %v1895, %v1894
    %v2277 = vpack.c.b16 %v1897, %v1896
    %v2278 = vpack.c.b16 %v1899, %v1898
    %v2279 = vpack.c.b16 %v1901, %v1900
    %v2280 = vpack.c.b16 %v1903, %v1902
    %v2281 = vpack.c.b16 %v1905, %v1904
    %v2282 = vpack.c.b16 %v1907, %v1906
    %v2283 = vpack.c.b16 %v1909, %v1908
    %v2284 = vpack.c.b16 %v1911, %v1910
    %v2285 = vpack.c.b16 %v1913, %v1912
    %v2286 = vpack.c.b16 %v1915, %v1914
    %v2287 = vpack.c.b16 %v1917, %v1916
    %v2288 = vpack.c.b16 %v1919, %v1918
    %v2289 = vpack.c.b16 %v1921, %v1920
    %v2290 = vpack.c.b16 %v1923, %v1922
    %v2291 = vpack.c.b16 %v1925, %v1924
    %v2292 = vpack.c.b16 %v1927, %v1926
    %v2293 = vpack.c.b16 %v1929, %v1928
    %v2294 = vpack.c.b16 %v1931, %v1930
    %v2295 = vpack.c.b16 %v1933, %v1932
    %v2296 = vpack.c.b16 %v1935, %v1934
    %v2297 = vpack.c.b16 %v1937, %v1936
    %v2298 = vpack.c.b16 %v1939, %v1938
    %v2299 = vpack.c.b16 %v1941, %v1940
    %v2300 = vpack.c.b16 %v1943, %v1942
    %v2301 = vpack.c.b16 %v1945, %v1944
    %v2302 = vpack.c.b16 %v1947, %v1946
    %v2303 = vpack.c.b16 %v1949, %v1948
    %v2304 = vpack.c.b16 %v1951, %v1950
    %v2305 = vpack.c.b16 %v1953, %v1952
    %v2306 = vpack.c.b16 %v1955, %v1954
    %v2307 = vpack.c.b16 %v1957, %v1956
    %v2308 = vpack.c.b16 %v1959, %v1958
    %v2309 = vpack.c.b16 %v1961, %v1960
    %v2310 = vpack.c.b16 %v1963, %v1962
    %v2311 = vpack.c.b16 %v1965, %v1964
    %v2312 = vpack.c.b16 %v1967, %v1966
    %v2313 = vpack.c.b16 %v1969, %v1968
    %v2314 = vpack.c.b16 %v1971, %v1970
    %v2315 = vpack.c.b16 %v1973, %v1972
    %v2316 = vpack.c.b16 %v1975, %v1974
    %v2317 = vpack.c.b16 %v1977, %v1976
    %v2318 = vpack.c.b16 %v1979, %v1978
    %v2319 = vpack.c.b16 %v1981, %v1980
    %v2320 = vpack.c.b16 %v1983, %v1982
    %v2321 = vpack.c.b16 %v1985, %v1984
    %v2322 = vpack.c.b16 %v1987, %v1986
    %v2323 = vpack.c.b16 %v1989, %v1988
    %v2324 = vpack.c.b16 %v1991, %v1990
    %v2325 = vpack.c.b16 %v1993, %v1992
    %v2326 = vpack.c.b16 %v1995, %v1994
    %v2327 = vpack.c.b16 %v1997, %v1996
    %v2328 = vpack.c.b16 %v1999, %v1998
    %v2329 = vpack.c.b16 %v2001, %v2000
    %v2330 = vpack.c.b16 %v2003, %v2002
    %v2331 = vpack.c.b16 %v2005, %v2004
    %v2332 = vpack.c.b16 %v2007, %v2006
    %v2333 = vpack.c.b16 %v2009, %v2008
    %v2334 = vpack.c.b16 %v2011, %v2010
    %v2335 = vpack.c.b16 %v2013, %v2012
    %v2336 = vpack.c.b16 %v2015, %v2014
    %v2337 = vpack.c.b16 %v2017, %v2016
    %v2338 = vpack.c.b16 %v2019, %v2018
    %v2339 = vpack.c.b16 %v2021, %v2020
    %v2340 = vpack.c.b16 %v2023, %v2022
    %v2341 = vpack.c.b16 %v2025, %v2024
    %v2342 = vpack.c.b16 %v2027, %v2026
    %v2343 = vpack.c.b16 %v2029, %v2028
    %v2344 = vpack.c.b16 %v2031, %v2030
    %v2345 = vpack.c.b16 %v2033, %v2032
    %v2346 = vpack.c.b16 %v2035, %v2034
    %v2347 = vpack.c.b16 %v2037, %v2036
    %v2348 = vpack.c.b16 %v2039, %v2038
    %v2349 = vpack.c.b16 %v2041, %v2040
    %v2350 = vpack.c.b16 %v2043, %v2042
    %v2351 = vpack.c.b16 %v2045, %v2044
    %v2352 = vpack.c.b16 %v2047, %v2046
    %v2353 = vpack.c.b16 %v2049, %v2048
    %v2354 = vpack.c.b16 %v2051, %v2050
    %v2355 = vpack.c.b16 %v2053, %v2052
    %v2356 = vpack.c.b16 %v2055, %v2054
    %v2357 = vpack.c.b16 %v2057, %v2056
    %v2358 = vpack.c.b16 %v2059, %v2058
    %v2359 = vpack.c.b16 %v2061, %v2060
    %v2360 = vpack.c.b16 %v2063, %v2062
    %v2361 = vpack.c.b16 %v2065, %v2064
    %v2362 = vpack.c.b16 %v2067, %v2066
    %v2363 = vpack.c.b16 %v2069, %v2068
    %v2364 = vpack.c.b16 %v2071, %v2070
    %v2365 = vpack.c.b16 %v2073, %v2072
    %v2366 = vpack.c.b16 %v2075, %v2074
    %v2367 = vpack.c.b16 %v2077, %v2076
    %v2368 = vpack.c.b16 %v2079, %v2078
    %v2369 = vpack.c.b16 %v2081, %v2080
    %v2370 = vpack.c.b16 %v2083, %v2082
    %v2371 = vpack.c.b16 %v2085, %v2084
    %v2372 = vpack.c.b16 %v2087, %v2086
    %v2373 = vpack.c.b16 %v2089, %v2088
    %v2374 = vpack.c.b16 %v2091, %v2090
    %v2375 = vpack.c.b16 %v2093, %v2092
    %v2376 = vpack.c.b16 %v2095, %v2094
    %v2377 = vpack.c.b16 %v2097, %v2096
    %v2378 = vpack.c.b16 %v2099, %v2098
    %v2379 = vpack.c.b16 %v2101, %v2100
    %v2380 = vpack.c.b16 %v2103, %v2102
    %v2381 = vpack.c.b16 %v2105, %v2104
    %v2382 = vpack.c.b16 %v2107, %v2106
    %v2383 = vpack.c.b16 %v2109, %v2108
    %v2384 = vpack.c.b16 %v2111, %v2110
    %v2385 = vpack.c.b16 %v2113, %v2112
    %v2386 = vpack.c.b16 %v2115, %v2114
    %v2387 = vpack.c.b16 %v2117, %v2116
    %v2388 = vpack.c.b16 %v2119, %v2118
    %v2389 = vpack.c.b16 %v2121, %v2120
    %v2390 = vpack.c.b16 %v2123, %v2122
    %v2391 = vpack.c.b16 %v2125, %v2124
    %v2392 = vpack.c.b16 %v2127, %v2126
    %v2393 = vpack.c.b16 %v2129, %v2128
    %v2394 = vpack.c.b16 %v2131, %v2130
    %v2395 = vpack.c.b16 %v2133, %v2132
    %v2396 = vpack.c.b16 %v2135, %v2134
    %v2397 = vpack.c.b16 %v2137, %v2136
    %v2398 = vpack.c.b16 %v2139, %v2138
    %v2399 = vpack.c.b16 %v2141, %v2140
    %v2400 = vpack.c.b16 %v2143, %v2142
    %v2401 = vpack.c.b16 %v2145, %v2144
    %2658 = vmatprep.subr.bf16.mxu0 0
    %2659 = vmatpush1.bf16.xpose.msra.mxu0 %v2146
    %2660 = vmatprep.subr.bf16.mxu0 0
    %2661 = vmatpush1.bf16.xpose.msra.mxu0 %v2147
    %2662 = vmatprep.subr.bf16.mxu0 0
    %2663 = vmatpush1.bf16.xpose.msra.mxu0 %v2148
    %2664 = vmatprep.subr.bf16.mxu0 0
    %2665 = vmatpush1.bf16.xpose.msra.mxu0 %v2149
    %2666 = vmatprep.subr.bf16.mxu0 0
    %2667 = vmatpush1.bf16.xpose.msra.mxu0 %v2150
    %2668 = vmatprep.subr.bf16.mxu0 0
    %2669 = vmatpush1.bf16.xpose.msra.mxu0 %v2151
    %2670 = vmatprep.subr.bf16.mxu0 0
    %2671 = vmatpush1.bf16.xpose.msra.mxu0 %v2152
    %2672 = vmatprep.subr.bf16.mxu0 0
    %2673 = vmatpush1.bf16.xpose.msra.mxu0 %v2153
    %2674 = vmatprep.subr.bf16.mxu0 0
    %2675 = vmatpush1.bf16.xpose.msra.mxu0 %v2154
    %2676 = vmatprep.subr.bf16.mxu0 0
    %2677 = vmatpush1.bf16.xpose.msra.mxu0 %v2155
    %2678 = vmatprep.subr.bf16.mxu0 0
    %2679 = vmatpush1.bf16.xpose.msra.mxu0 %v2156
    %2680 = vmatprep.subr.bf16.mxu0 0
    %2681 = vmatpush1.bf16.xpose.msra.mxu0 %v2157
    %2682 = vmatprep.subr.bf16.mxu0 0
    %2683 = vmatpush1.bf16.xpose.msra.mxu0 %v2158
    %2684 = vmatprep.subr.bf16.mxu0 0
    %2685 = vmatpush1.bf16.xpose.msra.mxu0 %v2159
    %2686 = vmatprep.subr.bf16.mxu0 0
    %2687 = vmatpush1.bf16.xpose.msra.mxu0 %v2160
    %2688 = vmatprep.subr.bf16.mxu0 0
    %2689 = vmatpush1.bf16.xpose.msra.mxu0 %v2161
    %2690 = vmatprep.mubr.bf16.mxu0 0
    %2691 = vmatmul.mubr.bf16.gmra.mrb[0].mxu0 %v609
    %v2692 = vpop.f32.mrb[0].mxu0
    %v2693 = vadd.f32 0.0, %v2692
    %v2694 = vpop.f32.mrb[0].mxu0
    %v2695 = vadd.f32 0.0, %v2694
    %v2696 = vpop.f32.mrb[0].mxu0
    %v2697 = vpop.f32.mrb[0].mxu0
    %2698 = vdwg.mxu0
    %2699 = vmatprep.subr.bf16.mxu0 0
    %2700 = vmatpush1.bf16.xpose.msra.mxu0 %v2162
    %2701 = vmatprep.subr.bf16.mxu0 0
    %2702 = vmatpush1.bf16.xpose.msra.mxu0 %v2163
    %2703 = vmatprep.subr.bf16.mxu0 0
    %2704 = vmatpush1.bf16.xpose.msra.mxu0 %v2164
    %2705 = vmatprep.subr.bf16.mxu0 0
    %2706 = vmatpush1.bf16.xpose.msra.mxu0 %v2165
    %2707 = vmatprep.subr.bf16.mxu0 0
    %2708 = vmatpush1.bf16.xpose.msra.mxu0 %v2166
    %2709 = vmatprep.subr.bf16.mxu0 0
    %2710 = vmatpush1.bf16.xpose.msra.mxu0 %v2167
    %2711 = vmatprep.subr.bf16.mxu0 0
    %2712 = vmatpush1.bf16.xpose.msra.mxu0 %v2168
    %2713 = vmatprep.subr.bf16.mxu0 0
    %2714 = vmatpush1.bf16.xpose.msra.mxu0 %v2169
    %2715 = vmatprep.subr.bf16.mxu0 0
    %2716 = vmatpush1.bf16.xpose.msra.mxu0 %v2170
    %2717 = vmatprep.subr.bf16.mxu0 0
    %2718 = vmatpush1.bf16.xpose.msra.mxu0 %v2171
    %2719 = vmatprep.subr.bf16.mxu0 0
    %2720 = vmatpush1.bf16.xpose.msra.mxu0 %v2172
    %2721 = vmatprep.subr.bf16.mxu0 0
    %2722 = vmatpush1.bf16.xpose.msra.mxu0 %v2173
    %2723 = vmatprep.subr.bf16.mxu0 0
    %2724 = vmatpush1.bf16.xpose.msra.mxu0 %v2174
    %2725 = vmatprep.subr.bf16.mxu0 0
    %2726 = vmatpush1.bf16.xpose.msra.mxu0 %v2175
    %2727 = vmatprep.subr.bf16.mxu0 0
    %2728 = vmatpush1.bf16.xpose.msra.mxu0 %v2176
    %2729 = vmatprep.subr.bf16.mxu0 0
    %2730 = vmatpush1.bf16.xpose.msra.mxu0 %v2177
    %2731 = vmatprep.mubr.bf16.mxu0 0
    %2732 = vmatmul.mubr.bf16.gmra.mrb[0].mxu0 %v609
    %v2733 = vpop.f32.mrb[0].mxu0
    %v2734 = vadd.f32 0.0, %v2733
    %v2735 = vpop.f32.mrb[0].mxu0
    %v2736 = vadd.f32 0.0, %v2735
    %v2737 = vpop.f32.mrb[0].mxu0
    %v2738 = vpop.f32.mrb[0].mxu0
    %2739 = vdwg.mxu0
    %2740 = vmatprep.subr.bf16.mxu0 0
    %2741 = vmatpush1.bf16.xpose.msra.mxu0 %v2178
    %2742 = vmatprep.subr.bf16.mxu0 0
    %2743 = vmatpush1.bf16.xpose.msra.mxu0 %v2179
    %2744 = vmatprep.subr.bf16.mxu0 0
    %2745 = vmatpush1.bf16.xpose.msra.mxu0 %v2180
    %2746 = vmatprep.subr.bf16.mxu0 0
    %2747 = vmatpush1.bf16.xpose.msra.mxu0 %v2181
    %2748 = vmatprep.subr.bf16.mxu0 0
    %2749 = vmatpush1.bf16.xpose.msra.mxu0 %v2182
    %2750 = vmatprep.subr.bf16.mxu0 0
    %2751 = vmatpush1.bf16.xpose.msra.mxu0 %v2183
    %2752 = vmatprep.subr.bf16.mxu0 0
    %2753 = vmatpush1.bf16.xpose.msra.mxu0 %v2184
    %2754 = vmatprep.subr.bf16.mxu0 0
    %2755 = vmatpush1.bf16.xpose.msra.mxu0 %v2185
    %2756 = vmatprep.subr.bf16.mxu0 0
    %2757 = vmatpush1.bf16.xpose.msra.mxu0 %v2186
    %2758 = vmatprep.subr.bf16.mxu0 0
    %2759 = vmatpush1.bf16.xpose.msra.mxu0 %v2187
    %2760 = vmatprep.subr.bf16.mxu0 0
    %2761 = vmatpush1.bf16.xpose.msra.mxu0 %v2188
    %2762 = vmatprep.subr.bf16.mxu0 0
    %2763 = vmatpush1.bf16.xpose.msra.mxu0 %v2189
    %2764 = vmatprep.subr.bf16.mxu0 0
    %2765 = vmatpush1.bf16.xpose.msra.mxu0 %v2190
    %2766 = vmatprep.subr.bf16.mxu0 0
    %2767 = vmatpush1.bf16.xpose.msra.mxu0 %v2191
    %2768 = vmatprep.subr.bf16.mxu0 0
    %2769 = vmatpush1.bf16.xpose.msra.mxu0 %v2192
    %2770 = vmatprep.subr.bf16.mxu0 0
    %2771 = vmatpush1.bf16.xpose.msra.mxu0 %v2193
    %2772 = vmatprep.mubr.bf16.mxu0 0
    %2773 = vmatmul.mubr.bf16.gmra.mrb[0].mxu0 %v609
    %v2774 = vpop.f32.mrb[0].mxu0
    %v2775 = vadd.f32 0.0, %v2774
    %v2776 = vpop.f32.mrb[0].mxu0
    %v2777 = vadd.f32 0.0, %v2776
    %v2778 = vpop.f32.mrb[0].mxu0
    %v2779 = vpop.f32.mrb[0].mxu0
    %2780 = vdwg.mxu0
    %2781 = vmatprep.subr.bf16.mxu0 0
    %2782 = vmatpush1.bf16.xpose.msra.mxu0 %v2194
    %2783 = vmatprep.subr.bf16.mxu0 0
    %2784 = vmatpush1.bf16.xpose.msra.mxu0 %v2195
    %2785 = vmatprep.subr.bf16.mxu0 0
    %2786 = vmatpush1.bf16.xpose.msra.mxu0 %v2196
    %2787 = vmatprep.subr.bf16.mxu0 0
    %2788 = vmatpush1.bf16.xpose.msra.mxu0 %v2197
    %2789 = vmatprep.subr.bf16.mxu0 0
    %2790 = vmatpush1.bf16.xpose.msra.mxu0 %v2198
    %2791 = vmatprep.subr.bf16.mxu0 0
    %2792 = vmatpush1.bf16.xpose.msra.mxu0 %v2199
    %2793 = vmatprep.subr.bf16.mxu0 0
    %2794 = vmatpush1.bf16.xpose.msra.mxu0 %v2200
    %2795 = vmatprep.subr.bf16.mxu0 0
    %2796 = vmatpush1.bf16.xpose.msra.mxu0 %v2201
    %2797 = vmatprep.subr.bf16.mxu0 0
    %2798 = vmatpush1.bf16.xpose.msra.mxu0 %v2202
    %2799 = vmatprep.subr.bf16.mxu0 0
    %2800 = vmatpush1.bf16.xpose.msra.mxu0 %v2203
    %2801 = vmatprep.subr.bf16.mxu0 0
    %2802 = vmatpush1.bf16.xpose.msra.mxu0 %v2204
    %2803 = vmatprep.subr.bf16.mxu0 0
    %2804 = vmatpush1.bf16.xpose.msra.mxu0 %v2205
    %2805 = vmatprep.subr.bf16.mxu0 0
    %2806 = vmatpush1.bf16.xpose.msra.mxu0 %v2206
    %2807 = vmatprep.subr.bf16.mxu0 0
    %2808 = vmatpush1.bf16.xpose.msra.mxu0 %v2207
    %2809 = vmatprep.subr.bf16.mxu0 0
    %2810 = vmatpush1.bf16.xpose.msra.mxu0 %v2208
    %2811 = vmatprep.subr.bf16.mxu0 0
    %2812 = vmatpush1.bf16.xpose.msra.mxu0 %v2209
    %2813 = vmatprep.mubr.bf16.mxu0 0
    %2814 = vmatmul.mubr.bf16.gmra.mrb[0].mxu0 %v609
    %v2815 = vpop.f32.mrb[0].mxu0
    %v2816 = vadd.f32 0.0, %v2815
    %v2817 = vpop.f32.mrb[0].mxu0
    %v2818 = vadd.f32 0.0, %v2817
    %v2819 = vpop.f32.mrb[0].mxu0
    %v2820 = vpop.f32.mrb[0].mxu0
    %2821 = vdwg.mxu0
    %2822 = vmatprep.subr.bf16.mxu0 0
    %2823 = vmatpush1.bf16.xpose.msra.mxu0 %v2210
    %2824 = vmatprep.subr.bf16.mxu0 0
    %2825 = vmatpush1.bf16.xpose.msra.mxu0 %v2211
    %2826 = vmatprep.subr.bf16.mxu0 0
    %2827 = vmatpush1.bf16.xpose.msra.mxu0 %v2212
    %2828 = vmatprep.subr.bf16.mxu0 0
    %2829 = vmatpush1.bf16.xpose.msra.mxu0 %v2213
    %2830 = vmatprep.subr.bf16.mxu0 0
    %2831 = vmatpush1.bf16.xpose.msra.mxu0 %v2214
    %2832 = vmatprep.subr.bf16.mxu0 0
    %2833 = vmatpush1.bf16.xpose.msra.mxu0 %v2215
    %2834 = vmatprep.subr.bf16.mxu0 0
    %2835 = vmatpush1.bf16.xpose.msra.mxu0 %v2216
    %2836 = vmatprep.subr.bf16.mxu0 0
    %2837 = vmatpush1.bf16.xpose.msra.mxu0 %v2217
    %2838 = vmatprep.subr.bf16.mxu0 0
    %2839 = vmatpush1.bf16.xpose.msra.mxu0 %v2218
    %2840 = vmatprep.subr.bf16.mxu0 0
    %2841 = vmatpush1.bf16.xpose.msra.mxu0 %v2219
    %2842 = vmatprep.subr.bf16.mxu0 0
    %2843 = vmatpush1.bf16.xpose.msra.mxu0 %v2220
    %2844 = vmatprep.subr.bf16.mxu0 0
    %2845 = vmatpush1.bf16.xpose.msra.mxu0 %v2221
    %2846 = vmatprep.subr.bf16.mxu0 0
    %2847 = vmatpush1.bf16.xpose.msra.mxu0 %v2222
    %2848 = vmatprep.subr.bf16.mxu0 0
    %2849 = vmatpush1.bf16.xpose.msra.mxu0 %v2223
    %2850 = vmatprep.subr.bf16.mxu0 0
    %2851 = vmatpush1.bf16.xpose.msra.mxu0 %v2224
    %2852 = vmatprep.subr.bf16.mxu0 0
    %2853 = vmatpush1.bf16.xpose.msra.mxu0 %v2225
    %2854 = vmatprep.mubr.bf16.mxu0 0
    %2855 = vmatmul.mubr.bf16.gmra.mrb[0].mxu0 %v609
    %v2856 = vpop.f32.mrb[0].mxu0
    %v2857 = vadd.f32 0.0, %v2856
    %v2858 = vpop.f32.mrb[0].mxu0
    %v2859 = vadd.f32 0.0, %v2858
    %v2860 = vpop.f32.mrb[0].mxu0
    %v2861 = vpop.f32.mrb[0].mxu0
    %2862 = vdwg.mxu0
    %2863 = vmatprep.subr.bf16.mxu0 0
    %2864 = vmatpush1.bf16.xpose.msra.mxu0 %v2226
    %2865 = vmatprep.subr.bf16.mxu0 0
    %2866 = vmatpush1.bf16.xpose.msra.mxu0 %v2227
    %2867 = vmatprep.subr.bf16.mxu0 0
    %2868 = vmatpush1.bf16.xpose.msra.mxu0 %v2228
    %2869 = vmatprep.subr.bf16.mxu0 0
    %2870 = vmatpush1.bf16.xpose.msra.mxu0 %v2229
    %2871 = vmatprep.subr.bf16.mxu0 0
    %2872 = vmatpush1.bf16.xpose.msra.mxu0 %v2230
    %2873 = vmatprep.subr.bf16.mxu0 0
    %2874 = vmatpush1.bf16.xpose.msra.mxu0 %v2231
    %2875 = vmatprep.subr.bf16.mxu0 0
    %2876 = vmatpush1.bf16.xpose.msra.mxu0 %v2232
    %2877 = vmatprep.subr.bf16.mxu0 0
    %2878 = vmatpush1.bf16.xpose.msra.mxu0 %v2233
    %2879 = vmatprep.subr.bf16.mxu0 0
    %2880 = vmatpush1.bf16.xpose.msra.mxu0 %v2234
    %2881 = vmatprep.subr.bf16.mxu0 0
    %2882 = vmatpush1.bf16.xpose.msra.mxu0 %v2235
    %2883 = vmatprep.subr.bf16.mxu0 0
    %2884 = vmatpush1.bf16.xpose.msra.mxu0 %v2236
    %2885 = vmatprep.subr.bf16.mxu0 0
    %2886 = vmatpush1.bf16.xpose.msra.mxu0 %v2237
    %2887 = vmatprep.subr.bf16.mxu0 0
    %2888 = vmatpush1.bf16.xpose.msra.mxu0 %v2238
    %2889 = vmatprep.subr.bf16.mxu0 0
    %2890 = vmatpush1.bf16.xpose.msra.mxu0 %v2239
    %2891 = vmatprep.subr.bf16.mxu0 0
    %2892 = vmatpush1.bf16.xpose.msra.mxu0 %v2240
    %2893 = vmatprep.subr.bf16.mxu0 0
    %2894 = vmatpush1.bf16.xpose.msra.mxu0 %v2241
    %2895 = vmatprep.mubr.bf16.mxu0 0
    %2896 = vmatmul.mubr.bf16.gmra.mrb[0].mxu0 %v609
    %v2897 = vpop.f32.mrb[0].mxu0
    %v2898 = vadd.f32 0.0, %v2897
    %v2899 = vpop.f32.mrb[0].mxu0
    %v2900 = vadd.f32 0.0, %v2899
    %v2901 = vpop.f32.mrb[0].mxu0
    %v2902 = vpop.f32.mrb[0].mxu0
    %2903 = vdwg.mxu0
    %2904 = vmatprep.subr.bf16.mxu0 0
    %2905 = vmatpush1.bf16.xpose.msra.mxu0 %v2242
    %2906 = vmatprep.subr.bf16.mxu0 0
    %2907 = vmatpush1.bf16.xpose.msra.mxu0 %v2243
    %2908 = vmatprep.subr.bf16.mxu0 0
    %2909 = vmatpush1.bf16.xpose.msra.mxu0 %v2244
    %2910 = vmatprep.subr.bf16.mxu0 0
    %2911 = vmatpush1.bf16.xpose.msra.mxu0 %v2245
    %2912 = vmatprep.subr.bf16.mxu0 0
    %2913 = vmatpush1.bf16.xpose.msra.mxu0 %v2246
    %2914 = vmatprep.subr.bf16.mxu0 0
    %2915 = vmatpush1.bf16.xpose.msra.mxu0 %v2247
    %2916 = vmatprep.subr.bf16.mxu0 0
    %2917 = vmatpush1.bf16.xpose.msra.mxu0 %v2248
    %2918 = vmatprep.subr.bf16.mxu0 0
    %2919 = vmatpush1.bf16.xpose.msra.mxu0 %v2249
    %2920 = vmatprep.subr.bf16.mxu0 0
    %2921 = vmatpush1.bf16.xpose.msra.mxu0 %v2250
    %2922 = vmatprep.subr.bf16.mxu0 0
    %2923 = vmatpush1.bf16.xpose.msra.mxu0 %v2251
    %2924 = vmatprep.subr.bf16.mxu0 0
    %2925 = vmatpush1.bf16.xpose.msra.mxu0 %v2252
    %2926 = vmatprep.subr.bf16.mxu0 0
    %2927 = vmatpush1.bf16.xpose.msra.mxu0 %v2253
    %2928 = vmatprep.subr.bf16.mxu0 0
    %2929 = vmatpush1.bf16.xpose.msra.mxu0 %v2254
    %2930 = vmatprep.subr.bf16.mxu0 0
    %2931 = vmatpush1.bf16.xpose.msra.mxu0 %v2255
    %2932 = vmatprep.subr.bf16.mxu0 0
    %2933 = vmatpush1.bf16.xpose.msra.mxu0 %v2256
    %2934 = vmatprep.subr.bf16.mxu0 0
    %2935 = vmatpush1.bf16.xpose.msra.mxu0 %v2257
    %2936 = vmatprep.mubr.bf16.mxu0 0
    %2937 = vmatmul.mubr.bf16.gmra.mrb[0].mxu0 %v609
    %v2938 = vpop.f32.mrb[0].mxu0
    %v2939 = vadd.f32 0.0, %v2938
    %v2940 = vpop.f32.mrb[0].mxu0
    %v2941 = vadd.f32 0.0, %v2940
    %v2942 = vpop.f32.mrb[0].mxu0
    %v2943 = vpop.f32.mrb[0].mxu0
    %2944 = vdwg.mxu0
    %2945 = vmatprep.subr.bf16.mxu0 0
    %2946 = vmatpush1.bf16.xpose.msra.mxu0 %v2258
    %2947 = vmatprep.subr.bf16.mxu0 0
    %2948 = vmatpush1.bf16.xpose.msra.mxu0 %v2259
    %2949 = vmatprep.subr.bf16.mxu0 0
    %2950 = vmatpush1.bf16.xpose.msra.mxu0 %v2260
    %2951 = vmatprep.subr.bf16.mxu0 0
    %2952 = vmatpush1.bf16.xpose.msra.mxu0 %v2261
    %2953 = vmatprep.subr.bf16.mxu0 0
    %2954 = vmatpush1.bf16.xpose.msra.mxu0 %v2262
    %2955 = vmatprep.subr.bf16.mxu0 0
    %2956 = vmatpush1.bf16.xpose.msra.mxu0 %v2263
    %2957 = vmatprep.subr.bf16.mxu0 0
    %2958 = vmatpush1.bf16.xpose.msra.mxu0 %v2264
    %2959 = vmatprep.subr.bf16.mxu0 0
    %2960 = vmatpush1.bf16.xpose.msra.mxu0 %v2265
    %2961 = vmatprep.subr.bf16.mxu0 0
    %2962 = vmatpush1.bf16.xpose.msra.mxu0 %v2266
    %2963 = vmatprep.subr.bf16.mxu0 0
    %2964 = vmatpush1.bf16.xpose.msra.mxu0 %v2267
    %2965 = vmatprep.subr.bf16.mxu0 0
    %2966 = vmatpush1.bf16.xpose.msra.mxu0 %v2268
    %2967 = vmatprep.subr.bf16.mxu0 0
    %2968 = vmatpush1.bf16.xpose.msra.mxu0 %v2269
    %2969 = vmatprep.subr.bf16.mxu0 0
    %2970 = vmatpush1.bf16.xpose.msra.mxu0 %v2270
    %2971 = vmatprep.subr.bf16.mxu0 0
    %2972 = vmatpush1.bf16.xpose.msra.mxu0 %v2271
    %2973 = vmatprep.subr.bf16.mxu0 0
    %2974 = vmatpush1.bf16.xpose.msra.mxu0 %v2272
    %2975 = vmatprep.subr.bf16.mxu0 0
    %2976 = vmatpush1.bf16.xpose.msra.mxu0 %v2273
    %2977 = vmatprep.mubr.bf16.mxu0 0
    %2978 = vmatmul.mubr.bf16.gmra.mrb[0].mxu0 %v609
    %v2979 = vpop.f32.mrb[0].mxu0
    %v2980 = vadd.f32 0.0, %v2979
    %v2981 = vpop.f32.mrb[0].mxu0
    %v2982 = vadd.f32 0.0, %v2981
    %v2983 = vpop.f32.mrb[0].mxu0
    %v2984 = vpop.f32.mrb[0].mxu0
    %2985 = vdwg.mxu0
    %2986 = vmatprep.subr.bf16.mxu0 0
    %2987 = vmatpush1.bf16.xpose.msra.mxu0 %v2274
    %2988 = vmatprep.subr.bf16.mxu0 0
    %2989 = vmatpush1.bf16.xpose.msra.mxu0 %v2275
    %2990 = vmatprep.subr.bf16.mxu0 0
    %2991 = vmatpush1.bf16.xpose.msra.mxu0 %v2276
    %2992 = vmatprep.subr.bf16.mxu0 0
    %2993 = vmatpush1.bf16.xpose.msra.mxu0 %v2277
    %2994 = vmatprep.subr.bf16.mxu0 0
    %2995 = vmatpush1.bf16.xpose.msra.mxu0 %v2278
    %2996 = vmatprep.subr.bf16.mxu0 0
    %2997 = vmatpush1.bf16.xpose.msra.mxu0 %v2279
    %2998 = vmatprep.subr.bf16.mxu0 0
    %2999 = vmatpush1.bf16.xpose.msra.mxu0 %v2280
    %3000 = vmatprep.subr.bf16.mxu0 0
    %3001 = vmatpush1.bf16.xpose.msra.mxu0 %v2281
    %3002 = vmatprep.subr.bf16.mxu0 0
    %3003 = vmatpush1.bf16.xpose.msra.mxu0 %v2282
    %3004 = vmatprep.subr.bf16.mxu0 0
    %3005 = vmatpush1.bf16.xpose.msra.mxu0 %v2283
    %3006 = vmatprep.subr.bf16.mxu0 0
    %3007 = vmatpush1.bf16.xpose.msra.mxu0 %v2284
    %3008 = vmatprep.subr.bf16.mxu0 0
    %3009 = vmatpush1.bf16.xpose.msra.mxu0 %v2285
    %3010 = vmatprep.subr.bf16.mxu0 0
    %3011 = vmatpush1.bf16.xpose.msra.mxu0 %v2286
    %3012 = vmatprep.subr.bf16.mxu0 0
    %3013 = vmatpush1.bf16.xpose.msra.mxu0 %v2287
    %3014 = vmatprep.subr.bf16.mxu0 0
    %3015 = vmatpush1.bf16.xpose.msra.mxu0 %v2288
    %3016 = vmatprep.subr.bf16.mxu0 0
    %3017 = vmatpush1.bf16.xpose.msra.mxu0 %v2289
    %3018 = vmatprep.mubr.bf16.mxu0 0
    %3019 = vmatmul.mubr.bf16.gmra.mrb[0].mxu0 %v609
    %v3020 = vpop.f32.mrb[0].mxu0
    %v3021 = vadd.f32 0.0, %v3020
    %v3022 = vpop.f32.mrb[0].mxu0
    %v3023 = vadd.f32 0.0, %v3022
    %v3024 = vpop.f32.mrb[0].mxu0
    %v3025 = vpop.f32.mrb[0].mxu0
    %3026 = vdwg.mxu0
    %3027 = vmatprep.subr.bf16.mxu0 0
    %3028 = vmatpush1.bf16.xpose.msra.mxu0 %v2290
    %3029 = vmatprep.subr.bf16.mxu0 0
    %3030 = vmatpush1.bf16.xpose.msra.mxu0 %v2291
    %3031 = vmatprep.subr.bf16.mxu0 0
    %3032 = vmatpush1.bf16.xpose.msra.mxu0 %v2292
    %3033 = vmatprep.subr.bf16.mxu0 0
    %3034 = vmatpush1.bf16.xpose.msra.mxu0 %v2293
    %3035 = vmatprep.subr.bf16.mxu0 0
    %3036 = vmatpush1.bf16.xpose.msra.mxu0 %v2294
    %3037 = vmatprep.subr.bf16.mxu0 0
    %3038 = vmatpush1.bf16.xpose.msra.mxu0 %v2295
    %3039 = vmatprep.subr.bf16.mxu0 0
    %3040 = vmatpush1.bf16.xpose.msra.mxu0 %v2296
    %3041 = vmatprep.subr.bf16.mxu0 0
    %3042 = vmatpush1.bf16.xpose.msra.mxu0 %v2297
    %3043 = vmatprep.subr.bf16.mxu0 0
    %3044 = vmatpush1.bf16.xpose.msra.mxu0 %v2298
    %3045 = vmatprep.subr.bf16.mxu0 0
    %3046 = vmatpush1.bf16.xpose.msra.mxu0 %v2299
    %3047 = vmatprep.subr.bf16.mxu0 0
    %3048 = vmatpush1.bf16.xpose.msra.mxu0 %v2300
    %3049 = vmatprep.subr.bf16.mxu0 0
    %3050 = vmatpush1.bf16.xpose.msra.mxu0 %v2301
    %3051 = vmatprep.subr.bf16.mxu0 0
    %3052 = vmatpush1.bf16.xpose.msra.mxu0 %v2302
    %3053 = vmatprep.subr.bf16.mxu0 0
    %3054 = vmatpush1.bf16.xpose.msra.mxu0 %v2303
    %3055 = vmatprep.subr.bf16.mxu0 0
    %3056 = vmatpush1.bf16.xpose.msra.mxu0 %v2304
    %3057 = vmatprep.subr.bf16.mxu0 0
    %3058 = vmatpush1.bf16.xpose.msra.mxu0 %v2305
    %3059 = vmatprep.mubr.bf16.mxu0 0
    %3060 = vmatmul.mubr.bf16.gmra.mrb[0].mxu0 %v609
    %v3061 = vpop.f32.mrb[0].mxu0
    %v3062 = vadd.f32 0.0, %v3061
    %v3063 = vpop.f32.mrb[0].mxu0
    %v3064 = vadd.f32 0.0, %v3063
    %v3065 = vpop.f32.mrb[0].mxu0
    %v3066 = vpop.f32.mrb[0].mxu0
    %3067 = vdwg.mxu0
    %3068 = vmatprep.subr.bf16.mxu0 0
    %3069 = vmatpush1.bf16.xpose.msra.mxu0 %v2306
    %3070 = vmatprep.subr.bf16.mxu0 0
    %3071 = vmatpush1.bf16.xpose.msra.mxu0 %v2307
    %3072 = vmatprep.subr.bf16.mxu0 0
    %3073 = vmatpush1.bf16.xpose.msra.mxu0 %v2308
    %3074 = vmatprep.subr.bf16.mxu0 0
    %3075 = vmatpush1.bf16.xpose.msra.mxu0 %v2309
    %3076 = vmatprep.subr.bf16.mxu0 0
    %3077 = vmatpush1.bf16.xpose.msra.mxu0 %v2310
    %3078 = vmatprep.subr.bf16.mxu0 0
    %3079 = vmatpush1.bf16.xpose.msra.mxu0 %v2311
    %3080 = vmatprep.subr.bf16.mxu0 0
    %3081 = vmatpush1.bf16.xpose.msra.mxu0 %v2312
    %3082 = vmatprep.subr.bf16.mxu0 0
    %3083 = vmatpush1.bf16.xpose.msra.mxu0 %v2313
    %3084 = vmatprep.subr.bf16.mxu0 0
    %3085 = vmatpush1.bf16.xpose.msra.mxu0 %v2314
    %3086 = vmatprep.subr.bf16.mxu0 0
    %3087 = vmatpush1.bf16.xpose.msra.mxu0 %v2315
    %3088 = vmatprep.subr.bf16.mxu0 0
    %3089 = vmatpush1.bf16.xpose.msra.mxu0 %v2316
    %3090 = vmatprep.subr.bf16.mxu0 0
    %3091 = vmatpush1.bf16.xpose.msra.mxu0 %v2317
    %3092 = vmatprep.subr.bf16.mxu0 0
    %3093 = vmatpush1.bf16.xpose.msra.mxu0 %v2318
    %3094 = vmatprep.subr.bf16.mxu0 0
    %3095 = vmatpush1.bf16.xpose.msra.mxu0 %v2319
    %3096 = vmatprep.subr.bf16.mxu0 0
    %3097 = vmatpush1.bf16.xpose.msra.mxu0 %v2320
    %3098 = vmatprep.subr.bf16.mxu0 0
    %3099 = vmatpush1.bf16.xpose.msra.mxu0 %v2321
    %3100 = vmatprep.mubr.bf16.mxu0 0
    %3101 = vmatmul.mubr.bf16.gmra.mrb[0].mxu0 %v609
    %v3102 = vpop.f32.mrb[0].mxu0
    %v3103 = vadd.f32 0.0, %v3102
    %v3104 = vpop.f32.mrb[0].mxu0
    %v3105 = vadd.f32 0.0, %v3104
    %v3106 = vpop.f32.mrb[0].mxu0
    %v3107 = vpop.f32.mrb[0].mxu0
    %3108 = vdwg.mxu0
    %3109 = vmatprep.subr.bf16.mxu0 0
    %3110 = vmatpush1.bf16.xpose.msra.mxu0 %v2322
    %3111 = vmatprep.subr.bf16.mxu0 0
    %3112 = vmatpush1.bf16.xpose.msra.mxu0 %v2323
    %3113 = vmatprep.subr.bf16.mxu0 0
    %3114 = vmatpush1.bf16.xpose.msra.mxu0 %v2324
    %3115 = vmatprep.subr.bf16.mxu0 0
    %3116 = vmatpush1.bf16.xpose.msra.mxu0 %v2325
    %3117 = vmatprep.subr.bf16.mxu0 0
    %3118 = vmatpush1.bf16.xpose.msra.mxu0 %v2326
    %3119 = vmatprep.subr.bf16.mxu0 0
    %3120 = vmatpush1.bf16.xpose.msra.mxu0 %v2327
    %3121 = vmatprep.subr.bf16.mxu0 0
    %3122 = vmatpush1.bf16.xpose.msra.mxu0 %v2328
    %3123 = vmatprep.subr.bf16.mxu0 0
    %3124 = vmatpush1.bf16.xpose.msra.mxu0 %v2329
    %3125 = vmatprep.subr.bf16.mxu0 0
    %3126 = vmatpush1.bf16.xpose.msra.mxu0 %v2330
    %3127 = vmatprep.subr.bf16.mxu0 0
    %3128 = vmatpush1.bf16.xpose.msra.mxu0 %v2331
    %3129 = vmatprep.subr.bf16.mxu0 0
    %3130 = vmatpush1.bf16.xpose.msra.mxu0 %v2332
    %3131 = vmatprep.subr.bf16.mxu0 0
    %3132 = vmatpush1.bf16.xpose.msra.mxu0 %v2333
    %3133 = vmatprep.subr.bf16.mxu0 0
    %3134 = vmatpush1.bf16.xpose.msra.mxu0 %v2334
    %3135 = vmatprep.subr.bf16.mxu0 0
    %3136 = vmatpush1.bf16.xpose.msra.mxu0 %v2335
    %3137 = vmatprep.subr.bf16.mxu0 0
    %3138 = vmatpush1.bf16.xpose.msra.mxu0 %v2336
    %3139 = vmatprep.subr.bf16.mxu0 0
    %3140 = vmatpush1.bf16.xpose.msra.mxu0 %v2337
    %3141 = vmatprep.mubr.bf16.mxu0 0
    %3142 = vmatmul.mubr.bf16.gmra.mrb[0].mxu0 %v609
    %v3143 = vpop.f32.mrb[0].mxu0
    %v3144 = vadd.f32 0.0, %v3143
    %v3145 = vpop.f32.mrb[0].mxu0
    %v3146 = vadd.f32 0.0, %v3145
    %v3147 = vpop.f32.mrb[0].mxu0
    %v3148 = vpop.f32.mrb[0].mxu0
    %3149 = vdwg.mxu0
    %3150 = vmatprep.subr.bf16.mxu0 0
    %3151 = vmatpush1.bf16.xpose.msra.mxu0 %v2338
    %3152 = vmatprep.subr.bf16.mxu0 0
    %3153 = vmatpush1.bf16.xpose.msra.mxu0 %v2339
    %3154 = vmatprep.subr.bf16.mxu0 0
    %3155 = vmatpush1.bf16.xpose.msra.mxu0 %v2340
    %3156 = vmatprep.subr.bf16.mxu0 0
    %3157 = vmatpush1.bf16.xpose.msra.mxu0 %v2341
    %3158 = vmatprep.subr.bf16.mxu0 0
    %3159 = vmatpush1.bf16.xpose.msra.mxu0 %v2342
    %3160 = vmatprep.subr.bf16.mxu0 0
    %3161 = vmatpush1.bf16.xpose.msra.mxu0 %v2343
    %3162 = vmatprep.subr.bf16.mxu0 0
    %3163 = vmatpush1.bf16.xpose.msra.mxu0 %v2344
    %3164 = vmatprep.subr.bf16.mxu0 0
    %3165 = vmatpush1.bf16.xpose.msra.mxu0 %v2345
    %3166 = vmatprep.subr.bf16.mxu0 0
    %3167 = vmatpush1.bf16.xpose.msra.mxu0 %v2346
    %3168 = vmatprep.subr.bf16.mxu0 0
    %3169 = vmatpush1.bf16.xpose.msra.mxu0 %v2347
    %3170 = vmatprep.subr.bf16.mxu0 0
    %3171 = vmatpush1.bf16.xpose.msra.mxu0 %v2348
    %3172 = vmatprep.subr.bf16.mxu0 0
    %3173 = vmatpush1.bf16.xpose.msra.mxu0 %v2349
    %3174 = vmatprep.subr.bf16.mxu0 0
    %3175 = vmatpush1.bf16.xpose.msra.mxu0 %v2350
    %3176 = vmatprep.subr.bf16.mxu0 0
    %3177 = vmatpush1.bf16.xpose.msra.mxu0 %v2351
    %3178 = vmatprep.subr.bf16.mxu0 0
    %3179 = vmatpush1.bf16.xpose.msra.mxu0 %v2352
    %3180 = vmatprep.subr.bf16.mxu0 0
    %3181 = vmatpush1.bf16.xpose.msra.mxu0 %v2353
    %3182 = vmatprep.mubr.bf16.mxu0 0
    %3183 = vmatmul.mubr.bf16.gmra.mrb[0].mxu0 %v609
    %v3184 = vpop.f32.mrb[0].mxu0
    %v3185 = vadd.f32 0.0, %v3184
    %v3186 = vpop.f32.mrb[0].mxu0
    %v3187 = vadd.f32 0.0, %v3186
    %v3188 = vpop.f32.mrb[0].mxu0
    %v3189 = vpop.f32.mrb[0].mxu0
    %3190 = vdwg.mxu0
    %3191 = vmatprep.subr.bf16.mxu0 0
    %3192 = vmatpush1.bf16.xpose.msra.mxu0 %v2354
    %3193 = vmatprep.subr.bf16.mxu0 0
    %3194 = vmatpush1.bf16.xpose.msra.mxu0 %v2355
    %3195 = vmatprep.subr.bf16.mxu0 0
    %3196 = vmatpush1.bf16.xpose.msra.mxu0 %v2356
    %3197 = vmatprep.subr.bf16.mxu0 0
    %3198 = vmatpush1.bf16.xpose.msra.mxu0 %v2357
    %3199 = vmatprep.subr.bf16.mxu0 0
    %3200 = vmatpush1.bf16.xpose.msra.mxu0 %v2358
    %3201 = vmatprep.subr.bf16.mxu0 0
    %3202 = vmatpush1.bf16.xpose.msra.mxu0 %v2359
    %3203 = vmatprep.subr.bf16.mxu0 0
    %3204 = vmatpush1.bf16.xpose.msra.mxu0 %v2360
    %3205 = vmatprep.subr.bf16.mxu0 0
    %3206 = vmatpush1.bf16.xpose.msra.mxu0 %v2361
    %3207 = vmatprep.subr.bf16.mxu0 0
    %3208 = vmatpush1.bf16.xpose.msra.mxu0 %v2362
    %3209 = vmatprep.subr.bf16.mxu0 0
    %3210 = vmatpush1.bf16.xpose.msra.mxu0 %v2363
    %3211 = vmatprep.subr.bf16.mxu0 0
    %3212 = vmatpush1.bf16.xpose.msra.mxu0 %v2364
    %3213 = vmatprep.subr.bf16.mxu0 0
    %3214 = vmatpush1.bf16.xpose.msra.mxu0 %v2365
    %3215 = vmatprep.subr.bf16.mxu0 0
    %3216 = vmatpush1.bf16.xpose.msra.mxu0 %v2366
    %3217 = vmatprep.subr.bf16.mxu0 0
    %3218 = vmatpush1.bf16.xpose.msra.mxu0 %v2367
    %3219 = vmatprep.subr.bf16.mxu0 0
    %3220 = vmatpush1.bf16.xpose.msra.mxu0 %v2368
    %3221 = vmatprep.subr.bf16.mxu0 0
    %3222 = vmatpush1.bf16.xpose.msra.mxu0 %v2369
    %3223 = vmatprep.mubr.bf16.mxu0 0
    %3224 = vmatmul.mubr.bf16.gmra.mrb[0].mxu0 %v609
    %v3225 = vpop.f32.mrb[0].mxu0
    %v3226 = vadd.f32 0.0, %v3225
    %v3227 = vpop.f32.mrb[0].mxu0
    %v3228 = vadd.f32 0.0, %v3227
    %v3229 = vpop.f32.mrb[0].mxu0
    %v3230 = vpop.f32.mrb[0].mxu0
    %3231 = vdwg.mxu0
    %3232 = vmatprep.subr.bf16.mxu0 0
    %3233 = vmatpush1.bf16.xpose.msra.mxu0 %v2370
    %3234 = vmatprep.subr.bf16.mxu0 0
    %3235 = vmatpush1.bf16.xpose.msra.mxu0 %v2371
    %3236 = vmatprep.subr.bf16.mxu0 0
    %3237 = vmatpush1.bf16.xpose.msra.mxu0 %v2372
    %3238 = vmatprep.subr.bf16.mxu0 0
    %3239 = vmatpush1.bf16.xpose.msra.mxu0 %v2373
    %3240 = vmatprep.subr.bf16.mxu0 0
    %3241 = vmatpush1.bf16.xpose.msra.mxu0 %v2374
    %3242 = vmatprep.subr.bf16.mxu0 0
    %3243 = vmatpush1.bf16.xpose.msra.mxu0 %v2375
    %3244 = vmatprep.subr.bf16.mxu0 0
    %3245 = vmatpush1.bf16.xpose.msra.mxu0 %v2376
    %3246 = vmatprep.subr.bf16.mxu0 0
    %3247 = vmatpush1.bf16.xpose.msra.mxu0 %v2377
    %3248 = vmatprep.subr.bf16.mxu0 0
    %3249 = vmatpush1.bf16.xpose.msra.mxu0 %v2378
    %3250 = vmatprep.subr.bf16.mxu0 0
    %3251 = vmatpush1.bf16.xpose.msra.mxu0 %v2379
    %3252 = vmatprep.subr.bf16.mxu0 0
    %3253 = vmatpush1.bf16.xpose.msra.mxu0 %v2380
    %3254 = vmatprep.subr.bf16.mxu0 0
    %3255 = vmatpush1.bf16.xpose.msra.mxu0 %v2381
    %3256 = vmatprep.subr.bf16.mxu0 0
    %3257 = vmatpush1.bf16.xpose.msra.mxu0 %v2382
    %3258 = vmatprep.subr.bf16.mxu0 0
    %3259 = vmatpush1.bf16.xpose.msra.mxu0 %v2383
    %3260 = vmatprep.subr.bf16.mxu0 0
    %3261 = vmatpush1.bf16.xpose.msra.mxu0 %v2384
    %3262 = vmatprep.subr.bf16.mxu0 0
    %3263 = vmatpush1.bf16.xpose.msra.mxu0 %v2385
    %3264 = vmatprep.mubr.bf16.mxu0 0
    %3265 = vmatmul.mubr.bf16.gmra.mrb[0].mxu0 %v609
    %v3266 = vpop.f32.mrb[0].mxu0
    %v3267 = vadd.f32 0.0, %v3266
    %v3268 = vpop.f32.mrb[0].mxu0
    %v3269 = vadd.f32 0.0, %v3268
    %v3270 = vpop.f32.mrb[0].mxu0
    %v3271 = vpop.f32.mrb[0].mxu0
    %3272 = vdwg.mxu0
    %3273 = vmatprep.subr.bf16.mxu0 0
    %3274 = vmatpush1.bf16.xpose.msra.mxu0 %v2386
    %3275 = vmatprep.subr.bf16.mxu0 0
    %3276 = vmatpush1.bf16.xpose.msra.mxu0 %v2387
    %3277 = vmatprep.subr.bf16.mxu0 0
    %3278 = vmatpush1.bf16.xpose.msra.mxu0 %v2388
    %3279 = vmatprep.subr.bf16.mxu0 0
    %3280 = vmatpush1.bf16.xpose.msra.mxu0 %v2389
    %3281 = vmatprep.subr.bf16.mxu0 0
    %3282 = vmatpush1.bf16.xpose.msra.mxu0 %v2390
    %3283 = vmatprep.subr.bf16.mxu0 0
    %3284 = vmatpush1.bf16.xpose.msra.mxu0 %v2391
    %3285 = vmatprep.subr.bf16.mxu0 0
    %3286 = vmatpush1.bf16.xpose.msra.mxu0 %v2392
    %3287 = vmatprep.subr.bf16.mxu0 0
    %3288 = vmatpush1.bf16.xpose.msra.mxu0 %v2393
    %3289 = vmatprep.subr.bf16.mxu0 0
    %3290 = vmatpush1.bf16.xpose.msra.mxu0 %v2394
    %3291 = vmatprep.subr.bf16.mxu0 0
    %3292 = vmatpush1.bf16.xpose.msra.mxu0 %v2395
    %3293 = vmatprep.subr.bf16.mxu0 0
    %3294 = vmatpush1.bf16.xpose.msra.mxu0 %v2396
    %3295 = vmatprep.subr.bf16.mxu0 0
    %3296 = vmatpush1.bf16.xpose.msra.mxu0 %v2397
    %3297 = vmatprep.subr.bf16.mxu0 0
    %3298 = vmatpush1.bf16.xpose.msra.mxu0 %v2398
    %3299 = vmatprep.subr.bf16.mxu0 0
    %3300 = vmatpush1.bf16.xpose.msra.mxu0 %v2399
    %3301 = vmatprep.subr.bf16.mxu0 0
    %3302 = vmatpush1.bf16.xpose.msra.mxu0 %v2400
    %3303 = vmatprep.subr.bf16.mxu0 0
    %3304 = vmatpush1.bf16.xpose.msra.mxu0 %v2401
    %3305 = vmatprep.mubr.bf16.mxu0 0
    %3306 = vmatmul.mubr.bf16.gmra.mrb[0].mxu0 %v609
    %v3307 = vpop.f32.mrb[0].mxu0
    %v3308 = vadd.f32 0.0, %v3307
    %v3309 = vpop.f32.mrb[0].mxu0
    %v3310 = vadd.f32 0.0, %v3309
    %v3311 = vpop.f32.mrb[0].mxu0
    %v3312 = vpop.f32.mrb[0].mxu0
    %3313 = vdwg.mxu0
    %v3314 = vmul.f32 %v2693, 14.285714
    %v3315 = vmul.f32 %v2695, 14.285714
    %v3316 = vmul.f32 %v2734, 14.285714
    %v3317 = vmul.f32 %v2736, 14.285714
    %v3318 = vmul.f32 %v2775, 14.285714
    %v3319 = vmul.f32 %v2777, 14.285714
    %v3320 = vmul.f32 %v2816, 14.285714
    %v3321 = vmul.f32 %v2818, 14.285714
    %v3322 = vmul.f32 %v2857, 14.285714
    %v3323 = vmul.f32 %v2859, 14.285714
    %v3324 = vmul.f32 %v2898, 14.285714
    %v3325 = vmul.f32 %v2900, 14.285714
    %v3326 = vmul.f32 %v2939, 14.285714
    %v3327 = vmul.f32 %v2941, 14.285714
    %v3328 = vmul.f32 %v2980, 14.285714
    %v3329 = vmul.f32 %v2982, 14.285714
    %v3330 = vmul.f32 %v3021, 14.285714
    %v3331 = vmul.f32 %v3023, 14.285714
    %v3332 = vmul.f32 %v3062, 14.285714
    %v3333 = vmul.f32 %v3064, 14.285714
    %v3334 = vmul.f32 %v3103, 14.285714
    %v3335 = vmul.f32 %v3105, 14.285714
    %v3336 = vmul.f32 %v3144, 14.285714
    %v3337 = vmul.f32 %v3146, 14.285714
    %v3338 = vmul.f32 %v3185, 14.285714
    %v3339 = vmul.f32 %v3187, 14.285714
    %v3340 = vmul.f32 %v3226, 14.285714
    %v3341 = vmul.f32 %v3228, 14.285714
    %v3342 = vmul.f32 %v3267, 14.285714
    %v3343 = vmul.f32 %v3269, 14.285714
    %v3344 = vmul.f32 %v3308, 14.285714
    %v3345 = vmul.f32 %v3310, 14.285714
    %3346 = vst [vmem:[%s13] sm:$0xff] %v3314
    %3347 = vst [vmem:[%s13 + $0x8] sm:$0xff] %v3315
    %3348 = vst [vmem:[%s13 + $0x10] sm:$0xff] %v3316
    %3349 = vst [vmem:[%s13 + $0x18] sm:$0xff] %v3317
    %3350 = vst [vmem:[%s13 + $0x20] sm:$0xff] %v3318
    %3351 = vst [vmem:[%s13 + $0x28] sm:$0xff] %v3319
    %3352 = vst [vmem:[%s13 + $0x30] sm:$0xff] %v3320
    %3353 = vst [vmem:[%s13 + $0x38] sm:$0xff] %v3321
    %3354 = vst [vmem:[%s13 + $0x40] sm:$0xff] %v3322
    %3355 = vst [vmem:[%s13 + $0x48] sm:$0xff] %v3323
    %3356 = vst [vmem:[%s13 + $0x50] sm:$0xff] %v3324
    %3357 = vst [vmem:[%s13 + $0x58] sm:$0xff] %v3325
    %3358 = vst [vmem:[%s13 + $0x60] sm:$0xff] %v3326
    %3359 = vst [vmem:[%s13 + $0x68] sm:$0xff] %v3327
    %3360 = vst [vmem:[%s13 + $0x70] sm:$0xff] %v3328
    %3361 = vst [vmem:[%s13 + $0x78] sm:$0xff] %v3329
    %3362 = vst [vmem:[%s13 + $0x80] sm:$0xff] %v3330
    %3363 = vst [vmem:[%s13 + $0x88] sm:$0xff] %v3331
    %3364 = vst [vmem:[%s13 + $0x90] sm:$0xff] %v3332
    %3365 = vst [vmem:[%s13 + $0x98] sm:$0xff] %v3333
    %3366 = vst [vmem:[%s13 + $0xa0] sm:$0xff] %v3334
    %3367 = vst [vmem:[%s13 + $0xa8] sm:$0xff] %v3335
    %3368 = vst [vmem:[%s13 + $0xb0] sm:$0xff] %v3336
    %3369 = vst [vmem:[%s13 + $0xb8] sm:$0xff] %v3337
    %3370 = vst [vmem:[%s13 + $0xc0] sm:$0xff] %v3338
    %3371 = vst [vmem:[%s13 + $0xc8] sm:$0xff] %v3339
    %3372 = vst [vmem:[%s13 + $0xd0] sm:$0xff] %v3340
    %3373 = vst [vmem:[%s13 + $0xd8] sm:$0xff] %v3341
    %3374 = vst [vmem:[%s13 + $0xe0] sm:$0xff] %v3342
    %3375 = vst [vmem:[%s13 + $0xe8] sm:$0xff] %v3343
    %3376 = vst [vmem:[%s13 + $0xf0] sm:$0xff] %v3344
    %3377 = vst [vmem:[%s13 + $0xf8] sm:$0xff] %v3345
    // Predicated region
    $region58: #{moco_forward.1} parent=1 // pred_check
      _
    $region59: #{moco_forward.1} parent=1 // pred_check_branch
      %3379 = sbr.rel (0) target = $region61
    $region60: #{moco_forward.1} parent=1 // pred_region
      _
    $region61: #{moco_forward.1} parent=1 // pred_fallthru
      _
    // Predicated region
    $region62: #{moco_forward.1} parent=1 // pred_check
      _
    $region63: #{moco_forward.1} parent=1 // pred_check_branch
      %3381 = sbr.rel (0) target = $region65
    $region64: #{moco_forward.1} parent=1 // pred_region
      _
    $region65: #{moco_forward.1} parent=1 // pred_fallthru
      _
    // Predicated region
    $region66: #{moco_forward.1} parent=1 // pred_check
      _
    $region67: #{moco_forward.1} parent=1 // pred_check_branch
      %3383 = sbr.rel (0) target = $region69
    $region68: #{moco_forward.1} parent=1 // pred_region
      _
    $region69: #{moco_forward.1} parent=1 // pred_fallthru
      _
    // Predicated region
    $region70: #{moco_forward.1} parent=1 // pred_check
      _
    $region71: #{moco_forward.1} parent=1 // pred_check_branch
      %3385 = sbr.rel (0) target = $region73
    $region72: #{moco_forward.1} parent=1 // pred_region
      _
    $region73: #{moco_forward.1} parent=1 // pred_fallthru
      _
    // Predicated region
    $region74: #{moco_forward.1} parent=1 // pred_check
      _
    $region75: #{moco_forward.1} parent=1 // pred_check_branch
      %3387 = sbr.rel (0) target = $region77
    $region76: #{moco_forward.1} parent=1 // pred_region
      _
    $region77: #{moco_forward.1} parent=1 // pred_fallthru
      _
    // Predicated region
    $region78: #{moco_forward.1} parent=1 // pred_check
      _
    $region79: #{moco_forward.1} parent=1 // pred_check_branch
      %3389 = sbr.rel (0) target = $region81
    $region80: #{moco_forward.1} parent=1 // pred_region
      _
    $region81: #{moco_forward.1} parent=1 // pred_fallthru
      _
    %3390 = vsyncpa [#allocation4], 1

</llo_original>
